<compile_context>
chip_gen: v5e
topology: v5e:2x2
jax: 0.10.0
libtpu: 0.0.40
codegen_flags: <defaults>
</compile_context>

<pallas_src>
import functools

import jax
import jax.numpy as jnp
from jax import lax
from jax.experimental import pallas as pl
from jax.experimental.pallas import tpu as pltpu

IN_DIM = 4
HID = 1024
OUT_DIM = 3
IN_PAD = 8       # tiny input-feature dim padded to one sublane
OUT_PAD = 128    # class dim padded to one lane tile (lane-dense, unmasked stores)
SUBLANE = 8
NEG = -1e30      # finite "minus infinity" for padded class lanes


def _mlp_logsoftmax_kernel(x_ref, w1_ref, w2_ref, w3_ref, o_ref):
    # fc1 -> relu   (dropout == identity in eval mode)
    x = x_ref[...].astype(jnp.bfloat16)
    h1 = jnp.dot(x, w1_ref[...], preferred_element_type=jnp.float32)
    h1 = jnp.maximum(h1, 0.0).astype(jnp.bfloat16)
    # fc2 -> relu
    h2 = jnp.dot(h1, w2_ref[...], preferred_element_type=jnp.float32)
    h2 = jnp.maximum(h2, 0.0).astype(jnp.bfloat16)
    # fc3
    logits = jnp.dot(h2, w3_ref[...], preferred_element_type=jnp.float32)
    # log_softmax over the (padded) class dim; padded lanes get a large
    # negative finite value so they contribute nothing and never yield NaN.
    col = lax.broadcasted_iota(jnp.int32, logits.shape, 1)
    masked = jnp.where(col < OUT_DIM, logits, NEG)
    m = jnp.max(masked, axis=-1, keepdims=True)
    shifted = masked - m
    lse = jnp.log(jnp.sum(jnp.exp(shifted), axis=-1, keepdims=True))
    o_ref[...] = shifted - lse


def prepare_params(w1, w2, w3):
    """One-time weight preparation (hoisted out of the per-call path).

    PyTorch nn.Linear stores W as (out_features, in_features) and computes
    y = x @ W^T, so transpose to (in, out), zero-pad the tiny dims, cast to
    bf16 (f32 accumulation is kept inside the kernel)."""
    w1_p = jnp.zeros((IN_PAD, HID), jnp.bfloat16).at[:IN_DIM, :].set(
        w1.T.astype(jnp.bfloat16))
    w2_p = w2.T.astype(jnp.bfloat16)
    w3_p = jnp.zeros((HID, OUT_PAD), jnp.bfloat16).at[:, :OUT_DIM].set(
        w3.T.astype(jnp.bfloat16))
    return w1_p, w2_p, w3_p


@functools.partial(jax.jit, static_argnames=("tb",))
def net_forward(x, w1_p, w2_p, w3_p, tb=256):
    """x: (B, 4) float32; prepared bf16 weights from prepare_params().
    Returns (B, 3) float32 log-probabilities."""
    B = x.shape[0]
    if B <= tb:
        B_pad = max(SUBLANE, -(-B // SUBLANE) * SUBLANE)
        TB = B_pad
    else:
        B_pad = -(-B // tb) * tb
        TB = tb

    # Only the (tiny) activations are padded per call; weights are pre-prepped.
    x_p = jnp.zeros((B_pad, IN_PAD), jnp.float32).at[:B, :IN_DIM].set(x)

    out_p = pl.pallas_call(
        _mlp_logsoftmax_kernel,
        out_shape=jax.ShapeDtypeStruct((B_pad, OUT_PAD), jnp.float32),
        grid=(B_pad // TB,),
        in_specs=[
            pl.BlockSpec((TB, IN_PAD), lambda i: (i, 0)),
            # Weight blocks are grid-invariant: Pallas DMAs them once and
            # keeps them VMEM-resident across the batch-tile loop.
            pl.BlockSpec((IN_PAD, HID), lambda i: (0, 0)),
            pl.BlockSpec((HID, HID), lambda i: (0, 0)),
            pl.BlockSpec((HID, OUT_PAD), lambda i: (0, 0)),
        ],
        out_specs=pl.BlockSpec((TB, OUT_PAD), lambda i: (i, 0)),
        compiler_params=pltpu.CompilerParams(
            dimension_semantics=("parallel",)),   # megacore sharding on v7x
    )(x_p, w1_p, w2_p, w3_p)

    return out_p[:B, :OUT_DIM]


def _reference(x, w1, w2, w3):
    h1 = jnp.maximum(x @ w1.T, 0.0)
    h2 = jnp.maximum(h1 @ w2.T, 0.0)
    logits = h2 @ w3.T
    return jax.nn.log_softmax(logits, axis=1)


if __name__ == "__main__":
    key = jax.random.PRNGKey(0)
    kx, k1, k2, k3 = jax.random.split(key, 4)

    B = 8
    x = jax.random.normal(kx, (B, IN_DIM), dtype=jnp.float32)

    # Deterministic weights (PyTorch Linear layout: (out_features, in_features)).
    w1 = jax.random.normal(k1, (HID, IN_DIM), dtype=jnp.float32) * (1.0 / jnp.sqrt(IN_DIM))
    w2 = jax.random.normal(k2, (HID, HID), dtype=jnp.float32) * (1.0 / jnp.sqrt(HID))
    w3 = jax.random.normal(k3, (OUT_DIM, HID), dtype=jnp.float32) * (1.0 / jnp.sqrt(HID))

    # One-time weight prep (not in the per-call path).
    params = prepare_params(w1, w2, w3)
    params = jax.tree_util.tree_map(jax.block_until_ready, params)

    out = net_forward(x, *params)
    jax.block_until_ready(out)

    ref = _reference(x, w1, w2, w3)
    assert out.shape == (B, OUT_DIM), out.shape
    # Tolerance loosened vs. the f32 version because weights are stored bf16
    # (f32 accumulation is preserved inside the kernel).
    assert jnp.allclose(out, ref, atol=5e-2, rtol=5e-2), \
        float(jnp.max(jnp.abs(out - ref)))

    # Exercise the batch-tiled multi-block grid path (B > TB, padded batch).
    B2 = 300
    x2 = jax.random.normal(kx, (B2, IN_DIM), dtype=jnp.float32)
    out2 = net_forward(x2, *params)
    jax.block_until_ready(out2)
    ref2 = _reference(x2, w1, w2, w3)
    assert out2.shape == (B2, OUT_DIM), out2.shape
    assert jnp.allclose(out2, ref2, atol=5e-2, rtol=5e-2), \
        float(jnp.max(jnp.abs(out2 - ref2)))

    print("KERNEL_OK")
</pallas_src>

<mosaic_0001>
module attributes {stable_mosaic.version = 11 : i64} {
  func.func @_mlp_logsoftmax_kernel(%arg0: i32, %arg1: memref<8x8xf32, #tpu.memory_space<vmem>>, %arg2: memref<8x1024xbf16, #tpu.memory_space<vmem>>, %arg3: memref<1024x1024xbf16, #tpu.memory_space<vmem>>, %arg4: memref<1024x128xbf16, #tpu.memory_space<vmem>>, %arg5: memref<8x128xf32, #tpu.memory_space<vmem>>) attributes {dimension_semantics = [#tpu.dimension_semantics<parallel>], iteration_bounds = array<i64: 1>, scalar_prefetch = 0 : i64, scratch_operands = 0 : i64, tpu.core_type = #tpu.core_type<tc>, window_params = [{transform_indices = @transform_0, window_bounds = array<i64: 8, 8>}, {pipeline_mode = #tpu.pipeline_mode<synchronous>, transform_indices = @transform_1, window_bounds = array<i64: 8, 1024>}, {pipeline_mode = #tpu.pipeline_mode<synchronous>, transform_indices = @transform_2, window_bounds = array<i64: 1024, 1024>}, {pipeline_mode = #tpu.pipeline_mode<synchronous>, transform_indices = @transform_3, window_bounds = array<i64: 1024, 128>}, {transform_indices = @transform_4, window_bounds = array<i64: 8, 128>}]} {
    %c0 = arith.constant 0 : index
    %c0_0 = arith.constant 0 : index
    %0 = vector.load %arg1[%c0, %c0_0] : memref<8x8xf32, #tpu.memory_space<vmem>>, vector<8x8xf32>
    %1 = arith.truncf %0 : vector<8x8xf32> to vector<8x8xbf16>
    %c0_1 = arith.constant 0 : index
    %c0_2 = arith.constant 0 : index
    %2 = vector.load %arg2[%c0_1, %c0_2] : memref<8x1024xbf16, #tpu.memory_space<vmem>>, vector<8x1024xbf16>
    %cst = arith.constant dense<0.000000e+00> : vector<8x1024xf32>
    %3 = tpu.matmul %1, %2, %cst {dimension_numbers = #tpu.dot_dimension_numbers<[1], [0], [0], [1], [0, 0, 1, 1], [], []>} : vector<8x8xbf16>, vector<8x1024xbf16>, vector<8x1024xf32> -> vector<8x1024xf32>
    %cst_3 = arith.constant 0.000000e+00 : f32
    %4 = vector.broadcast %cst_3 : f32 to vector<8x1024xf32>
    %5 = arith.maximumf %3, %4 : vector<8x1024xf32>
    %6 = arith.truncf %5 : vector<8x1024xf32> to vector<8x1024xbf16>
    %c0_4 = arith.constant 0 : index
    %c0_5 = arith.constant 0 : index
    %7 = vector.load %arg3[%c0_4, %c0_5] : memref<1024x1024xbf16, #tpu.memory_space<vmem>>, vector<1024x1024xbf16>
    %cst_6 = arith.constant dense<0.000000e+00> : vector<8x1024xf32>
    %8 = tpu.matmul %6, %7, %cst_6 {dimension_numbers = #tpu.dot_dimension_numbers<[1], [0], [0], [1], [0, 0, 1, 1], [], []>} : vector<8x1024xbf16>, vector<1024x1024xbf16>, vector<8x1024xf32> -> vector<8x1024xf32>
    %cst_7 = arith.constant 0.000000e+00 : f32
    %9 = vector.broadcast %cst_7 : f32 to vector<8x1024xf32>
    %10 = arith.maximumf %8, %9 : vector<8x1024xf32>
    %11 = arith.truncf %10 : vector<8x1024xf32> to vector<8x1024xbf16>
    %c0_8 = arith.constant 0 : index
    %c0_9 = arith.constant 0 : index
    %12 = vector.load %arg4[%c0_8, %c0_9] : memref<1024x128xbf16, #tpu.memory_space<vmem>>, vector<1024x128xbf16>
    %cst_10 = arith.constant dense<0.000000e+00> : vector<8x128xf32>
    %13 = tpu.matmul %11, %12, %cst_10 {dimension_numbers = #tpu.dot_dimension_numbers<[1], [0], [0], [1], [0, 0, 1, 1], [], []>} : vector<8x1024xbf16>, vector<1024x128xbf16>, vector<8x128xf32> -> vector<8x128xf32>
    %14 = tpu.iota {dimensions = array<i32: 1>} : vector<8x128xi32>
    %c3_i32 = arith.constant 3 : i32
    %15 = vector.broadcast %c3_i32 : i32 to vector<8x128xi32>
    %16 = arith.cmpi slt, %14, %15 : vector<8x128xi32>
    %cst_11 = arith.constant -1.000000e+30 : f32
    %17 = vector.broadcast %cst_11 : f32 to vector<8x128xf32>
    %18 = arith.select %16, %13, %17 : vector<8x128xi1>, vector<8x128xf32>
    %cst_12 = arith.constant dense<0xFF800000> : vector<8xf32>
    %19 = vector.multi_reduction <maximumf>, %18, %cst_12 [1] : vector<8x128xf32> to vector<8xf32>
    %20 = vector.shape_cast %19 : vector<8xf32> to vector<8x1xf32>
    %21 = vector.broadcast %20 : vector<8x1xf32> to vector<8x128xf32>
    %22 = arith.subf %18, %21 : vector<8x128xf32>
    %23 = math.exp %22 : vector<8x128xf32>
    %cst_13 = arith.constant dense<0.000000e+00> : vector<8xf32>
    %24 = vector.multi_reduction <add>, %23, %cst_13 [1] : vector<8x128xf32> to vector<8xf32>
    %25 = vector.shape_cast %24 : vector<8xf32> to vector<8x1xf32>
    %26 = math.log %25 : vector<8x1xf32>
    %27 = vector.broadcast %26 : vector<8x1xf32> to vector<8x128xf32>
    %28 = arith.subf %22, %27 : vector<8x128xf32>
    %c0_14 = arith.constant 0 : index
    %c0_15 = arith.constant 0 : index
    %29 = vector.load %arg5[%c0_14, %c0_15] : memref<8x128xf32, #tpu.memory_space<vmem>>, vector<8x128xf32>
    tpu.vector_store %arg5[%c0_14, %c0_15], %28 {strides = array<i32>} : memref<8x128xf32, #tpu.memory_space<vmem>>, vector<8x128xf32>,
    return
  }
  func.func @transform_0(%arg0: i32) -> (i32, i32) {
    %c0_i32 = arith.constant 0 : i32
    %c0_i32_0 = arith.constant 0 : i32
    return %arg0, %c0_i32 : i32, i32
  }
  func.func @transform_1(%arg0: i32) -> (i32, i32) {
    %c0_i32 = arith.constant 0 : i32
    %c0_i32_0 = arith.constant 0 : i32
    %c0_i32_1 = arith.constant 0 : i32
    return %c0_i32, %c0_i32_0 : i32, i32
  }
  func.func @transform_2(%arg0: i32) -> (i32, i32) {
    %c0_i32 = arith.constant 0 : i32
    %c0_i32_0 = arith.constant 0 : i32
    %c0_i32_1 = arith.constant 0 : i32
    return %c0_i32, %c0_i32_0 : i32, i32
  }
  func.func @transform_3(%arg0: i32) -> (i32, i32) {
    %c0_i32 = arith.constant 0 : i32
    %c0_i32_0 = arith.constant 0 : i32
    %c0_i32_1 = arith.constant 0 : i32
    return %c0_i32, %c0_i32_0 : i32, i32
  }
  func.func @transform_4(%arg0: i32) -> (i32, i32) {
    %c0_i32 = arith.constant 0 : i32
    %c0_i32_0 = arith.constant 0 : i32
    return %arg0, %c0_i32 : i32, i32
  }
}

</mosaic_0001>

<llo_original>
// kernel: net_forward.1
$region0: #{net_forward.1}
  #allocation0 [shape = 'u32[]', space=smem, size = 0x4, offset = 0x4, fixed_abs, tag = 'smem constant byte address 0x4 - core index']
  #allocation1 [shape = 'u32[72,128]{1,0:T(1,128)}', space=vmem, size = 0x9000, scoped, tag = 'internal scratch']
  %s0 = inlined_call_operand.vmem [shape: f32[8,8], index: 0, kind: input, shape index: {}]
  %s1 = inlined_call_operand.hbm [shape: bf16[8,1024], index: 1, kind: input, shape index: {}]
  %s2 = inlined_call_operand.hbm [shape: bf16[1024,1024], index: 2, kind: input, shape index: {}]
  %s3 = inlined_call_operand.hbm [shape: bf16[1024,128], index: 3, kind: input, shape index: {}]
  %s4 = inlined_call_operand.vmem [shape: f32[8,128], index: 4, kind: output, shape index: {}]
  %s5 = sld [smem:[#allocation0]]
  $region38: #{net_forward.1} parent=0
    _
  %s7 = ssub.s32 1, %s5
  %s8 = scalar_select 0, %s7, %s5
  $region1: #{net_forward.1} parent=0
    #allocation2 [shape = 'u8[16384]{0}', space=vmem, size = 0x4000, scoped, tag = 'input window, operand 1, single buffered']
    #allocation3 [shape = 's32[1]{0}', space=sflag, size = 0x4, scoped, tag = 'scoped memory for net_forward.1']
    #allocation4 [shape = 'u8[2097152]{0}', space=vmem, size = 0x200000, scoped, tag = 'input window, operand 2, single buffered']
    #allocation5 [shape = 's32[1]{0}', space=sflag, size = 0x4, scoped, tag = 'scoped memory for net_forward.1']
    #allocation6 [shape = 'u8[262144]{0}', space=vmem, size = 0x40000, scoped, tag = 'input window, operand 3, single buffered']
    %9 = vsyncpa [#allocation3], 0
    %10 = vsyncpa [#allocation5], 0
    // Predicated region
    $region2: #{net_forward.1} parent=1 // pred_check
      _
    $region3: #{net_forward.1} parent=1 // pred_check_branch
      %12 = sbr.rel (0) target = $region5
    $region4: #{net_forward.1} parent=1 // pred_region
      _
    $region5: #{net_forward.1} parent=1 // pred_fallthru
      _
    // Predicated region
    $region6: #{net_forward.1} parent=1 // pred_check
      _
    $region7: #{net_forward.1} parent=1 // pred_check_branch
      %14 = sbr.rel (0) target = $region9
    $region8: #{net_forward.1} parent=1 // pred_region
      %16 = vsyncadd [#allocation3], 0
      %s18 = sshll.u32 %s1, 4
      %s19 = int_to_ptr.hbm [resolvable:$true] %s18
      %s20 = sshll.u32 [#allocation2], 4
      %s21 = int_to_ptr.vmem [resolvable:$true] %s20
      %23 = dma.hbm_to_vmem [thread:$0]  %s19, 512, %s21, [#allocation3]
    $region9: #{net_forward.1} parent=1 // pred_fallthru
      _
    // Predicated region
    $region10: #{net_forward.1} parent=1 // pred_check
      _
    $region11: #{net_forward.1} parent=1 // pred_check_branch
      %25 = sbr.rel (0) target = $region13
    $region12: #{net_forward.1} parent=1 // pred_region
      %27 = vsyncadd [#allocation5], 0
      %s28 = sshll.u32 %s2, 4
      %s29 = int_to_ptr.hbm [resolvable:$true] %s28
      %s30 = sshll.u32 [#allocation4], 4
      %s31 = int_to_ptr.vmem [resolvable:$true] %s30
      %36 = dma.hbm_to_vmem [thread:$0]  %s29, 65536, %s31, [#allocation5], 512, 512, 32
    $region13: #{net_forward.1} parent=1 // pred_fallthru
      _
    // Predicated region
    $region14: #{net_forward.1} parent=1 // pred_check
      _
    $region15: #{net_forward.1} parent=1 // pred_check_branch
      %38 = sbr.rel (0) target = $region17
    $region16: #{net_forward.1} parent=1 // pred_region
      %40 = vsyncadd [#allocation5], 0
      %s41 = sshll.u32 %s3, 4
      %s42 = int_to_ptr.hbm [resolvable:$true] %s41
      %s43 = sshll.u32 [#allocation6], 4
      %s44 = int_to_ptr.vmem [resolvable:$true] %s43
      %49 = dma.hbm_to_vmem [thread:$0]  %s42, 8192, %s44, [#allocation5], 64, 64, 4
    $region17: #{net_forward.1} parent=1 // pred_fallthru
      _
    // Predicated region
    $region18: #{net_forward.1} parent=1 // pred_check
      _
    $region19: #{net_forward.1} parent=1 // pred_check_branch
      %51 = sbr.rel (0) target = $region21
    $region20: #{net_forward.1} parent=1 // pred_region
      %53 = dma.done [#allocation3], 512
    $region21: #{net_forward.1} parent=1 // pred_fallthru
      _
    // Predicated region
    $region22: #{net_forward.1} parent=1 // pred_check
      _
    $region23: #{net_forward.1} parent=1 // pred_check_branch
      %55 = sbr.rel (0) target = $region25
    $region24: #{net_forward.1} parent=1 // pred_region
      %57 = dma.done [#allocation5], 65536
    $region25: #{net_forward.1} parent=1 // pred_fallthru
      _
    // Predicated region
    $region26: #{net_forward.1} parent=1 // pred_check
      _
    $region27: #{net_forward.1} parent=1 // pred_check_branch
      %59 = sbr.rel (0) target = $region29
    $region28: #{net_forward.1} parent=1 // pred_region
      %61 = dma.done [#allocation5], 8192
    $region29: #{net_forward.1} parent=1 // pred_fallthru
      _
    %v63 = vld [vmem:[%s0] sm:$0xff]
    %v64 = vpack.c.bf16 %v63, %v63
    %v65 = vld [vmem:[#allocation2] sm:$0xff]
    %v66 = vld [vmem:[#allocation2 + $0x8] sm:$0xff]
    %v67 = vld [vmem:[#allocation2 + $0x10] sm:$0xff]
    %v68 = vld [vmem:[#allocation2 + $0x18] sm:$0xff]
    %v73 = vunpack.c.l.b16 %v65
    %v74 = vunpack.c.h.b16 %v65
    %v75 = vunpack.c.l.b16 %v66
    %v76 = vunpack.c.h.b16 %v66
    %v77 = vunpack.c.l.b16 %v67
    %v78 = vunpack.c.h.b16 %v67
    %v79 = vunpack.c.l.b16 %v68
    %v80 = vunpack.c.h.b16 %v68
    %v81 = vpack.c.b16 %v73, %v73
    %v82 = vpack.c.b16 %v74, %v74
    %v83 = vpack.c.b16 %v75, %v75
    %v84 = vpack.c.b16 %v76, %v76
    %v85 = vpack.c.b16 %v77, %v77
    %v86 = vpack.c.b16 %v78, %v78
    %v87 = vpack.c.b16 %v79, %v79
    %v88 = vpack.c.b16 %v80, %v80
    %vm89 = vcmask 64512
    %v91 = vsel %vm89, %v64, 0
    %vm93 = vcmask 1043456
    %v95 = vsel %vm93, %v81, 0
    %v98 = vsel %vm93, %v82, 0
    %v101 = vsel %vm93, %v83, 0
    %v104 = vsel %vm93, %v84, 0
    %v107 = vsel %vm93, %v85, 0
    %v110 = vsel %vm93, %v86, 0
    %v113 = vsel %vm93, %v87, 0
    %v116 = vsel %vm93, %v88, 0
    %118 = vmatpush.bf16.msra.mxu0 0
    %119 = vmatpush.bf16.msra.mxu0 0
    %120 = vmatpush.bf16.msra.mxu0 0
    %121 = vmatpush.bf16.msra.mxu0 0
    %122 = vmatpush.bf16.msra.mxu0 0
    %123 = vmatpush.bf16.msra.mxu0 0
    %124 = vmatpush.bf16.msra.mxu0 0
    %125 = vmatpush.bf16.msra.mxu0 %v95
    %126 = vmatmul.bf16.gmra.mxu0 %v91
    %v127 = vpop.f32.mrf.mxu0
    %v128 = vadd.f32 0.0, %v127
    %v129 = vpop.f32.mrf.mxu0
    %130 = vdwg.mxu0
    %131 = vmatpush.bf16.msra.mxu0 0
    %132 = vmatpush.bf16.msra.mxu0 0
    %133 = vmatpush.bf16.msra.mxu0 0
    %134 = vmatpush.bf16.msra.mxu0 0
    %135 = vmatpush.bf16.msra.mxu0 0
    %136 = vmatpush.bf16.msra.mxu0 0
    %137 = vmatpush.bf16.msra.mxu0 0
    %138 = vmatpush.bf16.msra.mxu0 %v98
    %139 = vmatmul.bf16.gmra.mxu0 %v91
    %v140 = vpop.f32.mrf.mxu0
    %v141 = vadd.f32 0.0, %v140
    %v142 = vpop.f32.mrf.mxu0
    %143 = vdwg.mxu0
    %144 = vmatpush.bf16.msra.mxu0 0
    %145 = vmatpush.bf16.msra.mxu0 0
    %146 = vmatpush.bf16.msra.mxu0 0
    %147 = vmatpush.bf16.msra.mxu0 0
    %148 = vmatpush.bf16.msra.mxu0 0
    %149 = vmatpush.bf16.msra.mxu0 0
    %150 = vmatpush.bf16.msra.mxu0 0
    %151 = vmatpush.bf16.msra.mxu0 %v101
    %152 = vmatmul.bf16.gmra.mxu0 %v91
    %v153 = vpop.f32.mrf.mxu0
    %v154 = vadd.f32 0.0, %v153
    %v155 = vpop.f32.mrf.mxu0
    %156 = vdwg.mxu0
    %157 = vmatpush.bf16.msra.mxu0 0
    %158 = vmatpush.bf16.msra.mxu0 0
    %159 = vmatpush.bf16.msra.mxu0 0
    %160 = vmatpush.bf16.msra.mxu0 0
    %161 = vmatpush.bf16.msra.mxu0 0
    %162 = vmatpush.bf16.msra.mxu0 0
    %163 = vmatpush.bf16.msra.mxu0 0
    %164 = vmatpush.bf16.msra.mxu0 %v104
    %165 = vmatmul.bf16.gmra.mxu0 %v91
    %v166 = vpop.f32.mrf.mxu0
    %v167 = vadd.f32 0.0, %v166
    %v168 = vpop.f32.mrf.mxu0
    %169 = vdwg.mxu0
    %170 = vmatpush.bf16.msra.mxu0 0
    %171 = vmatpush.bf16.msra.mxu0 0
    %172 = vmatpush.bf16.msra.mxu0 0
    %173 = vmatpush.bf16.msra.mxu0 0
    %174 = vmatpush.bf16.msra.mxu0 0
    %175 = vmatpush.bf16.msra.mxu0 0
    %176 = vmatpush.bf16.msra.mxu0 0
    %177 = vmatpush.bf16.msra.mxu0 %v107
    %178 = vmatmul.bf16.gmra.mxu0 %v91
    %v179 = vpop.f32.mrf.mxu0
    %v180 = vadd.f32 0.0, %v179
    %v181 = vpop.f32.mrf.mxu0
    %182 = vdwg.mxu0
    %183 = vmatpush.bf16.msra.mxu0 0
    %184 = vmatpush.bf16.msra.mxu0 0
    %185 = vmatpush.bf16.msra.mxu0 0
    %186 = vmatpush.bf16.msra.mxu0 0
    %187 = vmatpush.bf16.msra.mxu0 0
    %188 = vmatpush.bf16.msra.mxu0 0
    %189 = vmatpush.bf16.msra.mxu0 0
    %190 = vmatpush.bf16.msra.mxu0 %v110
    %191 = vmatmul.bf16.gmra.mxu0 %v91
    %v192 = vpop.f32.mrf.mxu0
    %v193 = vadd.f32 0.0, %v192
    %v194 = vpop.f32.mrf.mxu0
    %195 = vdwg.mxu0
    %196 = vmatpush.bf16.msra.mxu0 0
    %197 = vmatpush.bf16.msra.mxu0 0
    %198 = vmatpush.bf16.msra.mxu0 0
    %199 = vmatpush.bf16.msra.mxu0 0
    %200 = vmatpush.bf16.msra.mxu0 0
    %201 = vmatpush.bf16.msra.mxu0 0
    %202 = vmatpush.bf16.msra.mxu0 0
    %203 = vmatpush.bf16.msra.mxu0 %v113
    %204 = vmatmul.bf16.gmra.mxu0 %v91
    %v205 = vpop.f32.mrf.mxu0
    %v206 = vadd.f32 0.0, %v205
    %v207 = vpop.f32.mrf.mxu0
    %208 = vdwg.mxu0
    %209 = vmatpush.bf16.msra.mxu0 0
    %210 = vmatpush.bf16.msra.mxu0 0
    %211 = vmatpush.bf16.msra.mxu0 0
    %212 = vmatpush.bf16.msra.mxu0 0
    %213 = vmatpush.bf16.msra.mxu0 0
    %214 = vmatpush.bf16.msra.mxu0 0
    %215 = vmatpush.bf16.msra.mxu0 0
    %216 = vmatpush.bf16.msra.mxu0 %v116
    %217 = vmatmul.bf16.gmra.mxu0 %v91
    %v218 = vpop.f32.mrf.mxu0
    %v219 = vadd.f32 0.0, %v218
    %v220 = vpop.f32.mrf.mxu0
    %221 = vdwg.mxu0
    %v222 = vmax.f32 %v128, 0.0
    %v223 = vmax.f32 %v141, 0.0
    %v224 = vmax.f32 %v154, 0.0
    %v225 = vmax.f32 %v167, 0.0
    %v226 = vmax.f32 %v180, 0.0
    %v227 = vmax.f32 %v193, 0.0
    %v228 = vmax.f32 %v206, 0.0
    %v229 = vmax.f32 %v219, 0.0
    %v230 = vpack.c.bf16 %v222, %v222
    %v231 = vpack.c.bf16 %v223, %v223
    %v232 = vpack.c.bf16 %v224, %v224
    %v233 = vpack.c.bf16 %v225, %v225
    %v234 = vpack.c.bf16 %v226, %v226
    %v235 = vpack.c.bf16 %v227, %v227
    %v236 = vpack.c.bf16 %v228, %v228
    %v237 = vpack.c.bf16 %v229, %v229
    %v238 = vld [vmem:[#allocation4] sm:$0xff]
    %v239 = vld [vmem:[#allocation4 + $0x8] sm:$0xff]
    %v240 = vld [vmem:[#allocation4 + $0x10] sm:$0xff]
    %v241 = vld [vmem:[#allocation4 + $0x18] sm:$0xff]
    %v242 = vld [vmem:[#allocation4 + $0x20] sm:$0xff]
    %v243 = vld [vmem:[#allocation4 + $0x28] sm:$0xff]
    %v244 = vld [vmem:[#allocation4 + $0x30] sm:$0xff]
    %v245 = vld [vmem:[#allocation4 + $0x38] sm:$0xff]
    %v246 = vld [vmem:[#allocation4 + $0x40] sm:$0xff]
    %v247 = vld [vmem:[#allocation4 + $0x48] sm:$0xff]
    %v248 = vld [vmem:[#allocation4 + $0x50] sm:$0xff]
    %v249 = vld [vmem:[#allocation4 + $0x58] sm:$0xff]
    %v250 = vld [vmem:[#allocation4 + $0x60] sm:$0xff]
    %v251 = vld [vmem:[#allocation4 + $0x68] sm:$0xff]
    %v252 = vld [vmem:[#allocation4 + $0x70] sm:$0xff]
    %v253 = vld [vmem:[#allocation4 + $0x78] sm:$0xff]
    %v254 = vld [vmem:[#allocation4 + $0x80] sm:$0xff]
    %v255 = vld [vmem:[#allocation4 + $0x88] sm:$0xff]
    %v256 = vld [vmem:[#allocation4 + $0x90] sm:$0xff]
    %v257 = vld [vmem:[#allocation4 + $0x98] sm:$0xff]
    %v258 = vld [vmem:[#allocation4 + $0xa0] sm:$0xff]
    %v259 = vld [vmem:[#allocation4 + $0xa8] sm:$0xff]
    %v260 = vld [vmem:[#allocation4 + $0xb0] sm:$0xff]
    %v261 = vld [vmem:[#allocation4 + $0xb8] sm:$0xff]
    %v262 = vld [vmem:[#allocation4 + $0xc0] sm:$0xff]
    %v263 = vld [vmem:[#allocation4 + $0xc8] sm:$0xff]
    %v264 = vld [vmem:[#allocation4 + $0xd0] sm:$0xff]
    %v265 = vld [vmem:[#allocation4 + $0xd8] sm:$0xff]
    %v266 = vld [vmem:[#allocation4 + $0xe0] sm:$0xff]
    %v267 = vld [vmem:[#allocation4 + $0xe8] sm:$0xff]
    %v268 = vld [vmem:[#allocation4 + $0xf0] sm:$0xff]
    %v269 = vld [vmem:[#allocation4 + $0xf8] sm:$0xff]
    %v270 = vld [vmem:[#allocation4 + $0x100] sm:$0xff]
    %v271 = vld [vmem:[#allocation4 + $0x108] sm:$0xff]
    %v272 = vld [vmem:[#allocation4 + $0x110] sm:$0xff]
    %v273 = vld [vmem:[#allocation4 + $0x118] sm:$0xff]
    %v274 = vld [vmem:[#allocation4 + $0x120] sm:$0xff]
    %v275 = vld [vmem:[#allocation4 + $0x128] sm:$0xff]
    %v276 = vld [vmem:[#allocation4 + $0x130] sm:$0xff]
    %v277 = vld [vmem:[#allocation4 + $0x138] sm:$0xff]
    %v278 = vld [vmem:[#allocation4 + $0x140] sm:$0xff]
    %v279 = vld [vmem:[#allocation4 + $0x148] sm:$0xff]
    %v280 = vld [vmem:[#allocation4 + $0x150] sm:$0xff]
    %v281 = vld [vmem:[#allocation4 + $0x158] sm:$0xff]
    %v282 = vld [vmem:[#allocation4 + $0x160] sm:$0xff]
    %v283 = vld [vmem:[#allocation4 + $0x168] sm:$0xff]
    %v284 = vld [vmem:[#allocation4 + $0x170] sm:$0xff]
    %v285 = vld [vmem:[#allocation4 + $0x178] sm:$0xff]
    %v286 = vld [vmem:[#allocation4 + $0x180] sm:$0xff]
    %v287 = vld [vmem:[#allocation4 + $0x188] sm:$0xff]
    %v288 = vld [vmem:[#allocation4 + $0x190] sm:$0xff]
    %v289 = vld [vmem:[#allocation4 + $0x198] sm:$0xff]
    %v290 = vld [vmem:[#allocation4 + $0x1a0] sm:$0xff]
    %v291 = vld [vmem:[#allocation4 + $0x1a8] sm:$0xff]
    %v292 = vld [vmem:[#allocation4 + $0x1b0] sm:$0xff]
    %v293 = vld [vmem:[#allocation4 + $0x1b8] sm:$0xff]
    %v294 = vld [vmem:[#allocation4 + $0x1c0] sm:$0xff]
    %v295 = vld [vmem:[#allocation4 + $0x1c8] sm:$0xff]
    %v296 = vld [vmem:[#allocation4 + $0x1d0] sm:$0xff]
    %v297 = vld [vmem:[#allocation4 + $0x1d8] sm:$0xff]
    %v298 = vld [vmem:[#allocation4 + $0x1e0] sm:$0xff]
    %v299 = vld [vmem:[#allocation4 + $0x1e8] sm:$0xff]
    %v300 = vld [vmem:[#allocation4 + $0x1f0] sm:$0xff]
    %v301 = vld [vmem:[#allocation4 + $0x1f8] sm:$0xff]
    %v302 = vld [vmem:[#allocation4 + $0x200] sm:$0xff]
    %v303 = vld [vmem:[#allocation4 + $0x208] sm:$0xff]
    %v304 = vld [vmem:[#allocation4 + $0x210] sm:$0xff]
    %v305 = vld [vmem:[#allocation4 + $0x218] sm:$0xff]
    %v306 = vld [vmem:[#allocation4 + $0x220] sm:$0xff]
    %v307 = vld [vmem:[#allocation4 + $0x228] sm:$0xff]
    %v308 = vld [vmem:[#allocation4 + $0x230] sm:$0xff]
    %v309 = vld [vmem:[#allocation4 + $0x238] sm:$0xff]
    %v310 = vld [vmem:[#allocation4 + $0x240] sm:$0xff]
    %v311 = vld [vmem:[#allocation4 + $0x248] sm:$0xff]
    %v312 = vld [vmem:[#allocation4 + $0x250] sm:$0xff]
    %v313 = vld [vmem:[#allocation4 + $0x258] sm:$0xff]
    %v314 = vld [vmem:[#allocation4 + $0x260] sm:$0xff]
    %v315 = vld [vmem:[#allocation4 + $0x268] sm:$0xff]
    %v316 = vld [vmem:[#allocation4 + $0x270] sm:$0xff]
    %v317 = vld [vmem:[#allocation4 + $0x278] sm:$0xff]
    %v318 = vld [vmem:[#allocation4 + $0x280] sm:$0xff]
    %v319 = vld [vmem:[#allocation4 + $0x288] sm:$0xff]
    %v320 = vld [vmem:[#allocation4 + $0x290] sm:$0xff]
    %v321 = vld [vmem:[#allocation4 + $0x298] sm:$0xff]
    %v322 = vld [vmem:[#allocation4 + $0x2a0] sm:$0xff]
    %v323 = vld [vmem:[#allocation4 + $0x2a8] sm:$0xff]
    %v324 = vld [vmem:[#allocation4 + $0x2b0] sm:$0xff]
    %v325 = vld [vmem:[#allocation4 + $0x2b8] sm:$0xff]
    %v326 = vld [vmem:[#allocation4 + $0x2c0] sm:$0xff]
    %v327 = vld [vmem:[#allocation4 + $0x2c8] sm:$0xff]
    %v328 = vld [vmem:[#allocation4 + $0x2d0] sm:$0xff]
    %v329 = vld [vmem:[#allocation4 + $0x2d8] sm:$0xff]
    %v330 = vld [vmem:[#allocation4 + $0x2e0] sm:$0xff]
    %v331 = vld [vmem:[#allocation4 + $0x2e8] sm:$0xff]
    %v332 = vld [vmem:[#allocation4 + $0x2f0] sm:$0xff]
    %v333 = vld [vmem:[#allocation4 + $0x2f8] sm:$0xff]
    %v334 = vld [vmem:[#allocation4 + $0x300] sm:$0xff]
    %v335 = vld [vmem:[#allocation4 + $0x308] sm:$0xff]
    %v336 = vld [vmem:[#allocation4 + $0x310] sm:$0xff]
    %v337 = vld [vmem:[#allocation4 + $0x318] sm:$0xff]
    %v338 = vld [vmem:[#allocation4 + $0x320] sm:$0xff]
    %v339 = vld [vmem:[#allocation4 + $0x328] sm:$0xff]
    %v340 = vld [vmem:[#allocation4 + $0x330] sm:$0xff]
    %v341 = vld [vmem:[#allocation4 + $0x338] sm:$0xff]
    %v342 = vld [vmem:[#allocation4 + $0x340] sm:$0xff]
    %v343 = vld [vmem:[#allocation4 + $0x348] sm:$0xff]
    %v344 = vld [vmem:[#allocation4 + $0x350] sm:$0xff]
    %v345 = vld [vmem:[#allocation4 + $0x358] sm:$0xff]
    %v346 = vld [vmem:[#allocation4 + $0x360] sm:$0xff]
    %v347 = vld [vmem:[#allocation4 + $0x368] sm:$0xff]
    %v348 = vld [vmem:[#allocation4 + $0x370] sm:$0xff]
    %v349 = vld [vmem:[#allocation4 + $0x378] sm:$0xff]
    %v350 = vld [vmem:[#allocation4 + $0x380] sm:$0xff]
    %v351 = vld [vmem:[#allocation4 + $0x388] sm:$0xff]
    %v352 = vld [vmem:[#allocation4 + $0x390] sm:$0xff]
    %v353 = vld [vmem:[#allocation4 + $0x398] sm:$0xff]
    %v354 = vld [vmem:[#allocation4 + $0x3a0] sm:$0xff]
    %v355 = vld [vmem:[#allocation4 + $0x3a8] sm:$0xff]
    %v356 = vld [vmem:[#allocation4 + $0x3b0] sm:$0xff]
    %v357 = vld [vmem:[#allocation4 + $0x3b8] sm:$0xff]
    %v358 = vld [vmem:[#allocation4 + $0x3c0] sm:$0xff]
    %v359 = vld [vmem:[#allocation4 + $0x3c8] sm:$0xff]
    %v360 = vld [vmem:[#allocation4 + $0x3d0] sm:$0xff]
    %v361 = vld [vmem:[#allocation4 + $0x3d8] sm:$0xff]
    %v362 = vld [vmem:[#allocation4 + $0x3e0] sm:$0xff]
    %v363 = vld [vmem:[#allocation4 + $0x3e8] sm:$0xff]
    %v364 = vld [vmem:[#allocation4 + $0x3f0] sm:$0xff]
    %v365 = vld [vmem:[#allocation4 + $0x3f8] sm:$0xff]
    %v366 = vld [vmem:[#allocation4 + $0x400] sm:$0xff]
    %v367 = vld [vmem:[#allocation4 + $0x408] sm:$0xff]
    %v368 = vld [vmem:[#allocation4 + $0x410] sm:$0xff]
    %v369 = vld [vmem:[#allocation4 + $0x418] sm:$0xff]
    %v370 = vld [vmem:[#allocation4 + $0x420] sm:$0xff]
    %v371 = vld [vmem:[#allocation4 + $0x428] sm:$0xff]
    %v372 = vld [vmem:[#allocation4 + $0x430] sm:$0xff]
    %v373 = vld [vmem:[#allocation4 + $0x438] sm:$0xff]
    %v374 = vld [vmem:[#allocation4 + $0x440] sm:$0xff]
    %v375 = vld [vmem:[#allocation4 + $0x448] sm:$0xff]
    %v376 = vld [vmem:[#allocation4 + $0x450] sm:$0xff]
    %v377 = vld [vmem:[#allocation4 + $0x458] sm:$0xff]
    %v378 = vld [vmem:[#allocation4 + $0x460] sm:$0xff]
    %v379 = vld [vmem:[#allocation4 + $0x468] sm:$0xff]
    %v380 = vld [vmem:[#allocation4 + $0x470] sm:$0xff]
    %v381 = vld [vmem:[#allocation4 + $0x478] sm:$0xff]
    %v382 = vld [vmem:[#allocation4 + $0x480] sm:$0xff]
    %v383 = vld [vmem:[#allocation4 + $0x488] sm:$0xff]
    %v384 = vld [vmem:[#allocation4 + $0x490] sm:$0xff]
    %v385 = vld [vmem:[#allocation4 + $0x498] sm:$0xff]
    %v386 = vld [vmem:[#allocation4 + $0x4a0] sm:$0xff]
    %v387 = vld [vmem:[#allocation4 + $0x4a8] sm:$0xff]
    %v388 = vld [vmem:[#allocation4 + $0x4b0] sm:$0xff]
    %v389 = vld [vmem:[#allocation4 + $0x4b8] sm:$0xff]
    %v390 = vld [vmem:[#allocation4 + $0x4c0] sm:$0xff]
    %v391 = vld [vmem:[#allocation4 + $0x4c8] sm:$0xff]
    %v392 = vld [vmem:[#allocation4 + $0x4d0] sm:$0xff]
    %v393 = vld [vmem:[#allocation4 + $0x4d8] sm:$0xff]
    %v394 = vld [vmem:[#allocation4 + $0x4e0] sm:$0xff]
    %v395 = vld [vmem:[#allocation4 + $0x4e8] sm:$0xff]
    %v396 = vld [vmem:[#allocation4 + $0x4f0] sm:$0xff]
    %v397 = vld [vmem:[#allocation4 + $0x4f8] sm:$0xff]
    %v398 = vld [vmem:[#allocation4 + $0x500] sm:$0xff]
    %v399 = vld [vmem:[#allocation4 + $0x508] sm:$0xff]
    %v400 = vld [vmem:[#allocation4 + $0x510] sm:$0xff]
    %v401 = vld [vmem:[#allocation4 + $0x518] sm:$0xff]
    %v402 = vld [vmem:[#allocation4 + $0x520] sm:$0xff]
    %v403 = vld [vmem:[#allocation4 + $0x528] sm:$0xff]
    %v404 = vld [vmem:[#allocation4 + $0x530] sm:$0xff]
    %v405 = vld [vmem:[#allocation4 + $0x538] sm:$0xff]
    %v406 = vld [vmem:[#allocation4 + $0x540] sm:$0xff]
    %v407 = vld [vmem:[#allocation4 + $0x548] sm:$0xff]
    %v408 = vld [vmem:[#allocation4 + $0x550] sm:$0xff]
    %v409 = vld [vmem:[#allocation4 + $0x558] sm:$0xff]
    %v410 = vld [vmem:[#allocation4 + $0x560] sm:$0xff]
    %v411 = vld [vmem:[#allocation4 + $0x568] sm:$0xff]
    %v412 = vld [vmem:[#allocation4 + $0x570] sm:$0xff]
    %v413 = vld [vmem:[#allocation4 + $0x578] sm:$0xff]
    %v414 = vld [vmem:[#allocation4 + $0x580] sm:$0xff]
    %v415 = vld [vmem:[#allocation4 + $0x588] sm:$0xff]
    %v416 = vld [vmem:[#allocation4 + $0x590] sm:$0xff]
    %v417 = vld [vmem:[#allocation4 + $0x598] sm:$0xff]
    %v418 = vld [vmem:[#allocation4 + $0x5a0] sm:$0xff]
    %v419 = vld [vmem:[#allocation4 + $0x5a8] sm:$0xff]
    %v420 = vld [vmem:[#allocation4 + $0x5b0] sm:$0xff]
    %v421 = vld [vmem:[#allocation4 + $0x5b8] sm:$0xff]
    %v422 = vld [vmem:[#allocation4 + $0x5c0] sm:$0xff]
    %v423 = vld [vmem:[#allocation4 + $0x5c8] sm:$0xff]
    %v424 = vld [vmem:[#allocation4 + $0x5d0] sm:$0xff]
    %v425 = vld [vmem:[#allocation4 + $0x5d8] sm:$0xff]
    %v426 = vld [vmem:[#allocation4 + $0x5e0] sm:$0xff]
    %v427 = vld [vmem:[#allocation4 + $0x5e8] sm:$0xff]
    %v428 = vld [vmem:[#allocation4 + $0x5f0] sm:$0xff]
    %v429 = vld [vmem:[#allocation4 + $0x5f8] sm:$0xff]
    %v430 = vld [vmem:[#allocation4 + $0x600] sm:$0xff]
    %v431 = vld [vmem:[#allocation4 + $0x608] sm:$0xff]
    %v432 = vld [vmem:[#allocation4 + $0x610] sm:$0xff]
    %v433 = vld [vmem:[#allocation4 + $0x618] sm:$0xff]
    %v434 = vld [vmem:[#allocation4 + $0x620] sm:$0xff]
    %v435 = vld [vmem:[#allocation4 + $0x628] sm:$0xff]
    %v436 = vld [vmem:[#allocation4 + $0x630] sm:$0xff]
    %v437 = vld [vmem:[#allocation4 + $0x638] sm:$0xff]
    %v438 = vld [vmem:[#allocation4 + $0x640] sm:$0xff]
    %v439 = vld [vmem:[#allocation4 + $0x648] sm:$0xff]
    %v440 = vld [vmem:[#allocation4 + $0x650] sm:$0xff]
    %v441 = vld [vmem:[#allocation4 + $0x658] sm:$0xff]
    %v442 = vld [vmem:[#allocation4 + $0x660] sm:$0xff]
    %v443 = vld [vmem:[#allocation4 + $0x668] sm:$0xff]
    %v444 = vld [vmem:[#allocation4 + $0x670] sm:$0xff]
    %v445 = vld [vmem:[#allocation4 + $0x678] sm:$0xff]
    %v446 = vld [vmem:[#allocation4 + $0x680] sm:$0xff]
    %v447 = vld [vmem:[#allocation4 + $0x688] sm:$0xff]
    %v448 = vld [vmem:[#allocation4 + $0x690] sm:$0xff]
    %v449 = vld [vmem:[#allocation4 + $0x698] sm:$0xff]
    %v450 = vld [vmem:[#allocation4 + $0x6a0] sm:$0xff]
    %v451 = vld [vmem:[#allocation4 + $0x6a8] sm:$0xff]
    %v452 = vld [vmem:[#allocation4 + $0x6b0] sm:$0xff]
    %v453 = vld [vmem:[#allocation4 + $0x6b8] sm:$0xff]
    %v454 = vld [vmem:[#allocation4 + $0x6c0] sm:$0xff]
    %v455 = vld [vmem:[#allocation4 + $0x6c8] sm:$0xff]
    %v456 = vld [vmem:[#allocation4 + $0x6d0] sm:$0xff]
    %v457 = vld [vmem:[#allocation4 + $0x6d8] sm:$0xff]
    %v458 = vld [vmem:[#allocation4 + $0x6e0] sm:$0xff]
    %v459 = vld [vmem:[#allocation4 + $0x6e8] sm:$0xff]
    %v460 = vld [vmem:[#allocation4 + $0x6f0] sm:$0xff]
    %v461 = vld [vmem:[#allocation4 + $0x6f8] sm:$0xff]
    %v462 = vld [vmem:[#allocation4 + $0x700] sm:$0xff]
    %v463 = vld [vmem:[#allocation4 + $0x708] sm:$0xff]
    %v464 = vld [vmem:[#allocation4 + $0x710] sm:$0xff]
    %v465 = vld [vmem:[#allocation4 + $0x718] sm:$0xff]
    %v466 = vld [vmem:[#allocation4 + $0x720] sm:$0xff]
    %v467 = vld [vmem:[#allocation4 + $0x728] sm:$0xff]
    %v468 = vld [vmem:[#allocation4 + $0x730] sm:$0xff]
    %v469 = vld [vmem:[#allocation4 + $0x738] sm:$0xff]
    %v470 = vld [vmem:[#allocation4 + $0x740] sm:$0xff]
    %v471 = vld [vmem:[#allocation4 + $0x748] sm:$0xff]
    %v472 = vld [vmem:[#allocation4 + $0x750] sm:$0xff]
    %v473 = vld [vmem:[#allocation4 + $0x758] sm:$0xff]
    %v474 = vld [vmem:[#allocation4 + $0x760] sm:$0xff]
    %v475 = vld [vmem:[#allocation4 + $0x768] sm:$0xff]
    %v476 = vld [vmem:[#allocation4 + $0x770] sm:$0xff]
    %v477 = vld [vmem:[#allocation4 + $0x778] sm:$0xff]
    %v478 = vld [vmem:[#allocation4 + $0x780] sm:$0xff]
    %v479 = vld [vmem:[#allocation4 + $0x788] sm:$0xff]
    %v480 = vld [vmem:[#allocation4 + $0x790] sm:$0xff]
    %v481 = vld [vmem:[#allocation4 + $0x798] sm:$0xff]
    %v482 = vld [vmem:[#allocation4 + $0x7a0] sm:$0xff]
    %v483 = vld [vmem:[#allocation4 + $0x7a8] sm:$0xff]
    %v484 = vld [vmem:[#allocation4 + $0x7b0] sm:$0xff]
    %v485 = vld [vmem:[#allocation4 + $0x7b8] sm:$0xff]
    %v486 = vld [vmem:[#allocation4 + $0x7c0] sm:$0xff]
    %v487 = vld [vmem:[#allocation4 + $0x7c8] sm:$0xff]
    %v488 = vld [vmem:[#allocation4 + $0x7d0] sm:$0xff]
    %v489 = vld [vmem:[#allocation4 + $0x7d8] sm:$0xff]
    %v490 = vld [vmem:[#allocation4 + $0x7e0] sm:$0xff]
    %v491 = vld [vmem:[#allocation4 + $0x7e8] sm:$0xff]
    %v492 = vld [vmem:[#allocation4 + $0x7f0] sm:$0xff]
    %v493 = vld [vmem:[#allocation4 + $0x7f8] sm:$0xff]
    %v494 = vld [vmem:[#allocation4 + $0x800] sm:$0xff]
    %v495 = vld [vmem:[#allocation4 + $0x808] sm:$0xff]
    %v496 = vld [vmem:[#allocation4 + $0x810] sm:$0xff]
    %v497 = vld [vmem:[#allocation4 + $0x818] sm:$0xff]
    %v498 = vld [vmem:[#allocation4 + $0x820] sm:$0xff]
    %v499 = vld [vmem:[#allocation4 + $0x828] sm:$0xff]
    %v500 = vld [vmem:[#allocation4 + $0x830] sm:$0xff]
    %v501 = vld [vmem:[#allocation4 + $0x838] sm:$0xff]
    %v502 = vld [vmem:[#allocation4 + $0x840] sm:$0xff]
    %v503 = vld [vmem:[#allocation4 + $0x848] sm:$0xff]
    %v504 = vld [vmem:[#allocation4 + $0x850] sm:$0xff]
    %v505 = vld [vmem:[#allocation4 + $0x858] sm:$0xff]
    %v506 = vld [vmem:[#allocation4 + $0x860] sm:$0xff]
    %v507 = vld [vmem:[#allocation4 + $0x868] sm:$0xff]
    %v508 = vld [vmem:[#allocation4 + $0x870] sm:$0xff]
    %v509 = vld [vmem:[#allocation4 + $0x878] sm:$0xff]
    %v510 = vld [vmem:[#allocation4 + $0x880] sm:$0xff]
    %v511 = vld [vmem:[#allocation4 + $0x888] sm:$0xff]
    %v512 = vld [vmem:[#allocation4 + $0x890] sm:$0xff]
    %v513 = vld [vmem:[#allocation4 + $0x898] sm:$0xff]
    %v514 = vld [vmem:[#allocation4 + $0x8a0] sm:$0xff]
    %v515 = vld [vmem:[#allocation4 + $0x8a8] sm:$0xff]
    %v516 = vld [vmem:[#allocation4 + $0x8b0] sm:$0xff]
    %v517 = vld [vmem:[#allocation4 + $0x8b8] sm:$0xff]
    %v518 = vld [vmem:[#allocation4 + $0x8c0] sm:$0xff]
    %v519 = vld [vmem:[#allocation4 + $0x8c8] sm:$0xff]
    %v520 = vld [vmem:[#allocation4 + $0x8d0] sm:$0xff]
    %v521 = vld [vmem:[#allocation4 + $0x8d8] sm:$0xff]
    %v522 = vld [vmem:[#allocation4 + $0x8e0] sm:$0xff]
    %v523 = vld [vmem:[#allocation4 + $0x8e8] sm:$0xff]
    %v524 = vld [vmem:[#allocation4 + $0x8f0] sm:$0xff]
    %v525 = vld [vmem:[#allocation4 + $0x8f8] sm:$0xff]
    %v526 = vld [vmem:[#allocation4 + $0x900] sm:$0xff]
    %v527 = vld [vmem:[#allocation4 + $0x908] sm:$0xff]
    %v528 = vld [vmem:[#allocation4 + $0x910] sm:$0xff]
    %v529 = vld [vmem:[#allocation4 + $0x918] sm:$0xff]
    %v530 = vld [vmem:[#allocation4 + $0x920] sm:$0xff]
    %v531 = vld [vmem:[#allocation4 + $0x928] sm:$0xff]
    %v532 = vld [vmem:[#allocation4 + $0x930] sm:$0xff]
    %v533 = vld [vmem:[#allocation4 + $0x938] sm:$0xff]
    %v534 = vld [vmem:[#allocation4 + $0x940] sm:$0xff]
    %v535 = vld [vmem:[#allocation4 + $0x948] sm:$0xff]
    %v536 = vld [vmem:[#allocation4 + $0x950] sm:$0xff]
    %v537 = vld [vmem:[#allocation4 + $0x958] sm:$0xff]
    %v538 = vld [vmem:[#allocation4 + $0x960] sm:$0xff]
    %v539 = vld [vmem:[#allocation4 + $0x968] sm:$0xff]
    %v540 = vld [vmem:[#allocation4 + $0x970] sm:$0xff]
    %v541 = vld [vmem:[#allocation4 + $0x978] sm:$0xff]
    %v542 = vld [vmem:[#allocation4 + $0x980] sm:$0xff]
    %v543 = vld [vmem:[#allocation4 + $0x988] sm:$0xff]
    %v544 = vld [vmem:[#allocation4 + $0x990] sm:$0xff]
    %v545 = vld [vmem:[#allocation4 + $0x998] sm:$0xff]
    %v546 = vld [vmem:[#allocation4 + $0x9a0] sm:$0xff]
    %v547 = vld [vmem:[#allocation4 + $0x9a8] sm:$0xff]
    %v548 = vld [vmem:[#allocation4 + $0x9b0] sm:$0xff]
    %v549 = vld [vmem:[#allocation4 + $0x9b8] sm:$0xff]
    %v550 = vld [vmem:[#allocation4 + $0x9c0] sm:$0xff]
    %v551 = vld [vmem:[#allocation4 + $0x9c8] sm:$0xff]
    %v552 = vld [vmem:[#allocation4 + $0x9d0] sm:$0xff]
    %v553 = vld [vmem:[#allocation4 + $0x9d8] sm:$0xff]
    %v554 = vld [vmem:[#allocation4 + $0x9e0] sm:$0xff]
    %v555 = vld [vmem:[#allocation4 + $0x9e8] sm:$0xff]
    %v556 = vld [vmem:[#allocation4 + $0x9f0] sm:$0xff]
    %v557 = vld [vmem:[#allocation4 + $0x9f8] sm:$0xff]
    %v558 = vld [vmem:[#allocation4 + $0xa00] sm:$0xff]
    %v559 = vld [vmem:[#allocation4 + $0xa08] sm:$0xff]
    %v560 = vld [vmem:[#allocation4 + $0xa10] sm:$0xff]
    %v561 = vld [vmem:[#allocation4 + $0xa18] sm:$0xff]
    %v562 = vld [vmem:[#allocation4 + $0xa20] sm:$0xff]
    %v563 = vld [vmem:[#allocation4 + $0xa28] sm:$0xff]
    %v564 = vld [vmem:[#allocation4 + $0xa30] sm:$0xff]
    %v565 = vld [vmem:[#allocation4 + $0xa38] sm:$0xff]
    %v566 = vld [vmem:[#allocation4 + $0xa40] sm:$0xff]
    %v567 = vld [vmem:[#allocation4 + $0xa48] sm:$0xff]
    %v568 = vld [vmem:[#allocation4 + $0xa50] sm:$0xff]
    %v569 = vld [vmem:[#allocation4 + $0xa58] sm:$0xff]
    %v570 = vld [vmem:[#allocation4 + $0xa60] sm:$0xff]
    %v571 = vld [vmem:[#allocation4 + $0xa68] sm:$0xff]
    %v572 = vld [vmem:[#allocation4 + $0xa70] sm:$0xff]
    %v573 = vld [vmem:[#allocation4 + $0xa78] sm:$0xff]
    %v574 = vld [vmem:[#allocation4 + $0xa80] sm:$0xff]
    %v575 = vld [vmem:[#allocation4 + $0xa88] sm:$0xff]
    %v576 = vld [vmem:[#allocation4 + $0xa90] sm:$0xff]
    %v577 = vld [vmem:[#allocation4 + $0xa98] sm:$0xff]
    %v578 = vld [vmem:[#allocation4 + $0xaa0] sm:$0xff]
    %v579 = vld [vmem:[#allocation4 + $0xaa8] sm:$0xff]
    %v580 = vld [vmem:[#allocation4 + $0xab0] sm:$0xff]
    %v581 = vld [vmem:[#allocation4 + $0xab8] sm:$0xff]
    %v582 = vld [vmem:[#allocation4 + $0xac0] sm:$0xff]
    %v583 = vld [vmem:[#allocation4 + $0xac8] sm:$0xff]
    %v584 = vld [vmem:[#allocation4 + $0xad0] sm:$0xff]
    %v585 = vld [vmem:[#allocation4 + $0xad8] sm:$0xff]
    %v586 = vld [vmem:[#allocation4 + $0xae0] sm:$0xff]
    %v587 = vld [vmem:[#allocation4 + $0xae8] sm:$0xff]
    %v588 = vld [vmem:[#allocation4 + $0xaf0] sm:$0xff]
    %v589 = vld [vmem:[#allocation4 + $0xaf8] sm:$0xff]
    %v590 = vld [vmem:[#allocation4 + $0xb00] sm:$0xff]
    %v591 = vld [vmem:[#allocation4 + $0xb08] sm:$0xff]
    %v592 = vld [vmem:[#allocation4 + $0xb10] sm:$0xff]
    %v593 = vld [vmem:[#allocation4 + $0xb18] sm:$0xff]
    %v594 = vld [vmem:[#allocation4 + $0xb20] sm:$0xff]
    %v595 = vld [vmem:[#allocation4 + $0xb28] sm:$0xff]
    %v596 = vld [vmem:[#allocation4 + $0xb30] sm:$0xff]
    %v597 = vld [vmem:[#allocation4 + $0xb38] sm:$0xff]
    %v598 = vld [vmem:[#allocation4 + $0xb40] sm:$0xff]
    %v599 = vld [vmem:[#allocation4 + $0xb48] sm:$0xff]
    %v600 = vld [vmem:[#allocation4 + $0xb50] sm:$0xff]
    %v601 = vld [vmem:[#allocation4 + $0xb58] sm:$0xff]
    %v602 = vld [vmem:[#allocation4 + $0xb60] sm:$0xff]
    %v603 = vld [vmem:[#allocation4 + $0xb68] sm:$0xff]
    %v604 = vld [vmem:[#allocation4 + $0xb70] sm:$0xff]
    %v605 = vld [vmem:[#allocation4 + $0xb78] sm:$0xff]
    %v606 = vld [vmem:[#allocation4 + $0xb80] sm:$0xff]
    %v607 = vld [vmem:[#allocation4 + $0xb88] sm:$0xff]
    %v608 = vld [vmem:[#allocation4 + $0xb90] sm:$0xff]
    %v609 = vld [vmem:[#allocation4 + $0xb98] sm:$0xff]
    %v610 = vld [vmem:[#allocation4 + $0xba0] sm:$0xff]
    %v611 = vld [vmem:[#allocation4 + $0xba8] sm:$0xff]
    %v612 = vld [vmem:[#allocation4 + $0xbb0] sm:$0xff]
    %v613 = vld [vmem:[#allocation4 + $0xbb8] sm:$0xff]
    %v614 = vld [vmem:[#allocation4 + $0xbc0] sm:$0xff]
    %v615 = vld [vmem:[#allocation4 + $0xbc8] sm:$0xff]
    %v616 = vld [vmem:[#allocation4 + $0xbd0] sm:$0xff]
    %v617 = vld [vmem:[#allocation4 + $0xbd8] sm:$0xff]
    %v618 = vld [vmem:[#allocation4 + $0xbe0] sm:$0xff]
    %v619 = vld [vmem:[#allocation4 + $0xbe8] sm:$0xff]
    %v620 = vld [vmem:[#allocation4 + $0xbf0] sm:$0xff]
    %v621 = vld [vmem:[#allocation4 + $0xbf8] sm:$0xff]
    %v622 = vld [vmem:[#allocation4 + $0xc00] sm:$0xff]
    %v623 = vld [vmem:[#allocation4 + $0xc08] sm:$0xff]
    %v624 = vld [vmem:[#allocation4 + $0xc10] sm:$0xff]
    %v625 = vld [vmem:[#allocation4 + $0xc18] sm:$0xff]
    %v626 = vld [vmem:[#allocation4 + $0xc20] sm:$0xff]
    %v627 = vld [vmem:[#allocation4 + $0xc28] sm:$0xff]
    %v628 = vld [vmem:[#allocation4 + $0xc30] sm:$0xff]
    %v629 = vld [vmem:[#allocation4 + $0xc38] sm:$0xff]
    %v630 = vld [vmem:[#allocation4 + $0xc40] sm:$0xff]
    %v631 = vld [vmem:[#allocation4 + $0xc48] sm:$0xff]
    %v632 = vld [vmem:[#allocation4 + $0xc50] sm:$0xff]
    %v633 = vld [vmem:[#allocation4 + $0xc58] sm:$0xff]
    %v634 = vld [vmem:[#allocation4 + $0xc60] sm:$0xff]
    %v635 = vld [vmem:[#allocation4 + $0xc68] sm:$0xff]
    %v636 = vld [vmem:[#allocation4 + $0xc70] sm:$0xff]
    %v637 = vld [vmem:[#allocation4 + $0xc78] sm:$0xff]
    %v638 = vld [vmem:[#allocation4 + $0xc80] sm:$0xff]
    %v639 = vld [vmem:[#allocation4 + $0xc88] sm:$0xff]
    %v640 = vld [vmem:[#allocation4 + $0xc90] sm:$0xff]
    %v641 = vld [vmem:[#allocation4 + $0xc98] sm:$0xff]
    %v642 = vld [vmem:[#allocation4 + $0xca0] sm:$0xff]
    %v643 = vld [vmem:[#allocation4 + $0xca8] sm:$0xff]
    %v644 = vld [vmem:[#allocation4 + $0xcb0] sm:$0xff]
    %v645 = vld [vmem:[#allocation4 + $0xcb8] sm:$0xff]
    %v646 = vld [vmem:[#allocation4 + $0xcc0] sm:$0xff]
    %v647 = vld [vmem:[#allocation4 + $0xcc8] sm:$0xff]
    %v648 = vld [vmem:[#allocation4 + $0xcd0] sm:$0xff]
    %v649 = vld [vmem:[#allocation4 + $0xcd8] sm:$0xff]
    %v650 = vld [vmem:[#allocation4 + $0xce0] sm:$0xff]
    %v651 = vld [vmem:[#allocation4 + $0xce8] sm:$0xff]
    %v652 = vld [vmem:[#allocation4 + $0xcf0] sm:$0xff]
    %v653 = vld [vmem:[#allocation4 + $0xcf8] sm:$0xff]
    %v654 = vld [vmem:[#allocation4 + $0xd00] sm:$0xff]
    %v655 = vld [vmem:[#allocation4 + $0xd08] sm:$0xff]
    %v656 = vld [vmem:[#allocation4 + $0xd10] sm:$0xff]
    %v657 = vld [vmem:[#allocation4 + $0xd18] sm:$0xff]
    %v658 = vld [vmem:[#allocation4 + $0xd20] sm:$0xff]
    %v659 = vld [vmem:[#allocation4 + $0xd28] sm:$0xff]
    %v660 = vld [vmem:[#allocation4 + $0xd30] sm:$0xff]
    %v661 = vld [vmem:[#allocation4 + $0xd38] sm:$0xff]
    %v662 = vld [vmem:[#allocation4 + $0xd40] sm:$0xff]
    %v663 = vld [vmem:[#allocation4 + $0xd48] sm:$0xff]
    %v664 = vld [vmem:[#allocation4 + $0xd50] sm:$0xff]
    %v665 = vld [vmem:[#allocation4 + $0xd58] sm:$0xff]
    %v666 = vld [vmem:[#allocation4 + $0xd60] sm:$0xff]
    %v667 = vld [vmem:[#allocation4 + $0xd68] sm:$0xff]
    %v668 = vld [vmem:[#allocation4 + $0xd70] sm:$0xff]
    %v669 = vld [vmem:[#allocation4 + $0xd78] sm:$0xff]
    %v670 = vld [vmem:[#allocation4 + $0xd80] sm:$0xff]
    %v671 = vld [vmem:[#allocation4 + $0xd88] sm:$0xff]
    %v672 = vld [vmem:[#allocation4 + $0xd90] sm:$0xff]
    %v673 = vld [vmem:[#allocation4 + $0xd98] sm:$0xff]
    %v674 = vld [vmem:[#allocation4 + $0xda0] sm:$0xff]
    %v675 = vld [vmem:[#allocation4 + $0xda8] sm:$0xff]
    %v676 = vld [vmem:[#allocation4 + $0xdb0] sm:$0xff]
    %v677 = vld [vmem:[#allocation4 + $0xdb8] sm:$0xff]
    %v678 = vld [vmem:[#allocation4 + $0xdc0] sm:$0xff]
    %v679 = vld [vmem:[#allocation4 + $0xdc8] sm:$0xff]
    %v680 = vld [vmem:[#allocation4 + $0xdd0] sm:$0xff]
    %v681 = vld [vmem:[#allocation4 + $0xdd8] sm:$0xff]
    %v682 = vld [vmem:[#allocation4 + $0xde0] sm:$0xff]
    %v683 = vld [vmem:[#allocation4 + $0xde8] sm:$0xff]
    %v684 = vld [vmem:[#allocation4 + $0xdf0] sm:$0xff]
    %v685 = vld [vmem:[#allocation4 + $0xdf8] sm:$0xff]
    %v686 = vld [vmem:[#allocation4 + $0xe00] sm:$0xff]
    %v687 = vld [vmem:[#allocation4 + $0xe08] sm:$0xff]
    %v688 = vld [vmem:[#allocation4 + $0xe10] sm:$0xff]
    %v689 = vld [vmem:[#allocation4 + $0xe18] sm:$0xff]
    %v690 = vld [vmem:[#allocation4 + $0xe20] sm:$0xff]
    %v691 = vld [vmem:[#allocation4 + $0xe28] sm:$0xff]
    %v692 = vld [vmem:[#allocation4 + $0xe30] sm:$0xff]
    %v693 = vld [vmem:[#allocation4 + $0xe38] sm:$0xff]
    %v694 = vld [vmem:[#allocation4 + $0xe40] sm:$0xff]
    %v695 = vld [vmem:[#allocation4 + $0xe48] sm:$0xff]
    %v696 = vld [vmem:[#allocation4 + $0xe50] sm:$0xff]
    %v697 = vld [vmem:[#allocation4 + $0xe58] sm:$0xff]
    %v698 = vld [vmem:[#allocation4 + $0xe60] sm:$0xff]
    %v699 = vld [vmem:[#allocation4 + $0xe68] sm:$0xff]
    %v700 = vld [vmem:[#allocation4 + $0xe70] sm:$0xff]
    %v701 = vld [vmem:[#allocation4 + $0xe78] sm:$0xff]
    %v702 = vld [vmem:[#allocation4 + $0xe80] sm:$0xff]
    %v703 = vld [vmem:[#allocation4 + $0xe88] sm:$0xff]
    %v704 = vld [vmem:[#allocation4 + $0xe90] sm:$0xff]
    %v705 = vld [vmem:[#allocation4 + $0xe98] sm:$0xff]
    %v706 = vld [vmem:[#allocation4 + $0xea0] sm:$0xff]
    %v707 = vld [vmem:[#allocation4 + $0xea8] sm:$0xff]
    %v708 = vld [vmem:[#allocation4 + $0xeb0] sm:$0xff]
    %v709 = vld [vmem:[#allocation4 + $0xeb8] sm:$0xff]
    %v710 = vld [vmem:[#allocation4 + $0xec0] sm:$0xff]
    %v711 = vld [vmem:[#allocation4 + $0xec8] sm:$0xff]
    %v712 = vld [vmem:[#allocation4 + $0xed0] sm:$0xff]
    %v713 = vld [vmem:[#allocation4 + $0xed8] sm:$0xff]
    %v714 = vld [vmem:[#allocation4 + $0xee0] sm:$0xff]
    %v715 = vld [vmem:[#allocation4 + $0xee8] sm:$0xff]
    %v716 = vld [vmem:[#allocation4 + $0xef0] sm:$0xff]
    %v717 = vld [vmem:[#allocation4 + $0xef8] sm:$0xff]
    %v718 = vld [vmem:[#allocation4 + $0xf00] sm:$0xff]
    %v719 = vld [vmem:[#allocation4 + $0xf08] sm:$0xff]
    %v720 = vld [vmem:[#allocation4 + $0xf10] sm:$0xff]
    %v721 = vld [vmem:[#allocation4 + $0xf18] sm:$0xff]
    %v722 = vld [vmem:[#allocation4 + $0xf20] sm:$0xff]
    %v723 = vld [vmem:[#allocation4 + $0xf28] sm:$0xff]
    %v724 = vld [vmem:[#allocation4 + $0xf30] sm:$0xff]
    %v725 = vld [vmem:[#allocation4 + $0xf38] sm:$0xff]
    %v726 = vld [vmem:[#allocation4 + $0xf40] sm:$0xff]
    %v727 = vld [vmem:[#allocation4 + $0xf48] sm:$0xff]
    %v728 = vld [vmem:[#allocation4 + $0xf50] sm:$0xff]
    %v729 = vld [vmem:[#allocation4 + $0xf58] sm:$0xff]
    %v730 = vld [vmem:[#allocation4 + $0xf60] sm:$0xff]
    %v731 = vld [vmem:[#allocation4 + $0xf68] sm:$0xff]
    %v732 = vld [vmem:[#allocation4 + $0xf70] sm:$0xff]
    %v733 = vld [vmem:[#allocation4 + $0xf78] sm:$0xff]
    %v734 = vld [vmem:[#allocation4 + $0xf80] sm:$0xff]
    %v735 = vld [vmem:[#allocation4 + $0xf88] sm:$0xff]
    %v736 = vld [vmem:[#allocation4 + $0xf90] sm:$0xff]
    %v737 = vld [vmem:[#allocation4 + $0xf98] sm:$0xff]
    %v738 = vld [vmem:[#allocation4 + $0xfa0] sm:$0xff]
    %v739 = vld [vmem:[#allocation4 + $0xfa8] sm:$0xff]
    %v740 = vld [vmem:[#allocation4 + $0xfb0] sm:$0xff]
    %v741 = vld [vmem:[#allocation4 + $0xfb8] sm:$0xff]
    %v742 = vld [vmem:[#allocation4 + $0xfc0] sm:$0xff]
    %v743 = vld [vmem:[#allocation4 + $0xfc8] sm:$0xff]
    %v744 = vld [vmem:[#allocation4 + $0xfd0] sm:$0xff]
    %v745 = vld [vmem:[#allocation4 + $0xfd8] sm:$0xff]
    %v746 = vld [vmem:[#allocation4 + $0xfe0] sm:$0xff]
    %v747 = vld [vmem:[#allocation4 + $0xfe8] sm:$0xff]
    %v748 = vld [vmem:[#allocation4 + $0xff0] sm:$0xff]
    %v749 = vld [vmem:[#allocation4 + $0xff8] sm:$0xff]
    %v1262 = vunpack.c.l.b16 %v238
    %v1263 = vunpack.c.h.b16 %v238
    %v1264 = vunpack.c.l.b16 %v239
    %v1265 = vunpack.c.h.b16 %v239
    %v1266 = vunpack.c.l.b16 %v240
    %v1267 = vunpack.c.h.b16 %v240
    %v1268 = vunpack.c.l.b16 %v241
    %v1269 = vunpack.c.h.b16 %v241
    %v1270 = vunpack.c.l.b16 %v242
    %v1271 = vunpack.c.h.b16 %v242
    %v1272 = vunpack.c.l.b16 %v243
    %v1273 = vunpack.c.h.b16 %v243
    %v1274 = vunpack.c.l.b16 %v244
    %v1275 = vunpack.c.h.b16 %v244
    %v1276 = vunpack.c.l.b16 %v245
    %v1277 = vunpack.c.h.b16 %v245
    %v1278 = vunpack.c.l.b16 %v246
    %v1279 = vunpack.c.h.b16 %v246
    %v1280 = vunpack.c.l.b16 %v247
    %v1281 = vunpack.c.h.b16 %v247
    %v1282 = vunpack.c.l.b16 %v248
    %v1283 = vunpack.c.h.b16 %v248
    %v1284 = vunpack.c.l.b16 %v249
    %v1285 = vunpack.c.h.b16 %v249
    %v1286 = vunpack.c.l.b16 %v250
    %v1287 = vunpack.c.h.b16 %v250
    %v1288 = vunpack.c.l.b16 %v251
    %v1289 = vunpack.c.h.b16 %v251
    %v1290 = vunpack.c.l.b16 %v252
    %v1291 = vunpack.c.h.b16 %v252
    %v1292 = vunpack.c.l.b16 %v253
    %v1293 = vunpack.c.h.b16 %v253
    %v1294 = vunpack.c.l.b16 %v254
    %v1295 = vunpack.c.h.b16 %v254
    %v1296 = vunpack.c.l.b16 %v255
    %v1297 = vunpack.c.h.b16 %v255
    %v1298 = vunpack.c.l.b16 %v256
    %v1299 = vunpack.c.h.b16 %v256
    %v1300 = vunpack.c.l.b16 %v257
    %v1301 = vunpack.c.h.b16 %v257
    %v1302 = vunpack.c.l.b16 %v258
    %v1303 = vunpack.c.h.b16 %v258
    %v1304 = vunpack.c.l.b16 %v259
    %v1305 = vunpack.c.h.b16 %v259
    %v1306 = vunpack.c.l.b16 %v260
    %v1307 = vunpack.c.h.b16 %v260
    %v1308 = vunpack.c.l.b16 %v261
    %v1309 = vunpack.c.h.b16 %v261
    %v1310 = vunpack.c.l.b16 %v262
    %v1311 = vunpack.c.h.b16 %v262
    %v1312 = vunpack.c.l.b16 %v263
    %v1313 = vunpack.c.h.b16 %v263
    %v1314 = vunpack.c.l.b16 %v264
    %v1315 = vunpack.c.h.b16 %v264
    %v1316 = vunpack.c.l.b16 %v265
    %v1317 = vunpack.c.h.b16 %v265
    %v1318 = vunpack.c.l.b16 %v266
    %v1319 = vunpack.c.h.b16 %v266
    %v1320 = vunpack.c.l.b16 %v267
    %v1321 = vunpack.c.h.b16 %v267
    %v1322 = vunpack.c.l.b16 %v268
    %v1323 = vunpack.c.h.b16 %v268
    %v1324 = vunpack.c.l.b16 %v269
    %v1325 = vunpack.c.h.b16 %v269
    %v1326 = vunpack.c.l.b16 %v270
    %v1327 = vunpack.c.h.b16 %v270
    %v1328 = vunpack.c.l.b16 %v271
    %v1329 = vunpack.c.h.b16 %v271
    %v1330 = vunpack.c.l.b16 %v272
    %v1331 = vunpack.c.h.b16 %v272
    %v1332 = vunpack.c.l.b16 %v273
    %v1333 = vunpack.c.h.b16 %v273
    %v1334 = vunpack.c.l.b16 %v274
    %v1335 = vunpack.c.h.b16 %v274
    %v1336 = vunpack.c.l.b16 %v275
    %v1337 = vunpack.c.h.b16 %v275
    %v1338 = vunpack.c.l.b16 %v276
    %v1339 = vunpack.c.h.b16 %v276
    %v1340 = vunpack.c.l.b16 %v277
    %v1341 = vunpack.c.h.b16 %v277
    %v1342 = vunpack.c.l.b16 %v278
    %v1343 = vunpack.c.h.b16 %v278
    %v1344 = vunpack.c.l.b16 %v279
    %v1345 = vunpack.c.h.b16 %v279
    %v1346 = vunpack.c.l.b16 %v280
    %v1347 = vunpack.c.h.b16 %v280
    %v1348 = vunpack.c.l.b16 %v281
    %v1349 = vunpack.c.h.b16 %v281
    %v1350 = vunpack.c.l.b16 %v282
    %v1351 = vunpack.c.h.b16 %v282
    %v1352 = vunpack.c.l.b16 %v283
    %v1353 = vunpack.c.h.b16 %v283
    %v1354 = vunpack.c.l.b16 %v284
    %v1355 = vunpack.c.h.b16 %v284
    %v1356 = vunpack.c.l.b16 %v285
    %v1357 = vunpack.c.h.b16 %v285
    %v1358 = vunpack.c.l.b16 %v286
    %v1359 = vunpack.c.h.b16 %v286
    %v1360 = vunpack.c.l.b16 %v287
    %v1361 = vunpack.c.h.b16 %v287
    %v1362 = vunpack.c.l.b16 %v288
    %v1363 = vunpack.c.h.b16 %v288
    %v1364 = vunpack.c.l.b16 %v289
    %v1365 = vunpack.c.h.b16 %v289
    %v1366 = vunpack.c.l.b16 %v290
    %v1367 = vunpack.c.h.b16 %v290
    %v1368 = vunpack.c.l.b16 %v291
    %v1369 = vunpack.c.h.b16 %v291
    %v1370 = vunpack.c.l.b16 %v292
    %v1371 = vunpack.c.h.b16 %v292
    %v1372 = vunpack.c.l.b16 %v293
    %v1373 = vunpack.c.h.b16 %v293
    %v1374 = vunpack.c.l.b16 %v294
    %v1375 = vunpack.c.h.b16 %v294
    %v1376 = vunpack.c.l.b16 %v295
    %v1377 = vunpack.c.h.b16 %v295
    %v1378 = vunpack.c.l.b16 %v296
    %v1379 = vunpack.c.h.b16 %v296
    %v1380 = vunpack.c.l.b16 %v297
    %v1381 = vunpack.c.h.b16 %v297
    %v1382 = vunpack.c.l.b16 %v298
    %v1383 = vunpack.c.h.b16 %v298
    %v1384 = vunpack.c.l.b16 %v299
    %v1385 = vunpack.c.h.b16 %v299
    %v1386 = vunpack.c.l.b16 %v300
    %v1387 = vunpack.c.h.b16 %v300
    %v1388 = vunpack.c.l.b16 %v301
    %v1389 = vunpack.c.h.b16 %v301
    %v1390 = vunpack.c.l.b16 %v302
    %v1391 = vunpack.c.h.b16 %v302
    %v1392 = vunpack.c.l.b16 %v303
    %v1393 = vunpack.c.h.b16 %v303
    %v1394 = vunpack.c.l.b16 %v304
    %v1395 = vunpack.c.h.b16 %v304
    %v1396 = vunpack.c.l.b16 %v305
    %v1397 = vunpack.c.h.b16 %v305
    %v1398 = vunpack.c.l.b16 %v306
    %v1399 = vunpack.c.h.b16 %v306
    %v1400 = vunpack.c.l.b16 %v307
    %v1401 = vunpack.c.h.b16 %v307
    %v1402 = vunpack.c.l.b16 %v308
    %v1403 = vunpack.c.h.b16 %v308
    %v1404 = vunpack.c.l.b16 %v309
    %v1405 = vunpack.c.h.b16 %v309
    %v1406 = vunpack.c.l.b16 %v310
    %v1407 = vunpack.c.h.b16 %v310
    %v1408 = vunpack.c.l.b16 %v311
    %v1409 = vunpack.c.h.b16 %v311
    %v1410 = vunpack.c.l.b16 %v312
    %v1411 = vunpack.c.h.b16 %v312
    %v1412 = vunpack.c.l.b16 %v313
    %v1413 = vunpack.c.h.b16 %v313
    %v1414 = vunpack.c.l.b16 %v314
    %v1415 = vunpack.c.h.b16 %v314
    %v1416 = vunpack.c.l.b16 %v315
    %v1417 = vunpack.c.h.b16 %v315
    %v1418 = vunpack.c.l.b16 %v316
    %v1419 = vunpack.c.h.b16 %v316
    %v1420 = vunpack.c.l.b16 %v317
    %v1421 = vunpack.c.h.b16 %v317
    %v1422 = vunpack.c.l.b16 %v318
    %v1423 = vunpack.c.h.b16 %v318
    %v1424 = vunpack.c.l.b16 %v319
    %v1425 = vunpack.c.h.b16 %v319
    %v1426 = vunpack.c.l.b16 %v320
    %v1427 = vunpack.c.h.b16 %v320
    %v1428 = vunpack.c.l.b16 %v321
    %v1429 = vunpack.c.h.b16 %v321
    %v1430 = vunpack.c.l.b16 %v322
    %v1431 = vunpack.c.h.b16 %v322
    %v1432 = vunpack.c.l.b16 %v323
    %v1433 = vunpack.c.h.b16 %v323
    %v1434 = vunpack.c.l.b16 %v324
    %v1435 = vunpack.c.h.b16 %v324
    %v1436 = vunpack.c.l.b16 %v325
    %v1437 = vunpack.c.h.b16 %v325
    %v1438 = vunpack.c.l.b16 %v326
    %v1439 = vunpack.c.h.b16 %v326
    %v1440 = vunpack.c.l.b16 %v327
    %v1441 = vunpack.c.h.b16 %v327
    %v1442 = vunpack.c.l.b16 %v328
    %v1443 = vunpack.c.h.b16 %v328
    %v1444 = vunpack.c.l.b16 %v329
    %v1445 = vunpack.c.h.b16 %v329
    %v1446 = vunpack.c.l.b16 %v330
    %v1447 = vunpack.c.h.b16 %v330
    %v1448 = vunpack.c.l.b16 %v331
    %v1449 = vunpack.c.h.b16 %v331
    %v1450 = vunpack.c.l.b16 %v332
    %v1451 = vunpack.c.h.b16 %v332
    %v1452 = vunpack.c.l.b16 %v333
    %v1453 = vunpack.c.h.b16 %v333
    %v1454 = vunpack.c.l.b16 %v334
    %v1455 = vunpack.c.h.b16 %v334
    %v1456 = vunpack.c.l.b16 %v335
    %v1457 = vunpack.c.h.b16 %v335
    %v1458 = vunpack.c.l.b16 %v336
    %v1459 = vunpack.c.h.b16 %v336
    %v1460 = vunpack.c.l.b16 %v337
    %v1461 = vunpack.c.h.b16 %v337
    %v1462 = vunpack.c.l.b16 %v338
    %v1463 = vunpack.c.h.b16 %v338
    %v1464 = vunpack.c.l.b16 %v339
    %v1465 = vunpack.c.h.b16 %v339
    %v1466 = vunpack.c.l.b16 %v340
    %v1467 = vunpack.c.h.b16 %v340
    %v1468 = vunpack.c.l.b16 %v341
    %v1469 = vunpack.c.h.b16 %v341
    %v1470 = vunpack.c.l.b16 %v342
    %v1471 = vunpack.c.h.b16 %v342
    %v1472 = vunpack.c.l.b16 %v343
    %v1473 = vunpack.c.h.b16 %v343
    %v1474 = vunpack.c.l.b16 %v344
    %v1475 = vunpack.c.h.b16 %v344
    %v1476 = vunpack.c.l.b16 %v345
    %v1477 = vunpack.c.h.b16 %v345
    %v1478 = vunpack.c.l.b16 %v346
    %v1479 = vunpack.c.h.b16 %v346
    %v1480 = vunpack.c.l.b16 %v347
    %v1481 = vunpack.c.h.b16 %v347
    %v1482 = vunpack.c.l.b16 %v348
    %v1483 = vunpack.c.h.b16 %v348
    %v1484 = vunpack.c.l.b16 %v349
    %v1485 = vunpack.c.h.b16 %v349
    %v1486 = vunpack.c.l.b16 %v350
    %v1487 = vunpack.c.h.b16 %v350
    %v1488 = vunpack.c.l.b16 %v351
    %v1489 = vunpack.c.h.b16 %v351
    %v1490 = vunpack.c.l.b16 %v352
    %v1491 = vunpack.c.h.b16 %v352
    %v1492 = vunpack.c.l.b16 %v353
    %v1493 = vunpack.c.h.b16 %v353
    %v1494 = vunpack.c.l.b16 %v354
    %v1495 = vunpack.c.h.b16 %v354
    %v1496 = vunpack.c.l.b16 %v355
    %v1497 = vunpack.c.h.b16 %v355
    %v1498 = vunpack.c.l.b16 %v356
    %v1499 = vunpack.c.h.b16 %v356
    %v1500 = vunpack.c.l.b16 %v357
    %v1501 = vunpack.c.h.b16 %v357
    %v1502 = vunpack.c.l.b16 %v358
    %v1503 = vunpack.c.h.b16 %v358
    %v1504 = vunpack.c.l.b16 %v359
    %v1505 = vunpack.c.h.b16 %v359
    %v1506 = vunpack.c.l.b16 %v360
    %v1507 = vunpack.c.h.b16 %v360
    %v1508 = vunpack.c.l.b16 %v361
    %v1509 = vunpack.c.h.b16 %v361
    %v1510 = vunpack.c.l.b16 %v362
    %v1511 = vunpack.c.h.b16 %v362
    %v1512 = vunpack.c.l.b16 %v363
    %v1513 = vunpack.c.h.b16 %v363
    %v1514 = vunpack.c.l.b16 %v364
    %v1515 = vunpack.c.h.b16 %v364
    %v1516 = vunpack.c.l.b16 %v365
    %v1517 = vunpack.c.h.b16 %v365
    %v1518 = vunpack.c.l.b16 %v366
    %v1519 = vunpack.c.h.b16 %v366
    %v1520 = vunpack.c.l.b16 %v367
    %v1521 = vunpack.c.h.b16 %v367
    %v1522 = vunpack.c.l.b16 %v368
    %v1523 = vunpack.c.h.b16 %v368
    %v1524 = vunpack.c.l.b16 %v369
    %v1525 = vunpack.c.h.b16 %v369
    %v1526 = vunpack.c.l.b16 %v370
    %v1527 = vunpack.c.h.b16 %v370
    %v1528 = vunpack.c.l.b16 %v371
    %v1529 = vunpack.c.h.b16 %v371
    %v1530 = vunpack.c.l.b16 %v372
    %v1531 = vunpack.c.h.b16 %v372
    %v1532 = vunpack.c.l.b16 %v373
    %v1533 = vunpack.c.h.b16 %v373
    %v1534 = vunpack.c.l.b16 %v374
    %v1535 = vunpack.c.h.b16 %v374
    %v1536 = vunpack.c.l.b16 %v375
    %v1537 = vunpack.c.h.b16 %v375
    %v1538 = vunpack.c.l.b16 %v376
    %v1539 = vunpack.c.h.b16 %v376
    %v1540 = vunpack.c.l.b16 %v377
    %v1541 = vunpack.c.h.b16 %v377
    %v1542 = vunpack.c.l.b16 %v378
    %v1543 = vunpack.c.h.b16 %v378
    %v1544 = vunpack.c.l.b16 %v379
    %v1545 = vunpack.c.h.b16 %v379
    %v1546 = vunpack.c.l.b16 %v380
    %v1547 = vunpack.c.h.b16 %v380
    %v1548 = vunpack.c.l.b16 %v381
    %v1549 = vunpack.c.h.b16 %v381
    %v1550 = vunpack.c.l.b16 %v382
    %v1551 = vunpack.c.h.b16 %v382
    %v1552 = vunpack.c.l.b16 %v383
    %v1553 = vunpack.c.h.b16 %v383
    %v1554 = vunpack.c.l.b16 %v384
    %v1555 = vunpack.c.h.b16 %v384
    %v1556 = vunpack.c.l.b16 %v385
    %v1557 = vunpack.c.h.b16 %v385
    %v1558 = vunpack.c.l.b16 %v386
    %v1559 = vunpack.c.h.b16 %v386
    %v1560 = vunpack.c.l.b16 %v387
    %v1561 = vunpack.c.h.b16 %v387
    %v1562 = vunpack.c.l.b16 %v388
    %v1563 = vunpack.c.h.b16 %v388
    %v1564 = vunpack.c.l.b16 %v389
    %v1565 = vunpack.c.h.b16 %v389
    %v1566 = vunpack.c.l.b16 %v390
    %v1567 = vunpack.c.h.b16 %v390
    %v1568 = vunpack.c.l.b16 %v391
    %v1569 = vunpack.c.h.b16 %v391
    %v1570 = vunpack.c.l.b16 %v392
    %v1571 = vunpack.c.h.b16 %v392
    %v1572 = vunpack.c.l.b16 %v393
    %v1573 = vunpack.c.h.b16 %v393
    %v1574 = vunpack.c.l.b16 %v394
    %v1575 = vunpack.c.h.b16 %v394
    %v1576 = vunpack.c.l.b16 %v395
    %v1577 = vunpack.c.h.b16 %v395
    %v1578 = vunpack.c.l.b16 %v396
    %v1579 = vunpack.c.h.b16 %v396
    %v1580 = vunpack.c.l.b16 %v397
    %v1581 = vunpack.c.h.b16 %v397
    %v1582 = vunpack.c.l.b16 %v398
    %v1583 = vunpack.c.h.b16 %v398
    %v1584 = vunpack.c.l.b16 %v399
    %v1585 = vunpack.c.h.b16 %v399
    %v1586 = vunpack.c.l.b16 %v400
    %v1587 = vunpack.c.h.b16 %v400
    %v1588 = vunpack.c.l.b16 %v401
    %v1589 = vunpack.c.h.b16 %v401
    %v1590 = vunpack.c.l.b16 %v402
    %v1591 = vunpack.c.h.b16 %v402
    %v1592 = vunpack.c.l.b16 %v403
    %v1593 = vunpack.c.h.b16 %v403
    %v1594 = vunpack.c.l.b16 %v404
    %v1595 = vunpack.c.h.b16 %v404
    %v1596 = vunpack.c.l.b16 %v405
    %v1597 = vunpack.c.h.b16 %v405
    %v1598 = vunpack.c.l.b16 %v406
    %v1599 = vunpack.c.h.b16 %v406
    %v1600 = vunpack.c.l.b16 %v407
    %v1601 = vunpack.c.h.b16 %v407
    %v1602 = vunpack.c.l.b16 %v408
    %v1603 = vunpack.c.h.b16 %v408
    %v1604 = vunpack.c.l.b16 %v409
    %v1605 = vunpack.c.h.b16 %v409
    %v1606 = vunpack.c.l.b16 %v410
    %v1607 = vunpack.c.h.b16 %v410
    %v1608 = vunpack.c.l.b16 %v411
    %v1609 = vunpack.c.h.b16 %v411
    %v1610 = vunpack.c.l.b16 %v412
    %v1611 = vunpack.c.h.b16 %v412
    %v1612 = vunpack.c.l.b16 %v413
    %v1613 = vunpack.c.h.b16 %v413
    %v1614 = vunpack.c.l.b16 %v414
    %v1615 = vunpack.c.h.b16 %v414
    %v1616 = vunpack.c.l.b16 %v415
    %v1617 = vunpack.c.h.b16 %v415
    %v1618 = vunpack.c.l.b16 %v416
    %v1619 = vunpack.c.h.b16 %v416
    %v1620 = vunpack.c.l.b16 %v417
    %v1621 = vunpack.c.h.b16 %v417
    %v1622 = vunpack.c.l.b16 %v418
    %v1623 = vunpack.c.h.b16 %v418
    %v1624 = vunpack.c.l.b16 %v419
    %v1625 = vunpack.c.h.b16 %v419
    %v1626 = vunpack.c.l.b16 %v420
    %v1627 = vunpack.c.h.b16 %v420
    %v1628 = vunpack.c.l.b16 %v421
    %v1629 = vunpack.c.h.b16 %v421
    %v1630 = vunpack.c.l.b16 %v422
    %v1631 = vunpack.c.h.b16 %v422
    %v1632 = vunpack.c.l.b16 %v423
    %v1633 = vunpack.c.h.b16 %v423
    %v1634 = vunpack.c.l.b16 %v424
    %v1635 = vunpack.c.h.b16 %v424
    %v1636 = vunpack.c.l.b16 %v425
    %v1637 = vunpack.c.h.b16 %v425
    %v1638 = vunpack.c.l.b16 %v426
    %v1639 = vunpack.c.h.b16 %v426
    %v1640 = vunpack.c.l.b16 %v427
    %v1641 = vunpack.c.h.b16 %v427
    %v1642 = vunpack.c.l.b16 %v428
    %v1643 = vunpack.c.h.b16 %v428
    %v1644 = vunpack.c.l.b16 %v429
    %v1645 = vunpack.c.h.b16 %v429
    %v1646 = vunpack.c.l.b16 %v430
    %v1647 = vunpack.c.h.b16 %v430
    %v1648 = vunpack.c.l.b16 %v431
    %v1649 = vunpack.c.h.b16 %v431
    %v1650 = vunpack.c.l.b16 %v432
    %v1651 = vunpack.c.h.b16 %v432
    %v1652 = vunpack.c.l.b16 %v433
    %v1653 = vunpack.c.h.b16 %v433
    %v1654 = vunpack.c.l.b16 %v434
    %v1655 = vunpack.c.h.b16 %v434
    %v1656 = vunpack.c.l.b16 %v435
    %v1657 = vunpack.c.h.b16 %v435
    %v1658 = vunpack.c.l.b16 %v436
    %v1659 = vunpack.c.h.b16 %v436
    %v1660 = vunpack.c.l.b16 %v437
    %v1661 = vunpack.c.h.b16 %v437
    %v1662 = vunpack.c.l.b16 %v438
    %v1663 = vunpack.c.h.b16 %v438
    %v1664 = vunpack.c.l.b16 %v439
    %v1665 = vunpack.c.h.b16 %v439
    %v1666 = vunpack.c.l.b16 %v440
    %v1667 = vunpack.c.h.b16 %v440
    %v1668 = vunpack.c.l.b16 %v441
    %v1669 = vunpack.c.h.b16 %v441
    %v1670 = vunpack.c.l.b16 %v442
    %v1671 = vunpack.c.h.b16 %v442
    %v1672 = vunpack.c.l.b16 %v443
    %v1673 = vunpack.c.h.b16 %v443
    %v1674 = vunpack.c.l.b16 %v444
    %v1675 = vunpack.c.h.b16 %v444
    %v1676 = vunpack.c.l.b16 %v445
    %v1677 = vunpack.c.h.b16 %v445
    %v1678 = vunpack.c.l.b16 %v446
    %v1679 = vunpack.c.h.b16 %v446
    %v1680 = vunpack.c.l.b16 %v447
    %v1681 = vunpack.c.h.b16 %v447
    %v1682 = vunpack.c.l.b16 %v448
    %v1683 = vunpack.c.h.b16 %v448
    %v1684 = vunpack.c.l.b16 %v449
    %v1685 = vunpack.c.h.b16 %v449
    %v1686 = vunpack.c.l.b16 %v450
    %v1687 = vunpack.c.h.b16 %v450
    %v1688 = vunpack.c.l.b16 %v451
    %v1689 = vunpack.c.h.b16 %v451
    %v1690 = vunpack.c.l.b16 %v452
    %v1691 = vunpack.c.h.b16 %v452
    %v1692 = vunpack.c.l.b16 %v453
    %v1693 = vunpack.c.h.b16 %v453
    %v1694 = vunpack.c.l.b16 %v454
    %v1695 = vunpack.c.h.b16 %v454
    %v1696 = vunpack.c.l.b16 %v455
    %v1697 = vunpack.c.h.b16 %v455
    %v1698 = vunpack.c.l.b16 %v456
    %v1699 = vunpack.c.h.b16 %v456
    %v1700 = vunpack.c.l.b16 %v457
    %v1701 = vunpack.c.h.b16 %v457
    %v1702 = vunpack.c.l.b16 %v458
    %v1703 = vunpack.c.h.b16 %v458
    %v1704 = vunpack.c.l.b16 %v459
    %v1705 = vunpack.c.h.b16 %v459
    %v1706 = vunpack.c.l.b16 %v460
    %v1707 = vunpack.c.h.b16 %v460
    %v1708 = vunpack.c.l.b16 %v461
    %v1709 = vunpack.c.h.b16 %v461
    %v1710 = vunpack.c.l.b16 %v462
    %v1711 = vunpack.c.h.b16 %v462
    %v1712 = vunpack.c.l.b16 %v463
    %v1713 = vunpack.c.h.b16 %v463
    %v1714 = vunpack.c.l.b16 %v464
    %v1715 = vunpack.c.h.b16 %v464
    %v1716 = vunpack.c.l.b16 %v465
    %v1717 = vunpack.c.h.b16 %v465
    %v1718 = vunpack.c.l.b16 %v466
    %v1719 = vunpack.c.h.b16 %v466
    %v1720 = vunpack.c.l.b16 %v467
    %v1721 = vunpack.c.h.b16 %v467
    %v1722 = vunpack.c.l.b16 %v468
    %v1723 = vunpack.c.h.b16 %v468
    %v1724 = vunpack.c.l.b16 %v469
    %v1725 = vunpack.c.h.b16 %v469
    %v1726 = vunpack.c.l.b16 %v470
    %v1727 = vunpack.c.h.b16 %v470
    %v1728 = vunpack.c.l.b16 %v471
    %v1729 = vunpack.c.h.b16 %v471
    %v1730 = vunpack.c.l.b16 %v472
    %v1731 = vunpack.c.h.b16 %v472
    %v1732 = vunpack.c.l.b16 %v473
    %v1733 = vunpack.c.h.b16 %v473
    %v1734 = vunpack.c.l.b16 %v474
    %v1735 = vunpack.c.h.b16 %v474
    %v1736 = vunpack.c.l.b16 %v475
    %v1737 = vunpack.c.h.b16 %v475
    %v1738 = vunpack.c.l.b16 %v476
    %v1739 = vunpack.c.h.b16 %v476
    %v1740 = vunpack.c.l.b16 %v477
    %v1741 = vunpack.c.h.b16 %v477
    %v1742 = vunpack.c.l.b16 %v478
    %v1743 = vunpack.c.h.b16 %v478
    %v1744 = vunpack.c.l.b16 %v479
    %v1745 = vunpack.c.h.b16 %v479
    %v1746 = vunpack.c.l.b16 %v480
    %v1747 = vunpack.c.h.b16 %v480
    %v1748 = vunpack.c.l.b16 %v481
    %v1749 = vunpack.c.h.b16 %v481
    %v1750 = vunpack.c.l.b16 %v482
    %v1751 = vunpack.c.h.b16 %v482
    %v1752 = vunpack.c.l.b16 %v483
    %v1753 = vunpack.c.h.b16 %v483
    %v1754 = vunpack.c.l.b16 %v484
    %v1755 = vunpack.c.h.b16 %v484
    %v1756 = vunpack.c.l.b16 %v485
    %v1757 = vunpack.c.h.b16 %v485
    %v1758 = vunpack.c.l.b16 %v486
    %v1759 = vunpack.c.h.b16 %v486
    %v1760 = vunpack.c.l.b16 %v487
    %v1761 = vunpack.c.h.b16 %v487
    %v1762 = vunpack.c.l.b16 %v488
    %v1763 = vunpack.c.h.b16 %v488
    %v1764 = vunpack.c.l.b16 %v489
    %v1765 = vunpack.c.h.b16 %v489
    %v1766 = vunpack.c.l.b16 %v490
    %v1767 = vunpack.c.h.b16 %v490
    %v1768 = vunpack.c.l.b16 %v491
    %v1769 = vunpack.c.h.b16 %v491
    %v1770 = vunpack.c.l.b16 %v492
    %v1771 = vunpack.c.h.b16 %v492
    %v1772 = vunpack.c.l.b16 %v493
    %v1773 = vunpack.c.h.b16 %v493
    %v1774 = vunpack.c.l.b16 %v494
    %v1775 = vunpack.c.h.b16 %v494
    %v1776 = vunpack.c.l.b16 %v495
    %v1777 = vunpack.c.h.b16 %v495
    %v1778 = vunpack.c.l.b16 %v496
    %v1779 = vunpack.c.h.b16 %v496
    %v1780 = vunpack.c.l.b16 %v497
    %v1781 = vunpack.c.h.b16 %v497
    %v1782 = vunpack.c.l.b16 %v498
    %v1783 = vunpack.c.h.b16 %v498
    %v1784 = vunpack.c.l.b16 %v499
    %v1785 = vunpack.c.h.b16 %v499
    %v1786 = vunpack.c.l.b16 %v500
    %v1787 = vunpack.c.h.b16 %v500
    %v1788 = vunpack.c.l.b16 %v501
    %v1789 = vunpack.c.h.b16 %v501
    %v1790 = vunpack.c.l.b16 %v502
    %v1791 = vunpack.c.h.b16 %v502
    %v1792 = vunpack.c.l.b16 %v503
    %v1793 = vunpack.c.h.b16 %v503
    %v1794 = vunpack.c.l.b16 %v504
    %v1795 = vunpack.c.h.b16 %v504
    %v1796 = vunpack.c.l.b16 %v505
    %v1797 = vunpack.c.h.b16 %v505
    %v1798 = vunpack.c.l.b16 %v506
    %v1799 = vunpack.c.h.b16 %v506
    %v1800 = vunpack.c.l.b16 %v507
    %v1801 = vunpack.c.h.b16 %v507
    %v1802 = vunpack.c.l.b16 %v508
    %v1803 = vunpack.c.h.b16 %v508
    %v1804 = vunpack.c.l.b16 %v509
    %v1805 = vunpack.c.h.b16 %v509
    %v1806 = vunpack.c.l.b16 %v510
    %v1807 = vunpack.c.h.b16 %v510
    %v1808 = vunpack.c.l.b16 %v511
    %v1809 = vunpack.c.h.b16 %v511
    %v1810 = vunpack.c.l.b16 %v512
    %v1811 = vunpack.c.h.b16 %v512
    %v1812 = vunpack.c.l.b16 %v513
    %v1813 = vunpack.c.h.b16 %v513
    %v1814 = vunpack.c.l.b16 %v514
    %v1815 = vunpack.c.h.b16 %v514
    %v1816 = vunpack.c.l.b16 %v515
    %v1817 = vunpack.c.h.b16 %v515
    %v1818 = vunpack.c.l.b16 %v516
    %v1819 = vunpack.c.h.b16 %v516
    %v1820 = vunpack.c.l.b16 %v517
    %v1821 = vunpack.c.h.b16 %v517
    %v1822 = vunpack.c.l.b16 %v518
    %v1823 = vunpack.c.h.b16 %v518
    %v1824 = vunpack.c.l.b16 %v519
    %v1825 = vunpack.c.h.b16 %v519
    %v1826 = vunpack.c.l.b16 %v520
    %v1827 = vunpack.c.h.b16 %v520
    %v1828 = vunpack.c.l.b16 %v521
    %v1829 = vunpack.c.h.b16 %v521
    %v1830 = vunpack.c.l.b16 %v522
    %v1831 = vunpack.c.h.b16 %v522
    %v1832 = vunpack.c.l.b16 %v523
    %v1833 = vunpack.c.h.b16 %v523
    %v1834 = vunpack.c.l.b16 %v524
    %v1835 = vunpack.c.h.b16 %v524
    %v1836 = vunpack.c.l.b16 %v525
    %v1837 = vunpack.c.h.b16 %v525
    %v1838 = vunpack.c.l.b16 %v526
    %v1839 = vunpack.c.h.b16 %v526
    %v1840 = vunpack.c.l.b16 %v527
    %v1841 = vunpack.c.h.b16 %v527
    %v1842 = vunpack.c.l.b16 %v528
    %v1843 = vunpack.c.h.b16 %v528
    %v1844 = vunpack.c.l.b16 %v529
    %v1845 = vunpack.c.h.b16 %v529
    %v1846 = vunpack.c.l.b16 %v530
    %v1847 = vunpack.c.h.b16 %v530
    %v1848 = vunpack.c.l.b16 %v531
    %v1849 = vunpack.c.h.b16 %v531
    %v1850 = vunpack.c.l.b16 %v532
    %v1851 = vunpack.c.h.b16 %v532
    %v1852 = vunpack.c.l.b16 %v533
    %v1853 = vunpack.c.h.b16 %v533
    %v1854 = vunpack.c.l.b16 %v534
    %v1855 = vunpack.c.h.b16 %v534
    %v1856 = vunpack.c.l.b16 %v535
    %v1857 = vunpack.c.h.b16 %v535
    %v1858 = vunpack.c.l.b16 %v536
    %v1859 = vunpack.c.h.b16 %v536
    %v1860 = vunpack.c.l.b16 %v537
    %v1861 = vunpack.c.h.b16 %v537
    %v1862 = vunpack.c.l.b16 %v538
    %v1863 = vunpack.c.h.b16 %v538
    %v1864 = vunpack.c.l.b16 %v539
    %v1865 = vunpack.c.h.b16 %v539
    %v1866 = vunpack.c.l.b16 %v540
    %v1867 = vunpack.c.h.b16 %v540
    %v1868 = vunpack.c.l.b16 %v541
    %v1869 = vunpack.c.h.b16 %v541
    %v1870 = vunpack.c.l.b16 %v542
    %v1871 = vunpack.c.h.b16 %v542
    %v1872 = vunpack.c.l.b16 %v543
    %v1873 = vunpack.c.h.b16 %v543
    %v1874 = vunpack.c.l.b16 %v544
    %v1875 = vunpack.c.h.b16 %v544
    %v1876 = vunpack.c.l.b16 %v545
    %v1877 = vunpack.c.h.b16 %v545
    %v1878 = vunpack.c.l.b16 %v546
    %v1879 = vunpack.c.h.b16 %v546
    %v1880 = vunpack.c.l.b16 %v547
    %v1881 = vunpack.c.h.b16 %v547
    %v1882 = vunpack.c.l.b16 %v548
    %v1883 = vunpack.c.h.b16 %v548
    %v1884 = vunpack.c.l.b16 %v549
    %v1885 = vunpack.c.h.b16 %v549
    %v1886 = vunpack.c.l.b16 %v550
    %v1887 = vunpack.c.h.b16 %v550
    %v1888 = vunpack.c.l.b16 %v551
    %v1889 = vunpack.c.h.b16 %v551
    %v1890 = vunpack.c.l.b16 %v552
    %v1891 = vunpack.c.h.b16 %v552
    %v1892 = vunpack.c.l.b16 %v553
    %v1893 = vunpack.c.h.b16 %v553
    %v1894 = vunpack.c.l.b16 %v554
    %v1895 = vunpack.c.h.b16 %v554
    %v1896 = vunpack.c.l.b16 %v555
    %v1897 = vunpack.c.h.b16 %v555
    %v1898 = vunpack.c.l.b16 %v556
    %v1899 = vunpack.c.h.b16 %v556
    %v1900 = vunpack.c.l.b16 %v557
    %v1901 = vunpack.c.h.b16 %v557
    %v1902 = vunpack.c.l.b16 %v558
    %v1903 = vunpack.c.h.b16 %v558
    %v1904 = vunpack.c.l.b16 %v559
    %v1905 = vunpack.c.h.b16 %v559
    %v1906 = vunpack.c.l.b16 %v560
    %v1907 = vunpack.c.h.b16 %v560
    %v1908 = vunpack.c.l.b16 %v561
    %v1909 = vunpack.c.h.b16 %v561
    %v1910 = vunpack.c.l.b16 %v562
    %v1911 = vunpack.c.h.b16 %v562
    %v1912 = vunpack.c.l.b16 %v563
    %v1913 = vunpack.c.h.b16 %v563
    %v1914 = vunpack.c.l.b16 %v564
    %v1915 = vunpack.c.h.b16 %v564
    %v1916 = vunpack.c.l.b16 %v565
    %v1917 = vunpack.c.h.b16 %v565
    %v1918 = vunpack.c.l.b16 %v566
    %v1919 = vunpack.c.h.b16 %v566
    %v1920 = vunpack.c.l.b16 %v567
    %v1921 = vunpack.c.h.b16 %v567
    %v1922 = vunpack.c.l.b16 %v568
    %v1923 = vunpack.c.h.b16 %v568
    %v1924 = vunpack.c.l.b16 %v569
    %v1925 = vunpack.c.h.b16 %v569
    %v1926 = vunpack.c.l.b16 %v570
    %v1927 = vunpack.c.h.b16 %v570
    %v1928 = vunpack.c.l.b16 %v571
    %v1929 = vunpack.c.h.b16 %v571
    %v1930 = vunpack.c.l.b16 %v572
    %v1931 = vunpack.c.h.b16 %v572
    %v1932 = vunpack.c.l.b16 %v573
    %v1933 = vunpack.c.h.b16 %v573
    %v1934 = vunpack.c.l.b16 %v574
    %v1935 = vunpack.c.h.b16 %v574
    %v1936 = vunpack.c.l.b16 %v575
    %v1937 = vunpack.c.h.b16 %v575
    %v1938 = vunpack.c.l.b16 %v576
    %v1939 = vunpack.c.h.b16 %v576
    %v1940 = vunpack.c.l.b16 %v577
    %v1941 = vunpack.c.h.b16 %v577
    %v1942 = vunpack.c.l.b16 %v578
    %v1943 = vunpack.c.h.b16 %v578
    %v1944 = vunpack.c.l.b16 %v579
    %v1945 = vunpack.c.h.b16 %v579
    %v1946 = vunpack.c.l.b16 %v580
    %v1947 = vunpack.c.h.b16 %v580
    %v1948 = vunpack.c.l.b16 %v581
    %v1949 = vunpack.c.h.b16 %v581
    %v1950 = vunpack.c.l.b16 %v582
    %v1951 = vunpack.c.h.b16 %v582
    %v1952 = vunpack.c.l.b16 %v583
    %v1953 = vunpack.c.h.b16 %v583
    %v1954 = vunpack.c.l.b16 %v584
    %v1955 = vunpack.c.h.b16 %v584
    %v1956 = vunpack.c.l.b16 %v585
    %v1957 = vunpack.c.h.b16 %v585
    %v1958 = vunpack.c.l.b16 %v586
    %v1959 = vunpack.c.h.b16 %v586
    %v1960 = vunpack.c.l.b16 %v587
    %v1961 = vunpack.c.h.b16 %v587
    %v1962 = vunpack.c.l.b16 %v588
    %v1963 = vunpack.c.h.b16 %v588
    %v1964 = vunpack.c.l.b16 %v589
    %v1965 = vunpack.c.h.b16 %v589
    %v1966 = vunpack.c.l.b16 %v590
    %v1967 = vunpack.c.h.b16 %v590
    %v1968 = vunpack.c.l.b16 %v591
    %v1969 = vunpack.c.h.b16 %v591
    %v1970 = vunpack.c.l.b16 %v592
    %v1971 = vunpack.c.h.b16 %v592
    %v1972 = vunpack.c.l.b16 %v593
    %v1973 = vunpack.c.h.b16 %v593
    %v1974 = vunpack.c.l.b16 %v594
    %v1975 = vunpack.c.h.b16 %v594
    %v1976 = vunpack.c.l.b16 %v595
    %v1977 = vunpack.c.h.b16 %v595
    %v1978 = vunpack.c.l.b16 %v596
    %v1979 = vunpack.c.h.b16 %v596
    %v1980 = vunpack.c.l.b16 %v597
    %v1981 = vunpack.c.h.b16 %v597
    %v1982 = vunpack.c.l.b16 %v598
    %v1983 = vunpack.c.h.b16 %v598
    %v1984 = vunpack.c.l.b16 %v599
    %v1985 = vunpack.c.h.b16 %v599
    %v1986 = vunpack.c.l.b16 %v600
    %v1987 = vunpack.c.h.b16 %v600
    %v1988 = vunpack.c.l.b16 %v601
    %v1989 = vunpack.c.h.b16 %v601
    %v1990 = vunpack.c.l.b16 %v602
    %v1991 = vunpack.c.h.b16 %v602
    %v1992 = vunpack.c.l.b16 %v603
    %v1993 = vunpack.c.h.b16 %v603
    %v1994 = vunpack.c.l.b16 %v604
    %v1995 = vunpack.c.h.b16 %v604
    %v1996 = vunpack.c.l.b16 %v605
    %v1997 = vunpack.c.h.b16 %v605
    %v1998 = vunpack.c.l.b16 %v606
    %v1999 = vunpack.c.h.b16 %v606
    %v2000 = vunpack.c.l.b16 %v607
    %v2001 = vunpack.c.h.b16 %v607
    %v2002 = vunpack.c.l.b16 %v608
    %v2003 = vunpack.c.h.b16 %v608
    %v2004 = vunpack.c.l.b16 %v609
    %v2005 = vunpack.c.h.b16 %v609
    %v2006 = vunpack.c.l.b16 %v610
    %v2007 = vunpack.c.h.b16 %v610
    %v2008 = vunpack.c.l.b16 %v611
    %v2009 = vunpack.c.h.b16 %v611
    %v2010 = vunpack.c.l.b16 %v612
    %v2011 = vunpack.c.h.b16 %v612
    %v2012 = vunpack.c.l.b16 %v613
    %v2013 = vunpack.c.h.b16 %v613
    %v2014 = vunpack.c.l.b16 %v614
    %v2015 = vunpack.c.h.b16 %v614
    %v2016 = vunpack.c.l.b16 %v615
    %v2017 = vunpack.c.h.b16 %v615
    %v2018 = vunpack.c.l.b16 %v616
    %v2019 = vunpack.c.h.b16 %v616
    %v2020 = vunpack.c.l.b16 %v617
    %v2021 = vunpack.c.h.b16 %v617
    %v2022 = vunpack.c.l.b16 %v618
    %v2023 = vunpack.c.h.b16 %v618
    %v2024 = vunpack.c.l.b16 %v619
    %v2025 = vunpack.c.h.b16 %v619
    %v2026 = vunpack.c.l.b16 %v620
    %v2027 = vunpack.c.h.b16 %v620
    %v2028 = vunpack.c.l.b16 %v621
    %v2029 = vunpack.c.h.b16 %v621
    %v2030 = vunpack.c.l.b16 %v622
    %v2031 = vunpack.c.h.b16 %v622
    %v2032 = vunpack.c.l.b16 %v623
    %v2033 = vunpack.c.h.b16 %v623
    %v2034 = vunpack.c.l.b16 %v624
    %v2035 = vunpack.c.h.b16 %v624
    %v2036 = vunpack.c.l.b16 %v625
    %v2037 = vunpack.c.h.b16 %v625
    %v2038 = vunpack.c.l.b16 %v626
    %v2039 = vunpack.c.h.b16 %v626
    %v2040 = vunpack.c.l.b16 %v627
    %v2041 = vunpack.c.h.b16 %v627
    %v2042 = vunpack.c.l.b16 %v628
    %v2043 = vunpack.c.h.b16 %v628
    %v2044 = vunpack.c.l.b16 %v629
    %v2045 = vunpack.c.h.b16 %v629
    %v2046 = vunpack.c.l.b16 %v630
    %v2047 = vunpack.c.h.b16 %v630
    %v2048 = vunpack.c.l.b16 %v631
    %v2049 = vunpack.c.h.b16 %v631
    %v2050 = vunpack.c.l.b16 %v632
    %v2051 = vunpack.c.h.b16 %v632
    %v2052 = vunpack.c.l.b16 %v633
    %v2053 = vunpack.c.h.b16 %v633
    %v2054 = vunpack.c.l.b16 %v634
    %v2055 = vunpack.c.h.b16 %v634
    %v2056 = vunpack.c.l.b16 %v635
    %v2057 = vunpack.c.h.b16 %v635
    %v2058 = vunpack.c.l.b16 %v636
    %v2059 = vunpack.c.h.b16 %v636
    %v2060 = vunpack.c.l.b16 %v637
    %v2061 = vunpack.c.h.b16 %v637
    %v2062 = vunpack.c.l.b16 %v638
    %v2063 = vunpack.c.h.b16 %v638
    %v2064 = vunpack.c.l.b16 %v639
    %v2065 = vunpack.c.h.b16 %v639
    %v2066 = vunpack.c.l.b16 %v640
    %v2067 = vunpack.c.h.b16 %v640
    %v2068 = vunpack.c.l.b16 %v641
    %v2069 = vunpack.c.h.b16 %v641
    %v2070 = vunpack.c.l.b16 %v642
    %v2071 = vunpack.c.h.b16 %v642
    %v2072 = vunpack.c.l.b16 %v643
    %v2073 = vunpack.c.h.b16 %v643
    %v2074 = vunpack.c.l.b16 %v644
    %v2075 = vunpack.c.h.b16 %v644
    %v2076 = vunpack.c.l.b16 %v645
    %v2077 = vunpack.c.h.b16 %v645
    %v2078 = vunpack.c.l.b16 %v646
    %v2079 = vunpack.c.h.b16 %v646
    %v2080 = vunpack.c.l.b16 %v647
    %v2081 = vunpack.c.h.b16 %v647
    %v2082 = vunpack.c.l.b16 %v648
    %v2083 = vunpack.c.h.b16 %v648
    %v2084 = vunpack.c.l.b16 %v649
    %v2085 = vunpack.c.h.b16 %v649
    %v2086 = vunpack.c.l.b16 %v650
    %v2087 = vunpack.c.h.b16 %v650
    %v2088 = vunpack.c.l.b16 %v651
    %v2089 = vunpack.c.h.b16 %v651
    %v2090 = vunpack.c.l.b16 %v652
    %v2091 = vunpack.c.h.b16 %v652
    %v2092 = vunpack.c.l.b16 %v653
    %v2093 = vunpack.c.h.b16 %v653
    %v2094 = vunpack.c.l.b16 %v654
    %v2095 = vunpack.c.h.b16 %v654
    %v2096 = vunpack.c.l.b16 %v655
    %v2097 = vunpack.c.h.b16 %v655
    %v2098 = vunpack.c.l.b16 %v656
    %v2099 = vunpack.c.h.b16 %v656
    %v2100 = vunpack.c.l.b16 %v657
    %v2101 = vunpack.c.h.b16 %v657
    %v2102 = vunpack.c.l.b16 %v658
    %v2103 = vunpack.c.h.b16 %v658
    %v2104 = vunpack.c.l.b16 %v659
    %v2105 = vunpack.c.h.b16 %v659
    %v2106 = vunpack.c.l.b16 %v660
    %v2107 = vunpack.c.h.b16 %v660
    %v2108 = vunpack.c.l.b16 %v661
    %v2109 = vunpack.c.h.b16 %v661
    %v2110 = vunpack.c.l.b16 %v662
    %v2111 = vunpack.c.h.b16 %v662
    %v2112 = vunpack.c.l.b16 %v663
    %v2113 = vunpack.c.h.b16 %v663
    %v2114 = vunpack.c.l.b16 %v664
    %v2115 = vunpack.c.h.b16 %v664
    %v2116 = vunpack.c.l.b16 %v665
    %v2117 = vunpack.c.h.b16 %v665
    %v2118 = vunpack.c.l.b16 %v666
    %v2119 = vunpack.c.h.b16 %v666
    %v2120 = vunpack.c.l.b16 %v667
    %v2121 = vunpack.c.h.b16 %v667
    %v2122 = vunpack.c.l.b16 %v668
    %v2123 = vunpack.c.h.b16 %v668
    %v2124 = vunpack.c.l.b16 %v669
    %v2125 = vunpack.c.h.b16 %v669
    %v2126 = vunpack.c.l.b16 %v670
    %v2127 = vunpack.c.h.b16 %v670
    %v2128 = vunpack.c.l.b16 %v671
    %v2129 = vunpack.c.h.b16 %v671
    %v2130 = vunpack.c.l.b16 %v672
    %v2131 = vunpack.c.h.b16 %v672
    %v2132 = vunpack.c.l.b16 %v673
    %v2133 = vunpack.c.h.b16 %v673
    %v2134 = vunpack.c.l.b16 %v674
    %v2135 = vunpack.c.h.b16 %v674
    %v2136 = vunpack.c.l.b16 %v675
    %v2137 = vunpack.c.h.b16 %v675
    %v2138 = vunpack.c.l.b16 %v676
    %v2139 = vunpack.c.h.b16 %v676
    %v2140 = vunpack.c.l.b16 %v677
    %v2141 = vunpack.c.h.b16 %v677
    %v2142 = vunpack.c.l.b16 %v678
    %v2143 = vunpack.c.h.b16 %v678
    %v2144 = vunpack.c.l.b16 %v679
    %v2145 = vunpack.c.h.b16 %v679
    %v2146 = vunpack.c.l.b16 %v680
    %v2147 = vunpack.c.h.b16 %v680
    %v2148 = vunpack.c.l.b16 %v681
    %v2149 = vunpack.c.h.b16 %v681
    %v2150 = vunpack.c.l.b16 %v682
    %v2151 = vunpack.c.h.b16 %v682
    %v2152 = vunpack.c.l.b16 %v683
    %v2153 = vunpack.c.h.b16 %v683
    %v2154 = vunpack.c.l.b16 %v684
    %v2155 = vunpack.c.h.b16 %v684
    %v2156 = vunpack.c.l.b16 %v685
    %v2157 = vunpack.c.h.b16 %v685
    %v2158 = vunpack.c.l.b16 %v686
    %v2159 = vunpack.c.h.b16 %v686
    %v2160 = vunpack.c.l.b16 %v687
    %v2161 = vunpack.c.h.b16 %v687
    %v2162 = vunpack.c.l.b16 %v688
    %v2163 = vunpack.c.h.b16 %v688
    %v2164 = vunpack.c.l.b16 %v689
    %v2165 = vunpack.c.h.b16 %v689
    %v2166 = vunpack.c.l.b16 %v690
    %v2167 = vunpack.c.h.b16 %v690
    %v2168 = vunpack.c.l.b16 %v691
    %v2169 = vunpack.c.h.b16 %v691
    %v2170 = vunpack.c.l.b16 %v692
    %v2171 = vunpack.c.h.b16 %v692
    %v2172 = vunpack.c.l.b16 %v693
    %v2173 = vunpack.c.h.b16 %v693
    %v2174 = vunpack.c.l.b16 %v694
    %v2175 = vunpack.c.h.b16 %v694
    %v2176 = vunpack.c.l.b16 %v695
    %v2177 = vunpack.c.h.b16 %v695
    %v2178 = vunpack.c.l.b16 %v696
    %v2179 = vunpack.c.h.b16 %v696
    %v2180 = vunpack.c.l.b16 %v697
    %v2181 = vunpack.c.h.b16 %v697
    %v2182 = vunpack.c.l.b16 %v698
    %v2183 = vunpack.c.h.b16 %v698
    %v2184 = vunpack.c.l.b16 %v699
    %v2185 = vunpack.c.h.b16 %v699
    %v2186 = vunpack.c.l.b16 %v700
    %v2187 = vunpack.c.h.b16 %v700
    %v2188 = vunpack.c.l.b16 %v701
    %v2189 = vunpack.c.h.b16 %v701
    %v2190 = vunpack.c.l.b16 %v702
    %v2191 = vunpack.c.h.b16 %v702
    %v2192 = vunpack.c.l.b16 %v703
    %v2193 = vunpack.c.h.b16 %v703
    %v2194 = vunpack.c.l.b16 %v704
    %v2195 = vunpack.c.h.b16 %v704
    %v2196 = vunpack.c.l.b16 %v705
    %v2197 = vunpack.c.h.b16 %v705
    %v2198 = vunpack.c.l.b16 %v706
    %v2199 = vunpack.c.h.b16 %v706
    %v2200 = vunpack.c.l.b16 %v707
    %v2201 = vunpack.c.h.b16 %v707
    %v2202 = vunpack.c.l.b16 %v708
    %v2203 = vunpack.c.h.b16 %v708
    %v2204 = vunpack.c.l.b16 %v709
    %v2205 = vunpack.c.h.b16 %v709
    %v2206 = vunpack.c.l.b16 %v710
    %v2207 = vunpack.c.h.b16 %v710
    %v2208 = vunpack.c.l.b16 %v711
    %v2209 = vunpack.c.h.b16 %v711
    %v2210 = vunpack.c.l.b16 %v712
    %v2211 = vunpack.c.h.b16 %v712
    %v2212 = vunpack.c.l.b16 %v713
    %v2213 = vunpack.c.h.b16 %v713
    %v2214 = vunpack.c.l.b16 %v714
    %v2215 = vunpack.c.h.b16 %v714
    %v2216 = vunpack.c.l.b16 %v715
    %v2217 = vunpack.c.h.b16 %v715
    %v2218 = vunpack.c.l.b16 %v716
    %v2219 = vunpack.c.h.b16 %v716
    %v2220 = vunpack.c.l.b16 %v717
    %v2221 = vunpack.c.h.b16 %v717
    %v2222 = vunpack.c.l.b16 %v718
    %v2223 = vunpack.c.h.b16 %v718
    %v2224 = vunpack.c.l.b16 %v719
    %v2225 = vunpack.c.h.b16 %v719
    %v2226 = vunpack.c.l.b16 %v720
    %v2227 = vunpack.c.h.b16 %v720
    %v2228 = vunpack.c.l.b16 %v721
    %v2229 = vunpack.c.h.b16 %v721
    %v2230 = vunpack.c.l.b16 %v722
    %v2231 = vunpack.c.h.b16 %v722
    %v2232 = vunpack.c.l.b16 %v723
    %v2233 = vunpack.c.h.b16 %v723
    %v2234 = vunpack.c.l.b16 %v724
    %v2235 = vunpack.c.h.b16 %v724
    %v2236 = vunpack.c.l.b16 %v725
    %v2237 = vunpack.c.h.b16 %v725
    %v2238 = vunpack.c.l.b16 %v726
    %v2239 = vunpack.c.h.b16 %v726
    %v2240 = vunpack.c.l.b16 %v727
    %v2241 = vunpack.c.h.b16 %v727
    %v2242 = vunpack.c.l.b16 %v728
    %v2243 = vunpack.c.h.b16 %v728
    %v2244 = vunpack.c.l.b16 %v729
    %v2245 = vunpack.c.h.b16 %v729
    %v2246 = vunpack.c.l.b16 %v730
    %v2247 = vunpack.c.h.b16 %v730
    %v2248 = vunpack.c.l.b16 %v731
    %v2249 = vunpack.c.h.b16 %v731
    %v2250 = vunpack.c.l.b16 %v732
    %v2251 = vunpack.c.h.b16 %v732
    %v2252 = vunpack.c.l.b16 %v733
    %v2253 = vunpack.c.h.b16 %v733
    %v2254 = vunpack.c.l.b16 %v734
    %v2255 = vunpack.c.h.b16 %v734
    %v2256 = vunpack.c.l.b16 %v735
    %v2257 = vunpack.c.h.b16 %v735
    %v2258 = vunpack.c.l.b16 %v736
    %v2259 = vunpack.c.h.b16 %v736
    %v2260 = vunpack.c.l.b16 %v737
    %v2261 = vunpack.c.h.b16 %v737
    %v2262 = vunpack.c.l.b16 %v738
    %v2263 = vunpack.c.h.b16 %v738
    %v2264 = vunpack.c.l.b16 %v739
    %v2265 = vunpack.c.h.b16 %v739
    %v2266 = vunpack.c.l.b16 %v740
    %v2267 = vunpack.c.h.b16 %v740
    %v2268 = vunpack.c.l.b16 %v741
    %v2269 = vunpack.c.h.b16 %v741
    %v2270 = vunpack.c.l.b16 %v742
    %v2271 = vunpack.c.h.b16 %v742
    %v2272 = vunpack.c.l.b16 %v743
    %v2273 = vunpack.c.h.b16 %v743
    %v2274 = vunpack.c.l.b16 %v744
    %v2275 = vunpack.c.h.b16 %v744
    %v2276 = vunpack.c.l.b16 %v745
    %v2277 = vunpack.c.h.b16 %v745
    %v2278 = vunpack.c.l.b16 %v746
    %v2279 = vunpack.c.h.b16 %v746
    %v2280 = vunpack.c.l.b16 %v747
    %v2281 = vunpack.c.h.b16 %v747
    %v2282 = vunpack.c.l.b16 %v748
    %v2283 = vunpack.c.h.b16 %v748
    %v2284 = vunpack.c.l.b16 %v749
    %v2285 = vunpack.c.h.b16 %v749
    %v2286 = vpack.c.b16 %v1270, %v1262
    %v2287 = vpack.c.b16 %v1271, %v1263
    %v2288 = vpack.c.b16 %v1272, %v1264
    %v2289 = vpack.c.b16 %v1273, %v1265
    %v2290 = vpack.c.b16 %v1274, %v1266
    %v2291 = vpack.c.b16 %v1275, %v1267
    %v2292 = vpack.c.b16 %v1276, %v1268
    %v2293 = vpack.c.b16 %v1277, %v1269
    %v2294 = vpack.c.b16 %v1286, %v1278
    %v2295 = vpack.c.b16 %v1287, %v1279
    %v2296 = vpack.c.b16 %v1288, %v1280
    %v2297 = vpack.c.b16 %v1289, %v1281
    %v2298 = vpack.c.b16 %v1290, %v1282
    %v2299 = vpack.c.b16 %v1291, %v1283
    %v2300 = vpack.c.b16 %v1292, %v1284
    %v2301 = vpack.c.b16 %v1293, %v1285
    %v2302 = vpack.c.b16 %v1302, %v1294
    %v2303 = vpack.c.b16 %v1303, %v1295
    %v2304 = vpack.c.b16 %v1304, %v1296
    %v2305 = vpack.c.b16 %v1305, %v1297
    %v2306 = vpack.c.b16 %v1306, %v1298
    %v2307 = vpack.c.b16 %v1307, %v1299
    %v2308 = vpack.c.b16 %v1308, %v1300
    %v2309 = vpack.c.b16 %v1309, %v1301
    %v2310 = vpack.c.b16 %v1318, %v1310
    %v2311 = vpack.c.b16 %v1319, %v1311
    %v2312 = vpack.c.b16 %v1320, %v1312
    %v2313 = vpack.c.b16 %v1321, %v1313
    %v2314 = vpack.c.b16 %v1322, %v1314
    %v2315 = vpack.c.b16 %v1323, %v1315
    %v2316 = vpack.c.b16 %v1324, %v1316
    %v2317 = vpack.c.b16 %v1325, %v1317
    %v2318 = vpack.c.b16 %v1334, %v1326
    %v2319 = vpack.c.b16 %v1335, %v1327
    %v2320 = vpack.c.b16 %v1336, %v1328
    %v2321 = vpack.c.b16 %v1337, %v1329
    %v2322 = vpack.c.b16 %v1338, %v1330
    %v2323 = vpack.c.b16 %v1339, %v1331
    %v2324 = vpack.c.b16 %v1340, %v1332
    %v2325 = vpack.c.b16 %v1341, %v1333
    %v2326 = vpack.c.b16 %v1350, %v1342
    %v2327 = vpack.c.b16 %v1351, %v1343
    %v2328 = vpack.c.b16 %v1352, %v1344
    %v2329 = vpack.c.b16 %v1353, %v1345
    %v2330 = vpack.c.b16 %v1354, %v1346
    %v2331 = vpack.c.b16 %v1355, %v1347
    %v2332 = vpack.c.b16 %v1356, %v1348
    %v2333 = vpack.c.b16 %v1357, %v1349
    %v2334 = vpack.c.b16 %v1366, %v1358
    %v2335 = vpack.c.b16 %v1367, %v1359
    %v2336 = vpack.c.b16 %v1368, %v1360
    %v2337 = vpack.c.b16 %v1369, %v1361
    %v2338 = vpack.c.b16 %v1370, %v1362
    %v2339 = vpack.c.b16 %v1371, %v1363
    %v2340 = vpack.c.b16 %v1372, %v1364
    %v2341 = vpack.c.b16 %v1373, %v1365
    %v2342 = vpack.c.b16 %v1382, %v1374
    %v2343 = vpack.c.b16 %v1383, %v1375
    %v2344 = vpack.c.b16 %v1384, %v1376
    %v2345 = vpack.c.b16 %v1385, %v1377
    %v2346 = vpack.c.b16 %v1386, %v1378
    %v2347 = vpack.c.b16 %v1387, %v1379
    %v2348 = vpack.c.b16 %v1388, %v1380
    %v2349 = vpack.c.b16 %v1389, %v1381
    %v2350 = vpack.c.b16 %v1398, %v1390
    %v2351 = vpack.c.b16 %v1399, %v1391
    %v2352 = vpack.c.b16 %v1400, %v1392
    %v2353 = vpack.c.b16 %v1401, %v1393
    %v2354 = vpack.c.b16 %v1402, %v1394
    %v2355 = vpack.c.b16 %v1403, %v1395
    %v2356 = vpack.c.b16 %v1404, %v1396
    %v2357 = vpack.c.b16 %v1405, %v1397
    %v2358 = vpack.c.b16 %v1414, %v1406
    %v2359 = vpack.c.b16 %v1415, %v1407
    %v2360 = vpack.c.b16 %v1416, %v1408
    %v2361 = vpack.c.b16 %v1417, %v1409
    %v2362 = vpack.c.b16 %v1418, %v1410
    %v2363 = vpack.c.b16 %v1419, %v1411
    %v2364 = vpack.c.b16 %v1420, %v1412
    %v2365 = vpack.c.b16 %v1421, %v1413
    %v2366 = vpack.c.b16 %v1430, %v1422
    %v2367 = vpack.c.b16 %v1431, %v1423
    %v2368 = vpack.c.b16 %v1432, %v1424
    %v2369 = vpack.c.b16 %v1433, %v1425
    %v2370 = vpack.c.b16 %v1434, %v1426
    %v2371 = vpack.c.b16 %v1435, %v1427
    %v2372 = vpack.c.b16 %v1436, %v1428
    %v2373 = vpack.c.b16 %v1437, %v1429
    %v2374 = vpack.c.b16 %v1446, %v1438
    %v2375 = vpack.c.b16 %v1447, %v1439
    %v2376 = vpack.c.b16 %v1448, %v1440
    %v2377 = vpack.c.b16 %v1449, %v1441
    %v2378 = vpack.c.b16 %v1450, %v1442
    %v2379 = vpack.c.b16 %v1451, %v1443
    %v2380 = vpack.c.b16 %v1452, %v1444
    %v2381 = vpack.c.b16 %v1453, %v1445
    %v2382 = vpack.c.b16 %v1462, %v1454
    %v2383 = vpack.c.b16 %v1463, %v1455
    %v2384 = vpack.c.b16 %v1464, %v1456
    %v2385 = vpack.c.b16 %v1465, %v1457
    %v2386 = vpack.c.b16 %v1466, %v1458
    %v2387 = vpack.c.b16 %v1467, %v1459
    %v2388 = vpack.c.b16 %v1468, %v1460
    %v2389 = vpack.c.b16 %v1469, %v1461
    %v2390 = vpack.c.b16 %v1478, %v1470
    %v2391 = vpack.c.b16 %v1479, %v1471
    %v2392 = vpack.c.b16 %v1480, %v1472
    %v2393 = vpack.c.b16 %v1481, %v1473
    %v2394 = vpack.c.b16 %v1482, %v1474
    %v2395 = vpack.c.b16 %v1483, %v1475
    %v2396 = vpack.c.b16 %v1484, %v1476
    %v2397 = vpack.c.b16 %v1485, %v1477
    %v2398 = vpack.c.b16 %v1494, %v1486
    %v2399 = vpack.c.b16 %v1495, %v1487
    %v2400 = vpack.c.b16 %v1496, %v1488
    %v2401 = vpack.c.b16 %v1497, %v1489
    %v2402 = vpack.c.b16 %v1498, %v1490
    %v2403 = vpack.c.b16 %v1499, %v1491
    %v2404 = vpack.c.b16 %v1500, %v1492
    %v2405 = vpack.c.b16 %v1501, %v1493
    %v2406 = vpack.c.b16 %v1510, %v1502
    %v2407 = vpack.c.b16 %v1511, %v1503
    %v2408 = vpack.c.b16 %v1512, %v1504
    %v2409 = vpack.c.b16 %v1513, %v1505
    %v2410 = vpack.c.b16 %v1514, %v1506
    %v2411 = vpack.c.b16 %v1515, %v1507
    %v2412 = vpack.c.b16 %v1516, %v1508
    %v2413 = vpack.c.b16 %v1517, %v1509
    %v2414 = vpack.c.b16 %v1526, %v1518
    %v2415 = vpack.c.b16 %v1527, %v1519
    %v2416 = vpack.c.b16 %v1528, %v1520
    %v2417 = vpack.c.b16 %v1529, %v1521
    %v2418 = vpack.c.b16 %v1530, %v1522
    %v2419 = vpack.c.b16 %v1531, %v1523
    %v2420 = vpack.c.b16 %v1532, %v1524
    %v2421 = vpack.c.b16 %v1533, %v1525
    %v2422 = vpack.c.b16 %v1542, %v1534
    %v2423 = vpack.c.b16 %v1543, %v1535
    %v2424 = vpack.c.b16 %v1544, %v1536
    %v2425 = vpack.c.b16 %v1545, %v1537
    %v2426 = vpack.c.b16 %v1546, %v1538
    %v2427 = vpack.c.b16 %v1547, %v1539
    %v2428 = vpack.c.b16 %v1548, %v1540
    %v2429 = vpack.c.b16 %v1549, %v1541
    %v2430 = vpack.c.b16 %v1558, %v1550
    %v2431 = vpack.c.b16 %v1559, %v1551
    %v2432 = vpack.c.b16 %v1560, %v1552
    %v2433 = vpack.c.b16 %v1561, %v1553
    %v2434 = vpack.c.b16 %v1562, %v1554
    %v2435 = vpack.c.b16 %v1563, %v1555
    %v2436 = vpack.c.b16 %v1564, %v1556
    %v2437 = vpack.c.b16 %v1565, %v1557
    %v2438 = vpack.c.b16 %v1574, %v1566
    %v2439 = vpack.c.b16 %v1575, %v1567
    %v2440 = vpack.c.b16 %v1576, %v1568
    %v2441 = vpack.c.b16 %v1577, %v1569
    %v2442 = vpack.c.b16 %v1578, %v1570
    %v2443 = vpack.c.b16 %v1579, %v1571
    %v2444 = vpack.c.b16 %v1580, %v1572
    %v2445 = vpack.c.b16 %v1581, %v1573
    %v2446 = vpack.c.b16 %v1590, %v1582
    %v2447 = vpack.c.b16 %v1591, %v1583
    %v2448 = vpack.c.b16 %v1592, %v1584
    %v2449 = vpack.c.b16 %v1593, %v1585
    %v2450 = vpack.c.b16 %v1594, %v1586
    %v2451 = vpack.c.b16 %v1595, %v1587
    %v2452 = vpack.c.b16 %v1596, %v1588
    %v2453 = vpack.c.b16 %v1597, %v1589
    %v2454 = vpack.c.b16 %v1606, %v1598
    %v2455 = vpack.c.b16 %v1607, %v1599
    %v2456 = vpack.c.b16 %v1608, %v1600
    %v2457 = vpack.c.b16 %v1609, %v1601
    %v2458 = vpack.c.b16 %v1610, %v1602
    %v2459 = vpack.c.b16 %v1611, %v1603
    %v2460 = vpack.c.b16 %v1612, %v1604
    %v2461 = vpack.c.b16 %v1613, %v1605
    %v2462 = vpack.c.b16 %v1622, %v1614
    %v2463 = vpack.c.b16 %v1623, %v1615
    %v2464 = vpack.c.b16 %v1624, %v1616
    %v2465 = vpack.c.b16 %v1625, %v1617
    %v2466 = vpack.c.b16 %v1626, %v1618
    %v2467 = vpack.c.b16 %v1627, %v1619
    %v2468 = vpack.c.b16 %v1628, %v1620
    %v2469 = vpack.c.b16 %v1629, %v1621
    %v2470 = vpack.c.b16 %v1638, %v1630
    %v2471 = vpack.c.b16 %v1639, %v1631
    %v2472 = vpack.c.b16 %v1640, %v1632
    %v2473 = vpack.c.b16 %v1641, %v1633
    %v2474 = vpack.c.b16 %v1642, %v1634
    %v2475 = vpack.c.b16 %v1643, %v1635
    %v2476 = vpack.c.b16 %v1644, %v1636
    %v2477 = vpack.c.b16 %v1645, %v1637
    %v2478 = vpack.c.b16 %v1654, %v1646
    %v2479 = vpack.c.b16 %v1655, %v1647
    %v2480 = vpack.c.b16 %v1656, %v1648
    %v2481 = vpack.c.b16 %v1657, %v1649
    %v2482 = vpack.c.b16 %v1658, %v1650
    %v2483 = vpack.c.b16 %v1659, %v1651
    %v2484 = vpack.c.b16 %v1660, %v1652
    %v2485 = vpack.c.b16 %v1661, %v1653
    %v2486 = vpack.c.b16 %v1670, %v1662
    %v2487 = vpack.c.b16 %v1671, %v1663
    %v2488 = vpack.c.b16 %v1672, %v1664
    %v2489 = vpack.c.b16 %v1673, %v1665
    %v2490 = vpack.c.b16 %v1674, %v1666
    %v2491 = vpack.c.b16 %v1675, %v1667
    %v2492 = vpack.c.b16 %v1676, %v1668
    %v2493 = vpack.c.b16 %v1677, %v1669
    %v2494 = vpack.c.b16 %v1686, %v1678
    %v2495 = vpack.c.b16 %v1687, %v1679
    %v2496 = vpack.c.b16 %v1688, %v1680
    %v2497 = vpack.c.b16 %v1689, %v1681
    %v2498 = vpack.c.b16 %v1690, %v1682
    %v2499 = vpack.c.b16 %v1691, %v1683
    %v2500 = vpack.c.b16 %v1692, %v1684
    %v2501 = vpack.c.b16 %v1693, %v1685
    %v2502 = vpack.c.b16 %v1702, %v1694
    %v2503 = vpack.c.b16 %v1703, %v1695
    %v2504 = vpack.c.b16 %v1704, %v1696
    %v2505 = vpack.c.b16 %v1705, %v1697
    %v2506 = vpack.c.b16 %v1706, %v1698
    %v2507 = vpack.c.b16 %v1707, %v1699
    %v2508 = vpack.c.b16 %v1708, %v1700
    %v2509 = vpack.c.b16 %v1709, %v1701
    %v2510 = vpack.c.b16 %v1718, %v1710
    %v2511 = vpack.c.b16 %v1719, %v1711
    %v2512 = vpack.c.b16 %v1720, %v1712
    %v2513 = vpack.c.b16 %v1721, %v1713
    %v2514 = vpack.c.b16 %v1722, %v1714
    %v2515 = vpack.c.b16 %v1723, %v1715
    %v2516 = vpack.c.b16 %v1724, %v1716
    %v2517 = vpack.c.b16 %v1725, %v1717
    %v2518 = vpack.c.b16 %v1734, %v1726
    %v2519 = vpack.c.b16 %v1735, %v1727
    %v2520 = vpack.c.b16 %v1736, %v1728
    %v2521 = vpack.c.b16 %v1737, %v1729
    %v2522 = vpack.c.b16 %v1738, %v1730
    %v2523 = vpack.c.b16 %v1739, %v1731
    %v2524 = vpack.c.b16 %v1740, %v1732
    %v2525 = vpack.c.b16 %v1741, %v1733
    %v2526 = vpack.c.b16 %v1750, %v1742
    %v2527 = vpack.c.b16 %v1751, %v1743
    %v2528 = vpack.c.b16 %v1752, %v1744
    %v2529 = vpack.c.b16 %v1753, %v1745
    %v2530 = vpack.c.b16 %v1754, %v1746
    %v2531 = vpack.c.b16 %v1755, %v1747
    %v2532 = vpack.c.b16 %v1756, %v1748
    %v2533 = vpack.c.b16 %v1757, %v1749
    %v2534 = vpack.c.b16 %v1766, %v1758
    %v2535 = vpack.c.b16 %v1767, %v1759
    %v2536 = vpack.c.b16 %v1768, %v1760
    %v2537 = vpack.c.b16 %v1769, %v1761
    %v2538 = vpack.c.b16 %v1770, %v1762
    %v2539 = vpack.c.b16 %v1771, %v1763
    %v2540 = vpack.c.b16 %v1772, %v1764
    %v2541 = vpack.c.b16 %v1773, %v1765
    %v2542 = vpack.c.b16 %v1782, %v1774
    %v2543 = vpack.c.b16 %v1783, %v1775
    %v2544 = vpack.c.b16 %v1784, %v1776
    %v2545 = vpack.c.b16 %v1785, %v1777
    %v2546 = vpack.c.b16 %v1786, %v1778
    %v2547 = vpack.c.b16 %v1787, %v1779
    %v2548 = vpack.c.b16 %v1788, %v1780
    %v2549 = vpack.c.b16 %v1789, %v1781
    %v2550 = vpack.c.b16 %v1798, %v1790
    %v2551 = vpack.c.b16 %v1799, %v1791
    %v2552 = vpack.c.b16 %v1800, %v1792
    %v2553 = vpack.c.b16 %v1801, %v1793
    %v2554 = vpack.c.b16 %v1802, %v1794
    %v2555 = vpack.c.b16 %v1803, %v1795
    %v2556 = vpack.c.b16 %v1804, %v1796
    %v2557 = vpack.c.b16 %v1805, %v1797
    %v2558 = vpack.c.b16 %v1814, %v1806
    %v2559 = vpack.c.b16 %v1815, %v1807
    %v2560 = vpack.c.b16 %v1816, %v1808
    %v2561 = vpack.c.b16 %v1817, %v1809
    %v2562 = vpack.c.b16 %v1818, %v1810
    %v2563 = vpack.c.b16 %v1819, %v1811
    %v2564 = vpack.c.b16 %v1820, %v1812
    %v2565 = vpack.c.b16 %v1821, %v1813
    %v2566 = vpack.c.b16 %v1830, %v1822
    %v2567 = vpack.c.b16 %v1831, %v1823
    %v2568 = vpack.c.b16 %v1832, %v1824
    %v2569 = vpack.c.b16 %v1833, %v1825
    %v2570 = vpack.c.b16 %v1834, %v1826
    %v2571 = vpack.c.b16 %v1835, %v1827
    %v2572 = vpack.c.b16 %v1836, %v1828
    %v2573 = vpack.c.b16 %v1837, %v1829
    %v2574 = vpack.c.b16 %v1846, %v1838
    %v2575 = vpack.c.b16 %v1847, %v1839
    %v2576 = vpack.c.b16 %v1848, %v1840
    %v2577 = vpack.c.b16 %v1849, %v1841
    %v2578 = vpack.c.b16 %v1850, %v1842
    %v2579 = vpack.c.b16 %v1851, %v1843
    %v2580 = vpack.c.b16 %v1852, %v1844
    %v2581 = vpack.c.b16 %v1853, %v1845
    %v2582 = vpack.c.b16 %v1862, %v1854
    %v2583 = vpack.c.b16 %v1863, %v1855
    %v2584 = vpack.c.b16 %v1864, %v1856
    %v2585 = vpack.c.b16 %v1865, %v1857
    %v2586 = vpack.c.b16 %v1866, %v1858
    %v2587 = vpack.c.b16 %v1867, %v1859
    %v2588 = vpack.c.b16 %v1868, %v1860
    %v2589 = vpack.c.b16 %v1869, %v1861
    %v2590 = vpack.c.b16 %v1878, %v1870
    %v2591 = vpack.c.b16 %v1879, %v1871
    %v2592 = vpack.c.b16 %v1880, %v1872
    %v2593 = vpack.c.b16 %v1881, %v1873
    %v2594 = vpack.c.b16 %v1882, %v1874
    %v2595 = vpack.c.b16 %v1883, %v1875
    %v2596 = vpack.c.b16 %v1884, %v1876
    %v2597 = vpack.c.b16 %v1885, %v1877
    %v2598 = vpack.c.b16 %v1894, %v1886
    %v2599 = vpack.c.b16 %v1895, %v1887
    %v2600 = vpack.c.b16 %v1896, %v1888
    %v2601 = vpack.c.b16 %v1897, %v1889
    %v2602 = vpack.c.b16 %v1898, %v1890
    %v2603 = vpack.c.b16 %v1899, %v1891
    %v2604 = vpack.c.b16 %v1900, %v1892
    %v2605 = vpack.c.b16 %v1901, %v1893
    %v2606 = vpack.c.b16 %v1910, %v1902
    %v2607 = vpack.c.b16 %v1911, %v1903
    %v2608 = vpack.c.b16 %v1912, %v1904
    %v2609 = vpack.c.b16 %v1913, %v1905
    %v2610 = vpack.c.b16 %v1914, %v1906
    %v2611 = vpack.c.b16 %v1915, %v1907
    %v2612 = vpack.c.b16 %v1916, %v1908
    %v2613 = vpack.c.b16 %v1917, %v1909
    %v2614 = vpack.c.b16 %v1926, %v1918
    %v2615 = vpack.c.b16 %v1927, %v1919
    %v2616 = vpack.c.b16 %v1928, %v1920
    %v2617 = vpack.c.b16 %v1929, %v1921
    %v2618 = vpack.c.b16 %v1930, %v1922
    %v2619 = vpack.c.b16 %v1931, %v1923
    %v2620 = vpack.c.b16 %v1932, %v1924
    %v2621 = vpack.c.b16 %v1933, %v1925
    %v2622 = vpack.c.b16 %v1942, %v1934
    %v2623 = vpack.c.b16 %v1943, %v1935
    %v2624 = vpack.c.b16 %v1944, %v1936
    %v2625 = vpack.c.b16 %v1945, %v1937
    %v2626 = vpack.c.b16 %v1946, %v1938
    %v2627 = vpack.c.b16 %v1947, %v1939
    %v2628 = vpack.c.b16 %v1948, %v1940
    %v2629 = vpack.c.b16 %v1949, %v1941
    %v2630 = vpack.c.b16 %v1958, %v1950
    %v2631 = vpack.c.b16 %v1959, %v1951
    %v2632 = vpack.c.b16 %v1960, %v1952
    %v2633 = vpack.c.b16 %v1961, %v1953
    %v2634 = vpack.c.b16 %v1962, %v1954
    %v2635 = vpack.c.b16 %v1963, %v1955
    %v2636 = vpack.c.b16 %v1964, %v1956
    %v2637 = vpack.c.b16 %v1965, %v1957
    %v2638 = vpack.c.b16 %v1974, %v1966
    %v2639 = vpack.c.b16 %v1975, %v1967
    %v2640 = vpack.c.b16 %v1976, %v1968
    %v2641 = vpack.c.b16 %v1977, %v1969
    %v2642 = vpack.c.b16 %v1978, %v1970
    %v2643 = vpack.c.b16 %v1979, %v1971
    %v2644 = vpack.c.b16 %v1980, %v1972
    %v2645 = vpack.c.b16 %v1981, %v1973
    %v2646 = vpack.c.b16 %v1990, %v1982
    %v2647 = vpack.c.b16 %v1991, %v1983
    %v2648 = vpack.c.b16 %v1992, %v1984
    %v2649 = vpack.c.b16 %v1993, %v1985
    %v2650 = vpack.c.b16 %v1994, %v1986
    %v2651 = vpack.c.b16 %v1995, %v1987
    %v2652 = vpack.c.b16 %v1996, %v1988
    %v2653 = vpack.c.b16 %v1997, %v1989
    %v2654 = vpack.c.b16 %v2006, %v1998
    %v2655 = vpack.c.b16 %v2007, %v1999
    %v2656 = vpack.c.b16 %v2008, %v2000
    %v2657 = vpack.c.b16 %v2009, %v2001
    %v2658 = vpack.c.b16 %v2010, %v2002
    %v2659 = vpack.c.b16 %v2011, %v2003
    %v2660 = vpack.c.b16 %v2012, %v2004
    %v2661 = vpack.c.b16 %v2013, %v2005
    %v2662 = vpack.c.b16 %v2022, %v2014
    %v2663 = vpack.c.b16 %v2023, %v2015
    %v2664 = vpack.c.b16 %v2024, %v2016
    %v2665 = vpack.c.b16 %v2025, %v2017
    %v2666 = vpack.c.b16 %v2026, %v2018
    %v2667 = vpack.c.b16 %v2027, %v2019
    %v2668 = vpack.c.b16 %v2028, %v2020
    %v2669 = vpack.c.b16 %v2029, %v2021
    %v2670 = vpack.c.b16 %v2038, %v2030
    %v2671 = vpack.c.b16 %v2039, %v2031
    %v2672 = vpack.c.b16 %v2040, %v2032
    %v2673 = vpack.c.b16 %v2041, %v2033
    %v2674 = vpack.c.b16 %v2042, %v2034
    %v2675 = vpack.c.b16 %v2043, %v2035
    %v2676 = vpack.c.b16 %v2044, %v2036
    %v2677 = vpack.c.b16 %v2045, %v2037
    %v2678 = vpack.c.b16 %v2054, %v2046
    %v2679 = vpack.c.b16 %v2055, %v2047
    %v2680 = vpack.c.b16 %v2056, %v2048
    %v2681 = vpack.c.b16 %v2057, %v2049
    %v2682 = vpack.c.b16 %v2058, %v2050
    %v2683 = vpack.c.b16 %v2059, %v2051
    %v2684 = vpack.c.b16 %v2060, %v2052
    %v2685 = vpack.c.b16 %v2061, %v2053
    %v2686 = vpack.c.b16 %v2070, %v2062
    %v2687 = vpack.c.b16 %v2071, %v2063
    %v2688 = vpack.c.b16 %v2072, %v2064
    %v2689 = vpack.c.b16 %v2073, %v2065
    %v2690 = vpack.c.b16 %v2074, %v2066
    %v2691 = vpack.c.b16 %v2075, %v2067
    %v2692 = vpack.c.b16 %v2076, %v2068
    %v2693 = vpack.c.b16 %v2077, %v2069
    %v2694 = vpack.c.b16 %v2086, %v2078
    %v2695 = vpack.c.b16 %v2087, %v2079
    %v2696 = vpack.c.b16 %v2088, %v2080
    %v2697 = vpack.c.b16 %v2089, %v2081
    %v2698 = vpack.c.b16 %v2090, %v2082
    %v2699 = vpack.c.b16 %v2091, %v2083
    %v2700 = vpack.c.b16 %v2092, %v2084
    %v2701 = vpack.c.b16 %v2093, %v2085
    %v2702 = vpack.c.b16 %v2102, %v2094
    %v2703 = vpack.c.b16 %v2103, %v2095
    %v2704 = vpack.c.b16 %v2104, %v2096
    %v2705 = vpack.c.b16 %v2105, %v2097
    %v2706 = vpack.c.b16 %v2106, %v2098
    %v2707 = vpack.c.b16 %v2107, %v2099
    %v2708 = vpack.c.b16 %v2108, %v2100
    %v2709 = vpack.c.b16 %v2109, %v2101
    %v2710 = vpack.c.b16 %v2118, %v2110
    %v2711 = vpack.c.b16 %v2119, %v2111
    %v2712 = vpack.c.b16 %v2120, %v2112
    %v2713 = vpack.c.b16 %v2121, %v2113
    %v2714 = vpack.c.b16 %v2122, %v2114
    %v2715 = vpack.c.b16 %v2123, %v2115
    %v2716 = vpack.c.b16 %v2124, %v2116
    %v2717 = vpack.c.b16 %v2125, %v2117
    %v2718 = vpack.c.b16 %v2134, %v2126
    %v2719 = vpack.c.b16 %v2135, %v2127
    %v2720 = vpack.c.b16 %v2136, %v2128
    %v2721 = vpack.c.b16 %v2137, %v2129
    %v2722 = vpack.c.b16 %v2138, %v2130
    %v2723 = vpack.c.b16 %v2139, %v2131
    %v2724 = vpack.c.b16 %v2140, %v2132
    %v2725 = vpack.c.b16 %v2141, %v2133
    %v2726 = vpack.c.b16 %v2150, %v2142
    %v2727 = vpack.c.b16 %v2151, %v2143
    %v2728 = vpack.c.b16 %v2152, %v2144
    %v2729 = vpack.c.b16 %v2153, %v2145
    %v2730 = vpack.c.b16 %v2154, %v2146
    %v2731 = vpack.c.b16 %v2155, %v2147
    %v2732 = vpack.c.b16 %v2156, %v2148
    %v2733 = vpack.c.b16 %v2157, %v2149
    %v2734 = vpack.c.b16 %v2166, %v2158
    %v2735 = vpack.c.b16 %v2167, %v2159
    %v2736 = vpack.c.b16 %v2168, %v2160
    %v2737 = vpack.c.b16 %v2169, %v2161
    %v2738 = vpack.c.b16 %v2170, %v2162
    %v2739 = vpack.c.b16 %v2171, %v2163
    %v2740 = vpack.c.b16 %v2172, %v2164
    %v2741 = vpack.c.b16 %v2173, %v2165
    %v2742 = vpack.c.b16 %v2182, %v2174
    %v2743 = vpack.c.b16 %v2183, %v2175
    %v2744 = vpack.c.b16 %v2184, %v2176
    %v2745 = vpack.c.b16 %v2185, %v2177
    %v2746 = vpack.c.b16 %v2186, %v2178
    %v2747 = vpack.c.b16 %v2187, %v2179
    %v2748 = vpack.c.b16 %v2188, %v2180
    %v2749 = vpack.c.b16 %v2189, %v2181
    %v2750 = vpack.c.b16 %v2198, %v2190
    %v2751 = vpack.c.b16 %v2199, %v2191
    %v2752 = vpack.c.b16 %v2200, %v2192
    %v2753 = vpack.c.b16 %v2201, %v2193
    %v2754 = vpack.c.b16 %v2202, %v2194
    %v2755 = vpack.c.b16 %v2203, %v2195
    %v2756 = vpack.c.b16 %v2204, %v2196
    %v2757 = vpack.c.b16 %v2205, %v2197
    %v2758 = vpack.c.b16 %v2214, %v2206
    %v2759 = vpack.c.b16 %v2215, %v2207
    %v2760 = vpack.c.b16 %v2216, %v2208
    %v2761 = vpack.c.b16 %v2217, %v2209
    %v2762 = vpack.c.b16 %v2218, %v2210
    %v2763 = vpack.c.b16 %v2219, %v2211
    %v2764 = vpack.c.b16 %v2220, %v2212
    %v2765 = vpack.c.b16 %v2221, %v2213
    %v2766 = vpack.c.b16 %v2230, %v2222
    %v2767 = vpack.c.b16 %v2231, %v2223
    %v2768 = vpack.c.b16 %v2232, %v2224
    %v2769 = vpack.c.b16 %v2233, %v2225
    %v2770 = vpack.c.b16 %v2234, %v2226
    %v2771 = vpack.c.b16 %v2235, %v2227
    %v2772 = vpack.c.b16 %v2236, %v2228
    %v2773 = vpack.c.b16 %v2237, %v2229
    %v2774 = vpack.c.b16 %v2246, %v2238
    %v2775 = vpack.c.b16 %v2247, %v2239
    %v2776 = vpack.c.b16 %v2248, %v2240
    %v2777 = vpack.c.b16 %v2249, %v2241
    %v2778 = vpack.c.b16 %v2250, %v2242
    %v2779 = vpack.c.b16 %v2251, %v2243
    %v2780 = vpack.c.b16 %v2252, %v2244
    %v2781 = vpack.c.b16 %v2253, %v2245
    %v2782 = vpack.c.b16 %v2262, %v2254
    %v2783 = vpack.c.b16 %v2263, %v2255
    %v2784 = vpack.c.b16 %v2264, %v2256
    %v2785 = vpack.c.b16 %v2265, %v2257
    %v2786 = vpack.c.b16 %v2266, %v2258
    %v2787 = vpack.c.b16 %v2267, %v2259
    %v2788 = vpack.c.b16 %v2268, %v2260
    %v2789 = vpack.c.b16 %v2269, %v2261
    %v2790 = vpack.c.b16 %v2278, %v2270
    %v2791 = vpack.c.b16 %v2279, %v2271
    %v2792 = vpack.c.b16 %v2280, %v2272
    %v2793 = vpack.c.b16 %v2281, %v2273
    %v2794 = vpack.c.b16 %v2282, %v2274
    %v2795 = vpack.c.b16 %v2283, %v2275
    %v2796 = vpack.c.b16 %v2284, %v2276
    %v2797 = vpack.c.b16 %v2285, %v2277
    %3310 = vmatpush.bf16.msra.mxu0 %v2342
    %3311 = vmatpush.bf16.msra.mxu0 %v2334
    %3312 = vmatpush.bf16.msra.mxu0 %v2326
    %3313 = vmatpush.bf16.msra.mxu0 %v2318
    %3314 = vmatpush.bf16.msra.mxu0 %v2310
    %3315 = vmatpush.bf16.msra.mxu0 %v2302
    %3316 = vmatpush.bf16.msra.mxu0 %v2294
    %3317 = vmatpush.bf16.msra.mxu0 %v2286
    %3318 = vmatmul.bf16.gmra.mxu0 %v230
    %v3319 = vpop.f32.mrf.mxu0
    %v3320 = vadd.f32 0.0, %v3319
    %v3321 = vpop.f32.mrf.mxu0
    %3322 = vdwg.mxu0
    %3323 = vmatpush.bf16.msra.mxu0 %v2406
    %3324 = vmatpush.bf16.msra.mxu0 %v2398
    %3325 = vmatpush.bf16.msra.mxu0 %v2390
    %3326 = vmatpush.bf16.msra.mxu0 %v2382
    %3327 = vmatpush.bf16.msra.mxu0 %v2374
    %3328 = vmatpush.bf16.msra.mxu0 %v2366
    %3329 = vmatpush.bf16.msra.mxu0 %v2358
    %3330 = vmatpush.bf16.msra.mxu0 %v2350
    %3331 = vmatmul.bf16.gmra.mxu0 %v231
    %v3332 = vpop.f32.mrf.mxu0
    %v3333 = vadd.f32 %v3320, %v3332
    %v3334 = vpop.f32.mrf.mxu0
    %3335 = vdwg.mxu0
    %3336 = vmatpush.bf16.msra.mxu0 %v2470
    %3337 = vmatpush.bf16.msra.mxu0 %v2462
    %3338 = vmatpush.bf16.msra.mxu0 %v2454
    %3339 = vmatpush.bf16.msra.mxu0 %v2446
    %3340 = vmatpush.bf16.msra.mxu0 %v2438
    %3341 = vmatpush.bf16.msra.mxu0 %v2430
    %3342 = vmatpush.bf16.msra.mxu0 %v2422
    %3343 = vmatpush.bf16.msra.mxu0 %v2414
    %3344 = vmatmul.bf16.gmra.mxu0 %v232
    %v3345 = vpop.f32.mrf.mxu0
    %v3346 = vadd.f32 %v3333, %v3345
    %v3347 = vpop.f32.mrf.mxu0
    %3348 = vdwg.mxu0
    %3349 = vmatpush.bf16.msra.mxu0 %v2534
    %3350 = vmatpush.bf16.msra.mxu0 %v2526
    %3351 = vmatpush.bf16.msra.mxu0 %v2518
    %3352 = vmatpush.bf16.msra.mxu0 %v2510
    %3353 = vmatpush.bf16.msra.mxu0 %v2502
    %3354 = vmatpush.bf16.msra.mxu0 %v2494
    %3355 = vmatpush.bf16.msra.mxu0 %v2486
    %3356 = vmatpush.bf16.msra.mxu0 %v2478
    %3357 = vmatmul.bf16.gmra.mxu0 %v233
    %v3358 = vpop.f32.mrf.mxu0
    %v3359 = vadd.f32 %v3346, %v3358
    %v3360 = vpop.f32.mrf.mxu0
    %3361 = vdwg.mxu0
    %3362 = vmatpush.bf16.msra.mxu0 %v2598
    %3363 = vmatpush.bf16.msra.mxu0 %v2590
    %3364 = vmatpush.bf16.msra.mxu0 %v2582
    %3365 = vmatpush.bf16.msra.mxu0 %v2574
    %3366 = vmatpush.bf16.msra.mxu0 %v2566
    %3367 = vmatpush.bf16.msra.mxu0 %v2558
    %3368 = vmatpush.bf16.msra.mxu0 %v2550
    %3369 = vmatpush.bf16.msra.mxu0 %v2542
    %3370 = vmatmul.bf16.gmra.mxu0 %v234
    %v3371 = vpop.f32.mrf.mxu0
    %v3372 = vadd.f32 %v3359, %v3371
    %v3373 = vpop.f32.mrf.mxu0
    %3374 = vdwg.mxu0
    %3375 = vmatpush.bf16.msra.mxu0 %v2662
    %3376 = vmatpush.bf16.msra.mxu0 %v2654
    %3377 = vmatpush.bf16.msra.mxu0 %v2646
    %3378 = vmatpush.bf16.msra.mxu0 %v2638
    %3379 = vmatpush.bf16.msra.mxu0 %v2630
    %3380 = vmatpush.bf16.msra.mxu0 %v2622
    %3381 = vmatpush.bf16.msra.mxu0 %v2614
    %3382 = vmatpush.bf16.msra.mxu0 %v2606
    %3383 = vmatmul.bf16.gmra.mxu0 %v235
    %v3384 = vpop.f32.mrf.mxu0
    %v3385 = vadd.f32 %v3372, %v3384
    %v3386 = vpop.f32.mrf.mxu0
    %3387 = vdwg.mxu0
    %3388 = vmatpush.bf16.msra.mxu0 %v2726
    %3389 = vmatpush.bf16.msra.mxu0 %v2718
    %3390 = vmatpush.bf16.msra.mxu0 %v2710
    %3391 = vmatpush.bf16.msra.mxu0 %v2702
    %3392 = vmatpush.bf16.msra.mxu0 %v2694
    %3393 = vmatpush.bf16.msra.mxu0 %v2686
    %3394 = vmatpush.bf16.msra.mxu0 %v2678
    %3395 = vmatpush.bf16.msra.mxu0 %v2670
    %3396 = vmatmul.bf16.gmra.mxu0 %v236
    %v3397 = vpop.f32.mrf.mxu0
    %v3398 = vadd.f32 %v3385, %v3397
    %v3399 = vpop.f32.mrf.mxu0
    %3400 = vdwg.mxu0
    %3401 = vmatpush.bf16.msra.mxu0 %v2790
    %3402 = vmatpush.bf16.msra.mxu0 %v2782
    %3403 = vmatpush.bf16.msra.mxu0 %v2774
    %3404 = vmatpush.bf16.msra.mxu0 %v2766
    %3405 = vmatpush.bf16.msra.mxu0 %v2758
    %3406 = vmatpush.bf16.msra.mxu0 %v2750
    %3407 = vmatpush.bf16.msra.mxu0 %v2742
    %3408 = vmatpush.bf16.msra.mxu0 %v2734
    %3409 = vmatmul.bf16.gmra.mxu0 %v237
    %v3410 = vpop.f32.mrf.mxu0
    %v3411 = vadd.f32 %v3398, %v3410
    %v3412 = vpop.f32.mrf.mxu0
    %3413 = vdwg.mxu0
    %3414 = vmatpush.bf16.msra.mxu0 %v2343
    %3415 = vmatpush.bf16.msra.mxu0 %v2335
    %3416 = vmatpush.bf16.msra.mxu0 %v2327
    %3417 = vmatpush.bf16.msra.mxu0 %v2319
    %3418 = vmatpush.bf16.msra.mxu0 %v2311
    %3419 = vmatpush.bf16.msra.mxu0 %v2303
    %3420 = vmatpush.bf16.msra.mxu0 %v2295
    %3421 = vmatpush.bf16.msra.mxu0 %v2287
    %3422 = vmatmul.bf16.gmra.mxu0 %v230
    %v3423 = vpop.f32.mrf.mxu0
    %v3424 = vadd.f32 0.0, %v3423
    %v3425 = vpop.f32.mrf.mxu0
    %3426 = vdwg.mxu0
    %3427 = vmatpush.bf16.msra.mxu0 %v2407
    %3428 = vmatpush.bf16.msra.mxu0 %v2399
    %3429 = vmatpush.bf16.msra.mxu0 %v2391
    %3430 = vmatpush.bf16.msra.mxu0 %v2383
    %3431 = vmatpush.bf16.msra.mxu0 %v2375
    %3432 = vmatpush.bf16.msra.mxu0 %v2367
    %3433 = vmatpush.bf16.msra.mxu0 %v2359
    %3434 = vmatpush.bf16.msra.mxu0 %v2351
    %3435 = vmatmul.bf16.gmra.mxu0 %v231
    %v3436 = vpop.f32.mrf.mxu0
    %v3437 = vadd.f32 %v3424, %v3436
    %v3438 = vpop.f32.mrf.mxu0
    %3439 = vdwg.mxu0
    %3440 = vmatpush.bf16.msra.mxu0 %v2471
    %3441 = vmatpush.bf16.msra.mxu0 %v2463
    %3442 = vmatpush.bf16.msra.mxu0 %v2455
    %3443 = vmatpush.bf16.msra.mxu0 %v2447
    %3444 = vmatpush.bf16.msra.mxu0 %v2439
    %3445 = vmatpush.bf16.msra.mxu0 %v2431
    %3446 = vmatpush.bf16.msra.mxu0 %v2423
    %3447 = vmatpush.bf16.msra.mxu0 %v2415
    %3448 = vmatmul.bf16.gmra.mxu0 %v232
    %v3449 = vpop.f32.mrf.mxu0
    %v3450 = vadd.f32 %v3437, %v3449
    %v3451 = vpop.f32.mrf.mxu0
    %3452 = vdwg.mxu0
    %3453 = vmatpush.bf16.msra.mxu0 %v2535
    %3454 = vmatpush.bf16.msra.mxu0 %v2527
    %3455 = vmatpush.bf16.msra.mxu0 %v2519
    %3456 = vmatpush.bf16.msra.mxu0 %v2511
    %3457 = vmatpush.bf16.msra.mxu0 %v2503
    %3458 = vmatpush.bf16.msra.mxu0 %v2495
    %3459 = vmatpush.bf16.msra.mxu0 %v2487
    %3460 = vmatpush.bf16.msra.mxu0 %v2479
    %3461 = vmatmul.bf16.gmra.mxu0 %v233
    %v3462 = vpop.f32.mrf.mxu0
    %v3463 = vadd.f32 %v3450, %v3462
    %v3464 = vpop.f32.mrf.mxu0
    %3465 = vdwg.mxu0
    %3466 = vmatpush.bf16.msra.mxu0 %v2599
    %3467 = vmatpush.bf16.msra.mxu0 %v2591
    %3468 = vmatpush.bf16.msra.mxu0 %v2583
    %3469 = vmatpush.bf16.msra.mxu0 %v2575
    %3470 = vmatpush.bf16.msra.mxu0 %v2567
    %3471 = vmatpush.bf16.msra.mxu0 %v2559
    %3472 = vmatpush.bf16.msra.mxu0 %v2551
    %3473 = vmatpush.bf16.msra.mxu0 %v2543
    %3474 = vmatmul.bf16.gmra.mxu0 %v234
    %v3475 = vpop.f32.mrf.mxu0
    %v3476 = vadd.f32 %v3463, %v3475
    %v3477 = vpop.f32.mrf.mxu0
    %3478 = vdwg.mxu0
    %3479 = vmatpush.bf16.msra.mxu0 %v2663
    %3480 = vmatpush.bf16.msra.mxu0 %v2655
    %3481 = vmatpush.bf16.msra.mxu0 %v2647
    %3482 = vmatpush.bf16.msra.mxu0 %v2639
    %3483 = vmatpush.bf16.msra.mxu0 %v2631
    %3484 = vmatpush.bf16.msra.mxu0 %v2623
    %3485 = vmatpush.bf16.msra.mxu0 %v2615
    %3486 = vmatpush.bf16.msra.mxu0 %v2607
    %3487 = vmatmul.bf16.gmra.mxu0 %v235
    %v3488 = vpop.f32.mrf.mxu0
    %v3489 = vadd.f32 %v3476, %v3488
    %v3490 = vpop.f32.mrf.mxu0
    %3491 = vdwg.mxu0
    %3492 = vmatpush.bf16.msra.mxu0 %v2727
    %3493 = vmatpush.bf16.msra.mxu0 %v2719
    %3494 = vmatpush.bf16.msra.mxu0 %v2711
    %3495 = vmatpush.bf16.msra.mxu0 %v2703
    %3496 = vmatpush.bf16.msra.mxu0 %v2695
    %3497 = vmatpush.bf16.msra.mxu0 %v2687
    %3498 = vmatpush.bf16.msra.mxu0 %v2679
    %3499 = vmatpush.bf16.msra.mxu0 %v2671
    %3500 = vmatmul.bf16.gmra.mxu0 %v236
    %v3501 = vpop.f32.mrf.mxu0
    %v3502 = vadd.f32 %v3489, %v3501
    %v3503 = vpop.f32.mrf.mxu0
    %3504 = vdwg.mxu0
    %3505 = vmatpush.bf16.msra.mxu0 %v2791
    %3506 = vmatpush.bf16.msra.mxu0 %v2783
    %3507 = vmatpush.bf16.msra.mxu0 %v2775
    %3508 = vmatpush.bf16.msra.mxu0 %v2767
    %3509 = vmatpush.bf16.msra.mxu0 %v2759
    %3510 = vmatpush.bf16.msra.mxu0 %v2751
    %3511 = vmatpush.bf16.msra.mxu0 %v2743
    %3512 = vmatpush.bf16.msra.mxu0 %v2735
    %3513 = vmatmul.bf16.gmra.mxu0 %v237
    %v3514 = vpop.f32.mrf.mxu0
    %v3515 = vadd.f32 %v3502, %v3514
    %v3516 = vpop.f32.mrf.mxu0
    %3517 = vdwg.mxu0
    %3518 = vmatpush.bf16.msra.mxu0 %v2344
    %3519 = vmatpush.bf16.msra.mxu0 %v2336
    %3520 = vmatpush.bf16.msra.mxu0 %v2328
    %3521 = vmatpush.bf16.msra.mxu0 %v2320
    %3522 = vmatpush.bf16.msra.mxu0 %v2312
    %3523 = vmatpush.bf16.msra.mxu0 %v2304
    %3524 = vmatpush.bf16.msra.mxu0 %v2296
    %3525 = vmatpush.bf16.msra.mxu0 %v2288
    %3526 = vmatmul.bf16.gmra.mxu0 %v230
    %v3527 = vpop.f32.mrf.mxu0
    %v3528 = vadd.f32 0.0, %v3527
    %v3529 = vpop.f32.mrf.mxu0
    %3530 = vdwg.mxu0
    %3531 = vmatpush.bf16.msra.mxu0 %v2408
    %3532 = vmatpush.bf16.msra.mxu0 %v2400
    %3533 = vmatpush.bf16.msra.mxu0 %v2392
    %3534 = vmatpush.bf16.msra.mxu0 %v2384
    %3535 = vmatpush.bf16.msra.mxu0 %v2376
    %3536 = vmatpush.bf16.msra.mxu0 %v2368
    %3537 = vmatpush.bf16.msra.mxu0 %v2360
    %3538 = vmatpush.bf16.msra.mxu0 %v2352
    %3539 = vmatmul.bf16.gmra.mxu0 %v231
    %v3540 = vpop.f32.mrf.mxu0
    %v3541 = vadd.f32 %v3528, %v3540
    %v3542 = vpop.f32.mrf.mxu0
    %3543 = vdwg.mxu0
    %3544 = vmatpush.bf16.msra.mxu0 %v2472
    %3545 = vmatpush.bf16.msra.mxu0 %v2464
    %3546 = vmatpush.bf16.msra.mxu0 %v2456
    %3547 = vmatpush.bf16.msra.mxu0 %v2448
    %3548 = vmatpush.bf16.msra.mxu0 %v2440
    %3549 = vmatpush.bf16.msra.mxu0 %v2432
    %3550 = vmatpush.bf16.msra.mxu0 %v2424
    %3551 = vmatpush.bf16.msra.mxu0 %v2416
    %3552 = vmatmul.bf16.gmra.mxu0 %v232
    %v3553 = vpop.f32.mrf.mxu0
    %v3554 = vadd.f32 %v3541, %v3553
    %v3555 = vpop.f32.mrf.mxu0
    %3556 = vdwg.mxu0
    %3557 = vmatpush.bf16.msra.mxu0 %v2536
    %3558 = vmatpush.bf16.msra.mxu0 %v2528
    %3559 = vmatpush.bf16.msra.mxu0 %v2520
    %3560 = vmatpush.bf16.msra.mxu0 %v2512
    %3561 = vmatpush.bf16.msra.mxu0 %v2504
    %3562 = vmatpush.bf16.msra.mxu0 %v2496
    %3563 = vmatpush.bf16.msra.mxu0 %v2488
    %3564 = vmatpush.bf16.msra.mxu0 %v2480
    %3565 = vmatmul.bf16.gmra.mxu0 %v233
    %v3566 = vpop.f32.mrf.mxu0
    %v3567 = vadd.f32 %v3554, %v3566
    %v3568 = vpop.f32.mrf.mxu0
    %3569 = vdwg.mxu0
    %3570 = vmatpush.bf16.msra.mxu0 %v2600
    %3571 = vmatpush.bf16.msra.mxu0 %v2592
    %3572 = vmatpush.bf16.msra.mxu0 %v2584
    %3573 = vmatpush.bf16.msra.mxu0 %v2576
    %3574 = vmatpush.bf16.msra.mxu0 %v2568
    %3575 = vmatpush.bf16.msra.mxu0 %v2560
    %3576 = vmatpush.bf16.msra.mxu0 %v2552
    %3577 = vmatpush.bf16.msra.mxu0 %v2544
    %3578 = vmatmul.bf16.gmra.mxu0 %v234
    %v3579 = vpop.f32.mrf.mxu0
    %v3580 = vadd.f32 %v3567, %v3579
    %v3581 = vpop.f32.mrf.mxu0
    %3582 = vdwg.mxu0
    %3583 = vmatpush.bf16.msra.mxu0 %v2664
    %3584 = vmatpush.bf16.msra.mxu0 %v2656
    %3585 = vmatpush.bf16.msra.mxu0 %v2648
    %3586 = vmatpush.bf16.msra.mxu0 %v2640
    %3587 = vmatpush.bf16.msra.mxu0 %v2632
    %3588 = vmatpush.bf16.msra.mxu0 %v2624
    %3589 = vmatpush.bf16.msra.mxu0 %v2616
    %3590 = vmatpush.bf16.msra.mxu0 %v2608
    %3591 = vmatmul.bf16.gmra.mxu0 %v235
    %v3592 = vpop.f32.mrf.mxu0
    %v3593 = vadd.f32 %v3580, %v3592
    %v3594 = vpop.f32.mrf.mxu0
    %3595 = vdwg.mxu0
    %3596 = vmatpush.bf16.msra.mxu0 %v2728
    %3597 = vmatpush.bf16.msra.mxu0 %v2720
    %3598 = vmatpush.bf16.msra.mxu0 %v2712
    %3599 = vmatpush.bf16.msra.mxu0 %v2704
    %3600 = vmatpush.bf16.msra.mxu0 %v2696
    %3601 = vmatpush.bf16.msra.mxu0 %v2688
    %3602 = vmatpush.bf16.msra.mxu0 %v2680
    %3603 = vmatpush.bf16.msra.mxu0 %v2672
    %3604 = vmatmul.bf16.gmra.mxu0 %v236
    %v3605 = vpop.f32.mrf.mxu0
    %v3606 = vadd.f32 %v3593, %v3605
    %v3607 = vpop.f32.mrf.mxu0
    %3608 = vdwg.mxu0
    %3609 = vmatpush.bf16.msra.mxu0 %v2792
    %3610 = vmatpush.bf16.msra.mxu0 %v2784
    %3611 = vmatpush.bf16.msra.mxu0 %v2776
    %3612 = vmatpush.bf16.msra.mxu0 %v2768
    %3613 = vmatpush.bf16.msra.mxu0 %v2760
    %3614 = vmatpush.bf16.msra.mxu0 %v2752
    %3615 = vmatpush.bf16.msra.mxu0 %v2744
    %3616 = vmatpush.bf16.msra.mxu0 %v2736
    %3617 = vmatmul.bf16.gmra.mxu0 %v237
    %v3618 = vpop.f32.mrf.mxu0
    %v3619 = vadd.f32 %v3606, %v3618
    %v3620 = vpop.f32.mrf.mxu0
    %3621 = vdwg.mxu0
    %3622 = vmatpush.bf16.msra.mxu0 %v2345
    %3623 = vmatpush.bf16.msra.mxu0 %v2337
    %3624 = vmatpush.bf16.msra.mxu0 %v2329
    %3625 = vmatpush.bf16.msra.mxu0 %v2321
    %3626 = vmatpush.bf16.msra.mxu0 %v2313
    %3627 = vmatpush.bf16.msra.mxu0 %v2305
    %3628 = vmatpush.bf16.msra.mxu0 %v2297
    %3629 = vmatpush.bf16.msra.mxu0 %v2289
    %3630 = vmatmul.bf16.gmra.mxu0 %v230
    %v3631 = vpop.f32.mrf.mxu0
    %v3632 = vadd.f32 0.0, %v3631
    %v3633 = vpop.f32.mrf.mxu0
    %3634 = vdwg.mxu0
    %3635 = vmatpush.bf16.msra.mxu0 %v2409
    %3636 = vmatpush.bf16.msra.mxu0 %v2401
    %3637 = vmatpush.bf16.msra.mxu0 %v2393
    %3638 = vmatpush.bf16.msra.mxu0 %v2385
    %3639 = vmatpush.bf16.msra.mxu0 %v2377
    %3640 = vmatpush.bf16.msra.mxu0 %v2369
    %3641 = vmatpush.bf16.msra.mxu0 %v2361
    %3642 = vmatpush.bf16.msra.mxu0 %v2353
    %3643 = vmatmul.bf16.gmra.mxu0 %v231
    %v3644 = vpop.f32.mrf.mxu0
    %v3645 = vadd.f32 %v3632, %v3644
    %v3646 = vpop.f32.mrf.mxu0
    %3647 = vdwg.mxu0
    %3648 = vmatpush.bf16.msra.mxu0 %v2473
    %3649 = vmatpush.bf16.msra.mxu0 %v2465
    %3650 = vmatpush.bf16.msra.mxu0 %v2457
    %3651 = vmatpush.bf16.msra.mxu0 %v2449
    %3652 = vmatpush.bf16.msra.mxu0 %v2441
    %3653 = vmatpush.bf16.msra.mxu0 %v2433
    %3654 = vmatpush.bf16.msra.mxu0 %v2425
    %3655 = vmatpush.bf16.msra.mxu0 %v2417
    %3656 = vmatmul.bf16.gmra.mxu0 %v232
    %v3657 = vpop.f32.mrf.mxu0
    %v3658 = vadd.f32 %v3645, %v3657
    %v3659 = vpop.f32.mrf.mxu0
    %3660 = vdwg.mxu0
    %3661 = vmatpush.bf16.msra.mxu0 %v2537
    %3662 = vmatpush.bf16.msra.mxu0 %v2529
    %3663 = vmatpush.bf16.msra.mxu0 %v2521
    %3664 = vmatpush.bf16.msra.mxu0 %v2513
    %3665 = vmatpush.bf16.msra.mxu0 %v2505
    %3666 = vmatpush.bf16.msra.mxu0 %v2497
    %3667 = vmatpush.bf16.msra.mxu0 %v2489
    %3668 = vmatpush.bf16.msra.mxu0 %v2481
    %3669 = vmatmul.bf16.gmra.mxu0 %v233
    %v3670 = vpop.f32.mrf.mxu0
    %v3671 = vadd.f32 %v3658, %v3670
    %v3672 = vpop.f32.mrf.mxu0
    %3673 = vdwg.mxu0
    %3674 = vmatpush.bf16.msra.mxu0 %v2601
    %3675 = vmatpush.bf16.msra.mxu0 %v2593
    %3676 = vmatpush.bf16.msra.mxu0 %v2585
    %3677 = vmatpush.bf16.msra.mxu0 %v2577
    %3678 = vmatpush.bf16.msra.mxu0 %v2569
    %3679 = vmatpush.bf16.msra.mxu0 %v2561
    %3680 = vmatpush.bf16.msra.mxu0 %v2553
    %3681 = vmatpush.bf16.msra.mxu0 %v2545
    %3682 = vmatmul.bf16.gmra.mxu0 %v234
    %v3683 = vpop.f32.mrf.mxu0
    %v3684 = vadd.f32 %v3671, %v3683
    %v3685 = vpop.f32.mrf.mxu0
    %3686 = vdwg.mxu0
    %3687 = vmatpush.bf16.msra.mxu0 %v2665
    %3688 = vmatpush.bf16.msra.mxu0 %v2657
    %3689 = vmatpush.bf16.msra.mxu0 %v2649
    %3690 = vmatpush.bf16.msra.mxu0 %v2641
    %3691 = vmatpush.bf16.msra.mxu0 %v2633
    %3692 = vmatpush.bf16.msra.mxu0 %v2625
    %3693 = vmatpush.bf16.msra.mxu0 %v2617
    %3694 = vmatpush.bf16.msra.mxu0 %v2609
    %3695 = vmatmul.bf16.gmra.mxu0 %v235
    %v3696 = vpop.f32.mrf.mxu0
    %v3697 = vadd.f32 %v3684, %v3696
    %v3698 = vpop.f32.mrf.mxu0
    %3699 = vdwg.mxu0
    %3700 = vmatpush.bf16.msra.mxu0 %v2729
    %3701 = vmatpush.bf16.msra.mxu0 %v2721
    %3702 = vmatpush.bf16.msra.mxu0 %v2713
    %3703 = vmatpush.bf16.msra.mxu0 %v2705
    %3704 = vmatpush.bf16.msra.mxu0 %v2697
    %3705 = vmatpush.bf16.msra.mxu0 %v2689
    %3706 = vmatpush.bf16.msra.mxu0 %v2681
    %3707 = vmatpush.bf16.msra.mxu0 %v2673
    %3708 = vmatmul.bf16.gmra.mxu0 %v236
    %v3709 = vpop.f32.mrf.mxu0
    %v3710 = vadd.f32 %v3697, %v3709
    %v3711 = vpop.f32.mrf.mxu0
    %3712 = vdwg.mxu0
    %3713 = vmatpush.bf16.msra.mxu0 %v2793
    %3714 = vmatpush.bf16.msra.mxu0 %v2785
    %3715 = vmatpush.bf16.msra.mxu0 %v2777
    %3716 = vmatpush.bf16.msra.mxu0 %v2769
    %3717 = vmatpush.bf16.msra.mxu0 %v2761
    %3718 = vmatpush.bf16.msra.mxu0 %v2753
    %3719 = vmatpush.bf16.msra.mxu0 %v2745
    %3720 = vmatpush.bf16.msra.mxu0 %v2737
    %3721 = vmatmul.bf16.gmra.mxu0 %v237
    %v3722 = vpop.f32.mrf.mxu0
    %v3723 = vadd.f32 %v3710, %v3722
    %v3724 = vpop.f32.mrf.mxu0
    %3725 = vdwg.mxu0
    %3726 = vmatpush.bf16.msra.mxu0 %v2346
    %3727 = vmatpush.bf16.msra.mxu0 %v2338
    %3728 = vmatpush.bf16.msra.mxu0 %v2330
    %3729 = vmatpush.bf16.msra.mxu0 %v2322
    %3730 = vmatpush.bf16.msra.mxu0 %v2314
    %3731 = vmatpush.bf16.msra.mxu0 %v2306
    %3732 = vmatpush.bf16.msra.mxu0 %v2298
    %3733 = vmatpush.bf16.msra.mxu0 %v2290
    %3734 = vmatmul.bf16.gmra.mxu0 %v230
    %v3735 = vpop.f32.mrf.mxu0
    %v3736 = vadd.f32 0.0, %v3735
    %v3737 = vpop.f32.mrf.mxu0
    %3738 = vdwg.mxu0
    %3739 = vmatpush.bf16.msra.mxu0 %v2410
    %3740 = vmatpush.bf16.msra.mxu0 %v2402
    %3741 = vmatpush.bf16.msra.mxu0 %v2394
    %3742 = vmatpush.bf16.msra.mxu0 %v2386
    %3743 = vmatpush.bf16.msra.mxu0 %v2378
    %3744 = vmatpush.bf16.msra.mxu0 %v2370
    %3745 = vmatpush.bf16.msra.mxu0 %v2362
    %3746 = vmatpush.bf16.msra.mxu0 %v2354
    %3747 = vmatmul.bf16.gmra.mxu0 %v231
    %v3748 = vpop.f32.mrf.mxu0
    %v3749 = vadd.f32 %v3736, %v3748
    %v3750 = vpop.f32.mrf.mxu0
    %3751 = vdwg.mxu0
    %3752 = vmatpush.bf16.msra.mxu0 %v2474
    %3753 = vmatpush.bf16.msra.mxu0 %v2466
    %3754 = vmatpush.bf16.msra.mxu0 %v2458
    %3755 = vmatpush.bf16.msra.mxu0 %v2450
    %3756 = vmatpush.bf16.msra.mxu0 %v2442
    %3757 = vmatpush.bf16.msra.mxu0 %v2434
    %3758 = vmatpush.bf16.msra.mxu0 %v2426
    %3759 = vmatpush.bf16.msra.mxu0 %v2418
    %3760 = vmatmul.bf16.gmra.mxu0 %v232
    %v3761 = vpop.f32.mrf.mxu0
    %v3762 = vadd.f32 %v3749, %v3761
    %v3763 = vpop.f32.mrf.mxu0
    %3764 = vdwg.mxu0
    %3765 = vmatpush.bf16.msra.mxu0 %v2538
    %3766 = vmatpush.bf16.msra.mxu0 %v2530
    %3767 = vmatpush.bf16.msra.mxu0 %v2522
    %3768 = vmatpush.bf16.msra.mxu0 %v2514
    %3769 = vmatpush.bf16.msra.mxu0 %v2506
    %3770 = vmatpush.bf16.msra.mxu0 %v2498
    %3771 = vmatpush.bf16.msra.mxu0 %v2490
    %3772 = vmatpush.bf16.msra.mxu0 %v2482
    %3773 = vmatmul.bf16.gmra.mxu0 %v233
    %v3774 = vpop.f32.mrf.mxu0
    %v3775 = vadd.f32 %v3762, %v3774
    %v3776 = vpop.f32.mrf.mxu0
    %3777 = vdwg.mxu0
    %3778 = vmatpush.bf16.msra.mxu0 %v2602
    %3779 = vmatpush.bf16.msra.mxu0 %v2594
    %3780 = vmatpush.bf16.msra.mxu0 %v2586
    %3781 = vmatpush.bf16.msra.mxu0 %v2578
    %3782 = vmatpush.bf16.msra.mxu0 %v2570
    %3783 = vmatpush.bf16.msra.mxu0 %v2562
    %3784 = vmatpush.bf16.msra.mxu0 %v2554
    %3785 = vmatpush.bf16.msra.mxu0 %v2546
    %3786 = vmatmul.bf16.gmra.mxu0 %v234
    %v3787 = vpop.f32.mrf.mxu0
    %v3788 = vadd.f32 %v3775, %v3787
    %v3789 = vpop.f32.mrf.mxu0
    %3790 = vdwg.mxu0
    %3791 = vmatpush.bf16.msra.mxu0 %v2666
    %3792 = vmatpush.bf16.msra.mxu0 %v2658
    %3793 = vmatpush.bf16.msra.mxu0 %v2650
    %3794 = vmatpush.bf16.msra.mxu0 %v2642
    %3795 = vmatpush.bf16.msra.mxu0 %v2634
    %3796 = vmatpush.bf16.msra.mxu0 %v2626
    %3797 = vmatpush.bf16.msra.mxu0 %v2618
    %3798 = vmatpush.bf16.msra.mxu0 %v2610
    %3799 = vmatmul.bf16.gmra.mxu0 %v235
    %v3800 = vpop.f32.mrf.mxu0
    %v3801 = vadd.f32 %v3788, %v3800
    %v3802 = vpop.f32.mrf.mxu0
    %3803 = vdwg.mxu0
    %3804 = vmatpush.bf16.msra.mxu0 %v2730
    %3805 = vmatpush.bf16.msra.mxu0 %v2722
    %3806 = vmatpush.bf16.msra.mxu0 %v2714
    %3807 = vmatpush.bf16.msra.mxu0 %v2706
    %3808 = vmatpush.bf16.msra.mxu0 %v2698
    %3809 = vmatpush.bf16.msra.mxu0 %v2690
    %3810 = vmatpush.bf16.msra.mxu0 %v2682
    %3811 = vmatpush.bf16.msra.mxu0 %v2674
    %3812 = vmatmul.bf16.gmra.mxu0 %v236
    %v3813 = vpop.f32.mrf.mxu0
    %v3814 = vadd.f32 %v3801, %v3813
    %v3815 = vpop.f32.mrf.mxu0
    %3816 = vdwg.mxu0
    %3817 = vmatpush.bf16.msra.mxu0 %v2794
    %3818 = vmatpush.bf16.msra.mxu0 %v2786
    %3819 = vmatpush.bf16.msra.mxu0 %v2778
    %3820 = vmatpush.bf16.msra.mxu0 %v2770
    %3821 = vmatpush.bf16.msra.mxu0 %v2762
    %3822 = vmatpush.bf16.msra.mxu0 %v2754
    %3823 = vmatpush.bf16.msra.mxu0 %v2746
    %3824 = vmatpush.bf16.msra.mxu0 %v2738
    %3825 = vmatmul.bf16.gmra.mxu0 %v237
    %v3826 = vpop.f32.mrf.mxu0
    %v3827 = vadd.f32 %v3814, %v3826
    %v3828 = vpop.f32.mrf.mxu0
    %3829 = vdwg.mxu0
    %3830 = vmatpush.bf16.msra.mxu0 %v2347
    %3831 = vmatpush.bf16.msra.mxu0 %v2339
    %3832 = vmatpush.bf16.msra.mxu0 %v2331
    %3833 = vmatpush.bf16.msra.mxu0 %v2323
    %3834 = vmatpush.bf16.msra.mxu0 %v2315
    %3835 = vmatpush.bf16.msra.mxu0 %v2307
    %3836 = vmatpush.bf16.msra.mxu0 %v2299
    %3837 = vmatpush.bf16.msra.mxu0 %v2291
    %3838 = vmatmul.bf16.gmra.mxu0 %v230
    %v3839 = vpop.f32.mrf.mxu0
    %v3840 = vadd.f32 0.0, %v3839
    %v3841 = vpop.f32.mrf.mxu0
    %3842 = vdwg.mxu0
    %3843 = vmatpush.bf16.msra.mxu0 %v2411
    %3844 = vmatpush.bf16.msra.mxu0 %v2403
    %3845 = vmatpush.bf16.msra.mxu0 %v2395
    %3846 = vmatpush.bf16.msra.mxu0 %v2387
    %3847 = vmatpush.bf16.msra.mxu0 %v2379
    %3848 = vmatpush.bf16.msra.mxu0 %v2371
    %3849 = vmatpush.bf16.msra.mxu0 %v2363
    %3850 = vmatpush.bf16.msra.mxu0 %v2355
    %3851 = vmatmul.bf16.gmra.mxu0 %v231
    %v3852 = vpop.f32.mrf.mxu0
    %v3853 = vadd.f32 %v3840, %v3852
    %v3854 = vpop.f32.mrf.mxu0
    %3855 = vdwg.mxu0
    %3856 = vmatpush.bf16.msra.mxu0 %v2475
    %3857 = vmatpush.bf16.msra.mxu0 %v2467
    %3858 = vmatpush.bf16.msra.mxu0 %v2459
    %3859 = vmatpush.bf16.msra.mxu0 %v2451
    %3860 = vmatpush.bf16.msra.mxu0 %v2443
    %3861 = vmatpush.bf16.msra.mxu0 %v2435
    %3862 = vmatpush.bf16.msra.mxu0 %v2427
    %3863 = vmatpush.bf16.msra.mxu0 %v2419
    %3864 = vmatmul.bf16.gmra.mxu0 %v232
    %v3865 = vpop.f32.mrf.mxu0
    %v3866 = vadd.f32 %v3853, %v3865
    %v3867 = vpop.f32.mrf.mxu0
    %3868 = vdwg.mxu0
    %3869 = vmatpush.bf16.msra.mxu0 %v2539
    %3870 = vmatpush.bf16.msra.mxu0 %v2531
    %3871 = vmatpush.bf16.msra.mxu0 %v2523
    %3872 = vmatpush.bf16.msra.mxu0 %v2515
    %3873 = vmatpush.bf16.msra.mxu0 %v2507
    %3874 = vmatpush.bf16.msra.mxu0 %v2499
    %3875 = vmatpush.bf16.msra.mxu0 %v2491
    %3876 = vmatpush.bf16.msra.mxu0 %v2483
    %3877 = vmatmul.bf16.gmra.mxu0 %v233
    %v3878 = vpop.f32.mrf.mxu0
    %v3879 = vadd.f32 %v3866, %v3878
    %v3880 = vpop.f32.mrf.mxu0
    %3881 = vdwg.mxu0
    %3882 = vmatpush.bf16.msra.mxu0 %v2603
    %3883 = vmatpush.bf16.msra.mxu0 %v2595
    %3884 = vmatpush.bf16.msra.mxu0 %v2587
    %3885 = vmatpush.bf16.msra.mxu0 %v2579
    %3886 = vmatpush.bf16.msra.mxu0 %v2571
    %3887 = vmatpush.bf16.msra.mxu0 %v2563
    %3888 = vmatpush.bf16.msra.mxu0 %v2555
    %3889 = vmatpush.bf16.msra.mxu0 %v2547
    %3890 = vmatmul.bf16.gmra.mxu0 %v234
    %v3891 = vpop.f32.mrf.mxu0
    %v3892 = vadd.f32 %v3879, %v3891
    %v3893 = vpop.f32.mrf.mxu0
    %3894 = vdwg.mxu0
    %3895 = vmatpush.bf16.msra.mxu0 %v2667
    %3896 = vmatpush.bf16.msra.mxu0 %v2659
    %3897 = vmatpush.bf16.msra.mxu0 %v2651
    %3898 = vmatpush.bf16.msra.mxu0 %v2643
    %3899 = vmatpush.bf16.msra.mxu0 %v2635
    %3900 = vmatpush.bf16.msra.mxu0 %v2627
    %3901 = vmatpush.bf16.msra.mxu0 %v2619
    %3902 = vmatpush.bf16.msra.mxu0 %v2611
    %3903 = vmatmul.bf16.gmra.mxu0 %v235
    %v3904 = vpop.f32.mrf.mxu0
    %v3905 = vadd.f32 %v3892, %v3904
    %v3906 = vpop.f32.mrf.mxu0
    %3907 = vdwg.mxu0
    %3908 = vmatpush.bf16.msra.mxu0 %v2731
    %3909 = vmatpush.bf16.msra.mxu0 %v2723
    %3910 = vmatpush.bf16.msra.mxu0 %v2715
    %3911 = vmatpush.bf16.msra.mxu0 %v2707
    %3912 = vmatpush.bf16.msra.mxu0 %v2699
    %3913 = vmatpush.bf16.msra.mxu0 %v2691
    %3914 = vmatpush.bf16.msra.mxu0 %v2683
    %3915 = vmatpush.bf16.msra.mxu0 %v2675
    %3916 = vmatmul.bf16.gmra.mxu0 %v236
    %v3917 = vpop.f32.mrf.mxu0
    %v3918 = vadd.f32 %v3905, %v3917
    %v3919 = vpop.f32.mrf.mxu0
    %3920 = vdwg.mxu0
    %3921 = vmatpush.bf16.msra.mxu0 %v2795
    %3922 = vmatpush.bf16.msra.mxu0 %v2787
    %3923 = vmatpush.bf16.msra.mxu0 %v2779
    %3924 = vmatpush.bf16.msra.mxu0 %v2771
    %3925 = vmatpush.bf16.msra.mxu0 %v2763
    %3926 = vmatpush.bf16.msra.mxu0 %v2755
    %3927 = vmatpush.bf16.msra.mxu0 %v2747
    %3928 = vmatpush.bf16.msra.mxu0 %v2739
    %3929 = vmatmul.bf16.gmra.mxu0 %v237
    %v3930 = vpop.f32.mrf.mxu0
    %v3931 = vadd.f32 %v3918, %v3930
    %v3932 = vpop.f32.mrf.mxu0
    %3933 = vdwg.mxu0
    %3934 = vmatpush.bf16.msra.mxu0 %v2348
    %3935 = vmatpush.bf16.msra.mxu0 %v2340
    %3936 = vmatpush.bf16.msra.mxu0 %v2332
    %3937 = vmatpush.bf16.msra.mxu0 %v2324
    %3938 = vmatpush.bf16.msra.mxu0 %v2316
    %3939 = vmatpush.bf16.msra.mxu0 %v2308
    %3940 = vmatpush.bf16.msra.mxu0 %v2300
    %3941 = vmatpush.bf16.msra.mxu0 %v2292
    %3942 = vmatmul.bf16.gmra.mxu0 %v230
    %v3943 = vpop.f32.mrf.mxu0
    %v3944 = vadd.f32 0.0, %v3943
    %v3945 = vpop.f32.mrf.mxu0
    %3946 = vdwg.mxu0
    %3947 = vmatpush.bf16.msra.mxu0 %v2412
    %3948 = vmatpush.bf16.msra.mxu0 %v2404
    %3949 = vmatpush.bf16.msra.mxu0 %v2396
    %3950 = vmatpush.bf16.msra.mxu0 %v2388
    %3951 = vmatpush.bf16.msra.mxu0 %v2380
    %3952 = vmatpush.bf16.msra.mxu0 %v2372
    %3953 = vmatpush.bf16.msra.mxu0 %v2364
    %3954 = vmatpush.bf16.msra.mxu0 %v2356
    %3955 = vmatmul.bf16.gmra.mxu0 %v231
    %v3956 = vpop.f32.mrf.mxu0
    %v3957 = vadd.f32 %v3944, %v3956
    %v3958 = vpop.f32.mrf.mxu0
    %3959 = vdwg.mxu0
    %3960 = vmatpush.bf16.msra.mxu0 %v2476
    %3961 = vmatpush.bf16.msra.mxu0 %v2468
    %3962 = vmatpush.bf16.msra.mxu0 %v2460
    %3963 = vmatpush.bf16.msra.mxu0 %v2452
    %3964 = vmatpush.bf16.msra.mxu0 %v2444
    %3965 = vmatpush.bf16.msra.mxu0 %v2436
    %3966 = vmatpush.bf16.msra.mxu0 %v2428
    %3967 = vmatpush.bf16.msra.mxu0 %v2420
    %3968 = vmatmul.bf16.gmra.mxu0 %v232
    %v3969 = vpop.f32.mrf.mxu0
    %v3970 = vadd.f32 %v3957, %v3969
    %v3971 = vpop.f32.mrf.mxu0
    %3972 = vdwg.mxu0
    %3973 = vmatpush.bf16.msra.mxu0 %v2540
    %3974 = vmatpush.bf16.msra.mxu0 %v2532
    %3975 = vmatpush.bf16.msra.mxu0 %v2524
    %3976 = vmatpush.bf16.msra.mxu0 %v2516
    %3977 = vmatpush.bf16.msra.mxu0 %v2508
    %3978 = vmatpush.bf16.msra.mxu0 %v2500
    %3979 = vmatpush.bf16.msra.mxu0 %v2492
    %3980 = vmatpush.bf16.msra.mxu0 %v2484
    %3981 = vmatmul.bf16.gmra.mxu0 %v233
    %v3982 = vpop.f32.mrf.mxu0
    %v3983 = vadd.f32 %v3970, %v3982
    %v3984 = vpop.f32.mrf.mxu0
    %3985 = vdwg.mxu0
    %3986 = vmatpush.bf16.msra.mxu0 %v2604
    %3987 = vmatpush.bf16.msra.mxu0 %v2596
    %3988 = vmatpush.bf16.msra.mxu0 %v2588
    %3989 = vmatpush.bf16.msra.mxu0 %v2580
    %3990 = vmatpush.bf16.msra.mxu0 %v2572
    %3991 = vmatpush.bf16.msra.mxu0 %v2564
    %3992 = vmatpush.bf16.msra.mxu0 %v2556
    %3993 = vmatpush.bf16.msra.mxu0 %v2548
    %3994 = vmatmul.bf16.gmra.mxu0 %v234
    %v3995 = vpop.f32.mrf.mxu0
    %v3996 = vadd.f32 %v3983, %v3995
    %v3997 = vpop.f32.mrf.mxu0
    %3998 = vdwg.mxu0
    %3999 = vmatpush.bf16.msra.mxu0 %v2668
    %4000 = vmatpush.bf16.msra.mxu0 %v2660
    %4001 = vmatpush.bf16.msra.mxu0 %v2652
    %4002 = vmatpush.bf16.msra.mxu0 %v2644
    %4003 = vmatpush.bf16.msra.mxu0 %v2636
    %4004 = vmatpush.bf16.msra.mxu0 %v2628
    %4005 = vmatpush.bf16.msra.mxu0 %v2620
    %4006 = vmatpush.bf16.msra.mxu0 %v2612
    %4007 = vmatmul.bf16.gmra.mxu0 %v235
    %v4008 = vpop.f32.mrf.mxu0
    %v4009 = vadd.f32 %v3996, %v4008
    %v4010 = vpop.f32.mrf.mxu0
    %4011 = vdwg.mxu0
    %4012 = vmatpush.bf16.msra.mxu0 %v2732
    %4013 = vmatpush.bf16.msra.mxu0 %v2724
    %4014 = vmatpush.bf16.msra.mxu0 %v2716
    %4015 = vmatpush.bf16.msra.mxu0 %v2708
    %4016 = vmatpush.bf16.msra.mxu0 %v2700
    %4017 = vmatpush.bf16.msra.mxu0 %v2692
    %4018 = vmatpush.bf16.msra.mxu0 %v2684
    %4019 = vmatpush.bf16.msra.mxu0 %v2676
    %4020 = vmatmul.bf16.gmra.mxu0 %v236
    %v4021 = vpop.f32.mrf.mxu0
    %v4022 = vadd.f32 %v4009, %v4021
    %v4023 = vpop.f32.mrf.mxu0
    %4024 = vdwg.mxu0
    %4025 = vmatpush.bf16.msra.mxu0 %v2796
    %4026 = vmatpush.bf16.msra.mxu0 %v2788
    %4027 = vmatpush.bf16.msra.mxu0 %v2780
    %4028 = vmatpush.bf16.msra.mxu0 %v2772
    %4029 = vmatpush.bf16.msra.mxu0 %v2764
    %4030 = vmatpush.bf16.msra.mxu0 %v2756
    %4031 = vmatpush.bf16.msra.mxu0 %v2748
    %4032 = vmatpush.bf16.msra.mxu0 %v2740
    %4033 = vmatmul.bf16.gmra.mxu0 %v237
    %v4034 = vpop.f32.mrf.mxu0
    %v4035 = vadd.f32 %v4022, %v4034
    %v4036 = vpop.f32.mrf.mxu0
    %4037 = vdwg.mxu0
    %4038 = vmatpush.bf16.msra.mxu0 %v2349
    %4039 = vmatpush.bf16.msra.mxu0 %v2341
    %4040 = vmatpush.bf16.msra.mxu0 %v2333
    %4041 = vmatpush.bf16.msra.mxu0 %v2325
    %4042 = vmatpush.bf16.msra.mxu0 %v2317
    %4043 = vmatpush.bf16.msra.mxu0 %v2309
    %4044 = vmatpush.bf16.msra.mxu0 %v2301
    %4045 = vmatpush.bf16.msra.mxu0 %v2293
    %4046 = vmatmul.bf16.gmra.mxu0 %v230
    %v4047 = vpop.f32.mrf.mxu0
    %v4048 = vadd.f32 0.0, %v4047
    %v4049 = vpop.f32.mrf.mxu0
    %4050 = vdwg.mxu0
    %4051 = vmatpush.bf16.msra.mxu0 %v2413
    %4052 = vmatpush.bf16.msra.mxu0 %v2405
    %4053 = vmatpush.bf16.msra.mxu0 %v2397
    %4054 = vmatpush.bf16.msra.mxu0 %v2389
    %4055 = vmatpush.bf16.msra.mxu0 %v2381
    %4056 = vmatpush.bf16.msra.mxu0 %v2373
    %4057 = vmatpush.bf16.msra.mxu0 %v2365
    %4058 = vmatpush.bf16.msra.mxu0 %v2357
    %4059 = vmatmul.bf16.gmra.mxu0 %v231
    %v4060 = vpop.f32.mrf.mxu0
    %v4061 = vadd.f32 %v4048, %v4060
    %v4062 = vpop.f32.mrf.mxu0
    %4063 = vdwg.mxu0
    %4064 = vmatpush.bf16.msra.mxu0 %v2477
    %4065 = vmatpush.bf16.msra.mxu0 %v2469
    %4066 = vmatpush.bf16.msra.mxu0 %v2461
    %4067 = vmatpush.bf16.msra.mxu0 %v2453
    %4068 = vmatpush.bf16.msra.mxu0 %v2445
    %4069 = vmatpush.bf16.msra.mxu0 %v2437
    %4070 = vmatpush.bf16.msra.mxu0 %v2429
    %4071 = vmatpush.bf16.msra.mxu0 %v2421
    %4072 = vmatmul.bf16.gmra.mxu0 %v232
    %v4073 = vpop.f32.mrf.mxu0
    %v4074 = vadd.f32 %v4061, %v4073
    %v4075 = vpop.f32.mrf.mxu0
    %4076 = vdwg.mxu0
    %4077 = vmatpush.bf16.msra.mxu0 %v2541
    %4078 = vmatpush.bf16.msra.mxu0 %v2533
    %4079 = vmatpush.bf16.msra.mxu0 %v2525
    %4080 = vmatpush.bf16.msra.mxu0 %v2517
    %4081 = vmatpush.bf16.msra.mxu0 %v2509
    %4082 = vmatpush.bf16.msra.mxu0 %v2501
    %4083 = vmatpush.bf16.msra.mxu0 %v2493
    %4084 = vmatpush.bf16.msra.mxu0 %v2485
    %4085 = vmatmul.bf16.gmra.mxu0 %v233
    %v4086 = vpop.f32.mrf.mxu0
    %v4087 = vadd.f32 %v4074, %v4086
    %v4088 = vpop.f32.mrf.mxu0
    %4089 = vdwg.mxu0
    %4090 = vmatpush.bf16.msra.mxu0 %v2605
    %4091 = vmatpush.bf16.msra.mxu0 %v2597
    %4092 = vmatpush.bf16.msra.mxu0 %v2589
    %4093 = vmatpush.bf16.msra.mxu0 %v2581
    %4094 = vmatpush.bf16.msra.mxu0 %v2573
    %4095 = vmatpush.bf16.msra.mxu0 %v2565
    %4096 = vmatpush.bf16.msra.mxu0 %v2557
    %4097 = vmatpush.bf16.msra.mxu0 %v2549
    %4098 = vmatmul.bf16.gmra.mxu0 %v234
    %v4099 = vpop.f32.mrf.mxu0
    %v4100 = vadd.f32 %v4087, %v4099
    %v4101 = vpop.f32.mrf.mxu0
    %4102 = vdwg.mxu0
    %4103 = vmatpush.bf16.msra.mxu0 %v2669
    %4104 = vmatpush.bf16.msra.mxu0 %v2661
    %4105 = vmatpush.bf16.msra.mxu0 %v2653
    %4106 = vmatpush.bf16.msra.mxu0 %v2645
    %4107 = vmatpush.bf16.msra.mxu0 %v2637
    %4108 = vmatpush.bf16.msra.mxu0 %v2629
    %4109 = vmatpush.bf16.msra.mxu0 %v2621
    %4110 = vmatpush.bf16.msra.mxu0 %v2613
    %4111 = vmatmul.bf16.gmra.mxu0 %v235
    %v4112 = vpop.f32.mrf.mxu0
    %v4113 = vadd.f32 %v4100, %v4112
    %v4114 = vpop.f32.mrf.mxu0
    %4115 = vdwg.mxu0
    %4116 = vmatpush.bf16.msra.mxu0 %v2733
    %4117 = vmatpush.bf16.msra.mxu0 %v2725
    %4118 = vmatpush.bf16.msra.mxu0 %v2717
    %4119 = vmatpush.bf16.msra.mxu0 %v2709
    %4120 = vmatpush.bf16.msra.mxu0 %v2701
    %4121 = vmatpush.bf16.msra.mxu0 %v2693
    %4122 = vmatpush.bf16.msra.mxu0 %v2685
    %4123 = vmatpush.bf16.msra.mxu0 %v2677
    %4124 = vmatmul.bf16.gmra.mxu0 %v236
    %v4125 = vpop.f32.mrf.mxu0
    %v4126 = vadd.f32 %v4113, %v4125
    %v4127 = vpop.f32.mrf.mxu0
    %4128 = vdwg.mxu0
    %4129 = vmatpush.bf16.msra.mxu0 %v2797
    %4130 = vmatpush.bf16.msra.mxu0 %v2789
    %4131 = vmatpush.bf16.msra.mxu0 %v2781
    %4132 = vmatpush.bf16.msra.mxu0 %v2773
    %4133 = vmatpush.bf16.msra.mxu0 %v2765
    %4134 = vmatpush.bf16.msra.mxu0 %v2757
    %4135 = vmatpush.bf16.msra.mxu0 %v2749
    %4136 = vmatpush.bf16.msra.mxu0 %v2741
    %4137 = vmatmul.bf16.gmra.mxu0 %v237
    %v4138 = vpop.f32.mrf.mxu0
    %v4139 = vadd.f32 %v4126, %v4138
    %v4140 = vpop.f32.mrf.mxu0
    %4141 = vdwg.mxu0
    %v4142 = vmax.f32 %v3411, 0.0
    %v4143 = vmax.f32 %v3515, 0.0
    %v4144 = vmax.f32 %v3619, 0.0
    %v4145 = vmax.f32 %v3723, 0.0
    %v4146 = vmax.f32 %v3827, 0.0
    %v4147 = vmax.f32 %v3931, 0.0
    %v4148 = vmax.f32 %v4035, 0.0
    %v4149 = vmax.f32 %v4139, 0.0
    %v4150 = vpack.c.bf16 %v4142, %v4142
    %v4151 = vpack.c.bf16 %v4143, %v4143
    %v4152 = vpack.c.bf16 %v4144, %v4144
    %v4153 = vpack.c.bf16 %v4145, %v4145
    %v4154 = vpack.c.bf16 %v4146, %v4146
    %v4155 = vpack.c.bf16 %v4147, %v4147
    %v4156 = vpack.c.bf16 %v4148, %v4148
    %v4157 = vpack.c.bf16 %v4149, %v4149
    %v4158 = vld [vmem:[#allocation6] sm:$0xf]
    %v4159 = vld [vmem:[#allocation6 + $0x4] sm:$0xf]
    %v4160 = vld [vmem:[#allocation6 + $0x8] sm:$0xf]
    %v4161 = vld [vmem:[#allocation6 + $0xc] sm:$0xf]
    %v4162 = vld [vmem:[#allocation6 + $0x10] sm:$0xf]
    %v4163 = vld [vmem:[#allocation6 + $0x14] sm:$0xf]
    %v4164 = vld [vmem:[#allocation6 + $0x18] sm:$0xf]
    %v4165 = vld [vmem:[#allocation6 + $0x1c] sm:$0xf]
    %v4166 = vld [vmem:[#allocation6 + $0x20] sm:$0xf]
    %v4167 = vld [vmem:[#allocation6 + $0x24] sm:$0xf]
    %v4168 = vld [vmem:[#allocation6 + $0x28] sm:$0xf]
    %v4169 = vld [vmem:[#allocation6 + $0x2c] sm:$0xf]
    %v4170 = vld [vmem:[#allocation6 + $0x30] sm:$0xf]
    %v4171 = vld [vmem:[#allocation6 + $0x34] sm:$0xf]
    %v4172 = vld [vmem:[#allocation6 + $0x38] sm:$0xf]
    %v4173 = vld [vmem:[#allocation6 + $0x3c] sm:$0xf]
    %v4174 = vld [vmem:[#allocation6 + $0x40] sm:$0xf]
    %v4175 = vld [vmem:[#allocation6 + $0x44] sm:$0xf]
    %v4176 = vld [vmem:[#allocation6 + $0x48] sm:$0xf]
    %v4177 = vld [vmem:[#allocation6 + $0x4c] sm:$0xf]
    %v4178 = vld [vmem:[#allocation6 + $0x50] sm:$0xf]
    %v4179 = vld [vmem:[#allocation6 + $0x54] sm:$0xf]
    %v4180 = vld [vmem:[#allocation6 + $0x58] sm:$0xf]
    %v4181 = vld [vmem:[#allocation6 + $0x5c] sm:$0xf]
    %v4182 = vld [vmem:[#allocation6 + $0x60] sm:$0xf]
    %v4183 = vld [vmem:[#allocation6 + $0x64] sm:$0xf]
    %v4184 = vld [vmem:[#allocation6 + $0x68] sm:$0xf]
    %v4185 = vld [vmem:[#allocation6 + $0x6c] sm:$0xf]
    %v4186 = vld [vmem:[#allocation6 + $0x70] sm:$0xf]
    %v4187 = vld [vmem:[#allocation6 + $0x74] sm:$0xf]
    %v4188 = vld [vmem:[#allocation6 + $0x78] sm:$0xf]
    %v4189 = vld [vmem:[#allocation6 + $0x7c] sm:$0xf]
    %v4190 = vld [vmem:[#allocation6 + $0x80] sm:$0xf]
    %v4191 = vld [vmem:[#allocation6 + $0x84] sm:$0xf]
    %v4192 = vld [vmem:[#allocation6 + $0x88] sm:$0xf]
    %v4193 = vld [vmem:[#allocation6 + $0x8c] sm:$0xf]
    %v4194 = vld [vmem:[#allocation6 + $0x90] sm:$0xf]
    %v4195 = vld [vmem:[#allocation6 + $0x94] sm:$0xf]
    %v4196 = vld [vmem:[#allocation6 + $0x98] sm:$0xf]
    %v4197 = vld [vmem:[#allocation6 + $0x9c] sm:$0xf]
    %v4198 = vld [vmem:[#allocation6 + $0xa0] sm:$0xf]
    %v4199 = vld [vmem:[#allocation6 + $0xa4] sm:$0xf]
    %v4200 = vld [vmem:[#allocation6 + $0xa8] sm:$0xf]
    %v4201 = vld [vmem:[#allocation6 + $0xac] sm:$0xf]
    %v4202 = vld [vmem:[#allocation6 + $0xb0] sm:$0xf]
    %v4203 = vld [vmem:[#allocation6 + $0xb4] sm:$0xf]
    %v4204 = vld [vmem:[#allocation6 + $0xb8] sm:$0xf]
    %v4205 = vld [vmem:[#allocation6 + $0xbc] sm:$0xf]
    %v4206 = vld [vmem:[#allocation6 + $0xc0] sm:$0xf]
    %v4207 = vld [vmem:[#allocation6 + $0xc4] sm:$0xf]
    %v4208 = vld [vmem:[#allocation6 + $0xc8] sm:$0xf]
    %v4209 = vld [vmem:[#allocation6 + $0xcc] sm:$0xf]
    %v4210 = vld [vmem:[#allocation6 + $0xd0] sm:$0xf]
    %v4211 = vld [vmem:[#allocation6 + $0xd4] sm:$0xf]
    %v4212 = vld [vmem:[#allocation6 + $0xd8] sm:$0xf]
    %v4213 = vld [vmem:[#allocation6 + $0xdc] sm:$0xf]
    %v4214 = vld [vmem:[#allocation6 + $0xe0] sm:$0xf]
    %v4215 = vld [vmem:[#allocation6 + $0xe4] sm:$0xf]
    %v4216 = vld [vmem:[#allocation6 + $0xe8] sm:$0xf]
    %v4217 = vld [vmem:[#allocation6 + $0xec] sm:$0xf]
    %v4218 = vld [vmem:[#allocation6 + $0xf0] sm:$0xf]
    %v4219 = vld [vmem:[#allocation6 + $0xf4] sm:$0xf]
    %v4220 = vld [vmem:[#allocation6 + $0xf8] sm:$0xf]
    %v4221 = vld [vmem:[#allocation6 + $0xfc] sm:$0xf]
    %v4222 = vld [vmem:[#allocation6 + $0x100] sm:$0xf]
    %v4223 = vld [vmem:[#allocation6 + $0x104] sm:$0xf]
    %v4224 = vld [vmem:[#allocation6 + $0x108] sm:$0xf]
    %v4225 = vld [vmem:[#allocation6 + $0x10c] sm:$0xf]
    %v4226 = vld [vmem:[#allocation6 + $0x110] sm:$0xf]
    %v4227 = vld [vmem:[#allocation6 + $0x114] sm:$0xf]
    %v4228 = vld [vmem:[#allocation6 + $0x118] sm:$0xf]
    %v4229 = vld [vmem:[#allocation6 + $0x11c] sm:$0xf]
    %v4230 = vld [vmem:[#allocation6 + $0x120] sm:$0xf]
    %v4231 = vld [vmem:[#allocation6 + $0x124] sm:$0xf]
    %v4232 = vld [vmem:[#allocation6 + $0x128] sm:$0xf]
    %v4233 = vld [vmem:[#allocation6 + $0x12c] sm:$0xf]
    %v4234 = vld [vmem:[#allocation6 + $0x130] sm:$0xf]
    %v4235 = vld [vmem:[#allocation6 + $0x134] sm:$0xf]
    %v4236 = vld [vmem:[#allocation6 + $0x138] sm:$0xf]
    %v4237 = vld [vmem:[#allocation6 + $0x13c] sm:$0xf]
    %v4238 = vld [vmem:[#allocation6 + $0x140] sm:$0xf]
    %v4239 = vld [vmem:[#allocation6 + $0x144] sm:$0xf]
    %v4240 = vld [vmem:[#allocation6 + $0x148] sm:$0xf]
    %v4241 = vld [vmem:[#allocation6 + $0x14c] sm:$0xf]
    %v4242 = vld [vmem:[#allocation6 + $0x150] sm:$0xf]
    %v4243 = vld [vmem:[#allocation6 + $0x154] sm:$0xf]
    %v4244 = vld [vmem:[#allocation6 + $0x158] sm:$0xf]
    %v4245 = vld [vmem:[#allocation6 + $0x15c] sm:$0xf]
    %v4246 = vld [vmem:[#allocation6 + $0x160] sm:$0xf]
    %v4247 = vld [vmem:[#allocation6 + $0x164] sm:$0xf]
    %v4248 = vld [vmem:[#allocation6 + $0x168] sm:$0xf]
    %v4249 = vld [vmem:[#allocation6 + $0x16c] sm:$0xf]
    %v4250 = vld [vmem:[#allocation6 + $0x170] sm:$0xf]
    %v4251 = vld [vmem:[#allocation6 + $0x174] sm:$0xf]
    %v4252 = vld [vmem:[#allocation6 + $0x178] sm:$0xf]
    %v4253 = vld [vmem:[#allocation6 + $0x17c] sm:$0xf]
    %v4254 = vld [vmem:[#allocation6 + $0x180] sm:$0xf]
    %v4255 = vld [vmem:[#allocation6 + $0x184] sm:$0xf]
    %v4256 = vld [vmem:[#allocation6 + $0x188] sm:$0xf]
    %v4257 = vld [vmem:[#allocation6 + $0x18c] sm:$0xf]
    %v4258 = vld [vmem:[#allocation6 + $0x190] sm:$0xf]
    %v4259 = vld [vmem:[#allocation6 + $0x194] sm:$0xf]
    %v4260 = vld [vmem:[#allocation6 + $0x198] sm:$0xf]
    %v4261 = vld [vmem:[#allocation6 + $0x19c] sm:$0xf]
    %v4262 = vld [vmem:[#allocation6 + $0x1a0] sm:$0xf]
    %v4263 = vld [vmem:[#allocation6 + $0x1a4] sm:$0xf]
    %v4264 = vld [vmem:[#allocation6 + $0x1a8] sm:$0xf]
    %v4265 = vld [vmem:[#allocation6 + $0x1ac] sm:$0xf]
    %v4266 = vld [vmem:[#allocation6 + $0x1b0] sm:$0xf]
    %v4267 = vld [vmem:[#allocation6 + $0x1b4] sm:$0xf]
    %v4268 = vld [vmem:[#allocation6 + $0x1b8] sm:$0xf]
    %v4269 = vld [vmem:[#allocation6 + $0x1bc] sm:$0xf]
    %v4270 = vld [vmem:[#allocation6 + $0x1c0] sm:$0xf]
    %v4271 = vld [vmem:[#allocation6 + $0x1c4] sm:$0xf]
    %v4272 = vld [vmem:[#allocation6 + $0x1c8] sm:$0xf]
    %v4273 = vld [vmem:[#allocation6 + $0x1cc] sm:$0xf]
    %v4274 = vld [vmem:[#allocation6 + $0x1d0] sm:$0xf]
    %v4275 = vld [vmem:[#allocation6 + $0x1d4] sm:$0xf]
    %v4276 = vld [vmem:[#allocation6 + $0x1d8] sm:$0xf]
    %v4277 = vld [vmem:[#allocation6 + $0x1dc] sm:$0xf]
    %v4278 = vld [vmem:[#allocation6 + $0x1e0] sm:$0xf]
    %v4279 = vld [vmem:[#allocation6 + $0x1e4] sm:$0xf]
    %v4280 = vld [vmem:[#allocation6 + $0x1e8] sm:$0xf]
    %v4281 = vld [vmem:[#allocation6 + $0x1ec] sm:$0xf]
    %v4282 = vld [vmem:[#allocation6 + $0x1f0] sm:$0xf]
    %v4283 = vld [vmem:[#allocation6 + $0x1f4] sm:$0xf]
    %v4284 = vld [vmem:[#allocation6 + $0x1f8] sm:$0xf]
    %v4285 = vld [vmem:[#allocation6 + $0x1fc] sm:$0xf]
    %v4414 = vunpack.c.l.b16 %v4158
    %v4415 = vunpack.c.l.b16 %v4159
    %v4416 = vunpack.c.l.b16 %v4160
    %v4417 = vunpack.c.l.b16 %v4161
    %v4418 = vunpack.c.l.b16 %v4162
    %v4419 = vunpack.c.l.b16 %v4163
    %v4420 = vunpack.c.l.b16 %v4164
    %v4421 = vunpack.c.l.b16 %v4165
    %v4422 = vunpack.c.l.b16 %v4166
    %v4423 = vunpack.c.l.b16 %v4167
    %v4424 = vunpack.c.l.b16 %v4168
    %v4425 = vunpack.c.l.b16 %v4169
    %v4426 = vunpack.c.l.b16 %v4170
    %v4427 = vunpack.c.l.b16 %v4171
    %v4428 = vunpack.c.l.b16 %v4172
    %v4429 = vunpack.c.l.b16 %v4173
    %v4430 = vunpack.c.l.b16 %v4174
    %v4431 = vunpack.c.l.b16 %v4175
    %v4432 = vunpack.c.l.b16 %v4176
    %v4433 = vunpack.c.l.b16 %v4177
    %v4434 = vunpack.c.l.b16 %v4178
    %v4435 = vunpack.c.l.b16 %v4179
    %v4436 = vunpack.c.l.b16 %v4180
    %v4437 = vunpack.c.l.b16 %v4181
    %v4438 = vunpack.c.l.b16 %v4182
    %v4439 = vunpack.c.l.b16 %v4183
    %v4440 = vunpack.c.l.b16 %v4184
    %v4441 = vunpack.c.l.b16 %v4185
    %v4442 = vunpack.c.l.b16 %v4186
    %v4443 = vunpack.c.l.b16 %v4187
    %v4444 = vunpack.c.l.b16 %v4188
    %v4445 = vunpack.c.l.b16 %v4189
    %v4446 = vunpack.c.l.b16 %v4190
    %v4447 = vunpack.c.l.b16 %v4191
    %v4448 = vunpack.c.l.b16 %v4192
    %v4449 = vunpack.c.l.b16 %v4193
    %v4450 = vunpack.c.l.b16 %v4194
    %v4451 = vunpack.c.l.b16 %v4195
    %v4452 = vunpack.c.l.b16 %v4196
    %v4453 = vunpack.c.l.b16 %v4197
    %v4454 = vunpack.c.l.b16 %v4198
    %v4455 = vunpack.c.l.b16 %v4199
    %v4456 = vunpack.c.l.b16 %v4200
    %v4457 = vunpack.c.l.b16 %v4201
    %v4458 = vunpack.c.l.b16 %v4202
    %v4459 = vunpack.c.l.b16 %v4203
    %v4460 = vunpack.c.l.b16 %v4204
    %v4461 = vunpack.c.l.b16 %v4205
    %v4462 = vunpack.c.l.b16 %v4206
    %v4463 = vunpack.c.l.b16 %v4207
    %v4464 = vunpack.c.l.b16 %v4208
    %v4465 = vunpack.c.l.b16 %v4209
    %v4466 = vunpack.c.l.b16 %v4210
    %v4467 = vunpack.c.l.b16 %v4211
    %v4468 = vunpack.c.l.b16 %v4212
    %v4469 = vunpack.c.l.b16 %v4213
    %v4470 = vunpack.c.l.b16 %v4214
    %v4471 = vunpack.c.l.b16 %v4215
    %v4472 = vunpack.c.l.b16 %v4216
    %v4473 = vunpack.c.l.b16 %v4217
    %v4474 = vunpack.c.l.b16 %v4218
    %v4475 = vunpack.c.l.b16 %v4219
    %v4476 = vunpack.c.l.b16 %v4220
    %v4477 = vunpack.c.l.b16 %v4221
    %v4478 = vunpack.c.l.b16 %v4222
    %v4479 = vunpack.c.l.b16 %v4223
    %v4480 = vunpack.c.l.b16 %v4224
    %v4481 = vunpack.c.l.b16 %v4225
    %v4482 = vunpack.c.l.b16 %v4226
    %v4483 = vunpack.c.l.b16 %v4227
    %v4484 = vunpack.c.l.b16 %v4228
    %v4485 = vunpack.c.l.b16 %v4229
    %v4486 = vunpack.c.l.b16 %v4230
    %v4487 = vunpack.c.l.b16 %v4231
    %v4488 = vunpack.c.l.b16 %v4232
    %v4489 = vunpack.c.l.b16 %v4233
    %v4490 = vunpack.c.l.b16 %v4234
    %v4491 = vunpack.c.l.b16 %v4235
    %v4492 = vunpack.c.l.b16 %v4236
    %v4493 = vunpack.c.l.b16 %v4237
    %v4494 = vunpack.c.l.b16 %v4238
    %v4495 = vunpack.c.l.b16 %v4239
    %v4496 = vunpack.c.l.b16 %v4240
    %v4497 = vunpack.c.l.b16 %v4241
    %v4498 = vunpack.c.l.b16 %v4242
    %v4499 = vunpack.c.l.b16 %v4243
    %v4500 = vunpack.c.l.b16 %v4244
    %v4501 = vunpack.c.l.b16 %v4245
    %v4502 = vunpack.c.l.b16 %v4246
    %v4503 = vunpack.c.l.b16 %v4247
    %v4504 = vunpack.c.l.b16 %v4248
    %v4505 = vunpack.c.l.b16 %v4249
    %v4506 = vunpack.c.l.b16 %v4250
    %v4507 = vunpack.c.l.b16 %v4251
    %v4508 = vunpack.c.l.b16 %v4252
    %v4509 = vunpack.c.l.b16 %v4253
    %v4510 = vunpack.c.l.b16 %v4254
    %v4511 = vunpack.c.l.b16 %v4255
    %v4512 = vunpack.c.l.b16 %v4256
    %v4513 = vunpack.c.l.b16 %v4257
    %v4514 = vunpack.c.l.b16 %v4258
    %v4515 = vunpack.c.l.b16 %v4259
    %v4516 = vunpack.c.l.b16 %v4260
    %v4517 = vunpack.c.l.b16 %v4261
    %v4518 = vunpack.c.l.b16 %v4262
    %v4519 = vunpack.c.l.b16 %v4263
    %v4520 = vunpack.c.l.b16 %v4264
    %v4521 = vunpack.c.l.b16 %v4265
    %v4522 = vunpack.c.l.b16 %v4266
    %v4523 = vunpack.c.l.b16 %v4267
    %v4524 = vunpack.c.l.b16 %v4268
    %v4525 = vunpack.c.l.b16 %v4269
    %v4526 = vunpack.c.l.b16 %v4270
    %v4527 = vunpack.c.l.b16 %v4271
    %v4528 = vunpack.c.l.b16 %v4272
    %v4529 = vunpack.c.l.b16 %v4273
    %v4530 = vunpack.c.l.b16 %v4274
    %v4531 = vunpack.c.l.b16 %v4275
    %v4532 = vunpack.c.l.b16 %v4276
    %v4533 = vunpack.c.l.b16 %v4277
    %v4534 = vunpack.c.l.b16 %v4278
    %v4535 = vunpack.c.l.b16 %v4279
    %v4536 = vunpack.c.l.b16 %v4280
    %v4537 = vunpack.c.l.b16 %v4281
    %v4538 = vunpack.c.l.b16 %v4282
    %v4539 = vunpack.c.l.b16 %v4283
    %v4540 = vunpack.c.l.b16 %v4284
    %v4541 = vunpack.c.l.b16 %v4285
    %v4542 = vpack.c.b16 %v4415, %v4414
    %v4543 = vpack.c.b16 %v4417, %v4416
    %v4544 = vpack.c.b16 %v4419, %v4418
    %v4545 = vpack.c.b16 %v4421, %v4420
    %v4546 = vpack.c.b16 %v4423, %v4422
    %v4547 = vpack.c.b16 %v4425, %v4424
    %v4548 = vpack.c.b16 %v4427, %v4426
    %v4549 = vpack.c.b16 %v4429, %v4428
    %v4550 = vpack.c.b16 %v4431, %v4430
    %v4551 = vpack.c.b16 %v4433, %v4432
    %v4552 = vpack.c.b16 %v4435, %v4434
    %v4553 = vpack.c.b16 %v4437, %v4436
    %v4554 = vpack.c.b16 %v4439, %v4438
    %v4555 = vpack.c.b16 %v4441, %v4440
    %v4556 = vpack.c.b16 %v4443, %v4442
    %v4557 = vpack.c.b16 %v4445, %v4444
    %v4558 = vpack.c.b16 %v4447, %v4446
    %v4559 = vpack.c.b16 %v4449, %v4448
    %v4560 = vpack.c.b16 %v4451, %v4450
    %v4561 = vpack.c.b16 %v4453, %v4452
    %v4562 = vpack.c.b16 %v4455, %v4454
    %v4563 = vpack.c.b16 %v4457, %v4456
    %v4564 = vpack.c.b16 %v4459, %v4458
    %v4565 = vpack.c.b16 %v4461, %v4460
    %v4566 = vpack.c.b16 %v4463, %v4462
    %v4567 = vpack.c.b16 %v4465, %v4464
    %v4568 = vpack.c.b16 %v4467, %v4466
    %v4569 = vpack.c.b16 %v4469, %v4468
    %v4570 = vpack.c.b16 %v4471, %v4470
    %v4571 = vpack.c.b16 %v4473, %v4472
    %v4572 = vpack.c.b16 %v4475, %v4474
    %v4573 = vpack.c.b16 %v4477, %v4476
    %v4574 = vpack.c.b16 %v4479, %v4478
    %v4575 = vpack.c.b16 %v4481, %v4480
    %v4576 = vpack.c.b16 %v4483, %v4482
    %v4577 = vpack.c.b16 %v4485, %v4484
    %v4578 = vpack.c.b16 %v4487, %v4486
    %v4579 = vpack.c.b16 %v4489, %v4488
    %v4580 = vpack.c.b16 %v4491, %v4490
    %v4581 = vpack.c.b16 %v4493, %v4492
    %v4582 = vpack.c.b16 %v4495, %v4494
    %v4583 = vpack.c.b16 %v4497, %v4496
    %v4584 = vpack.c.b16 %v4499, %v4498
    %v4585 = vpack.c.b16 %v4501, %v4500
    %v4586 = vpack.c.b16 %v4503, %v4502
    %v4587 = vpack.c.b16 %v4505, %v4504
    %v4588 = vpack.c.b16 %v4507, %v4506
    %v4589 = vpack.c.b16 %v4509, %v4508
    %v4590 = vpack.c.b16 %v4511, %v4510
    %v4591 = vpack.c.b16 %v4513, %v4512
    %v4592 = vpack.c.b16 %v4515, %v4514
    %v4593 = vpack.c.b16 %v4517, %v4516
    %v4594 = vpack.c.b16 %v4519, %v4518
    %v4595 = vpack.c.b16 %v4521, %v4520
    %v4596 = vpack.c.b16 %v4523, %v4522
    %v4597 = vpack.c.b16 %v4525, %v4524
    %v4598 = vpack.c.b16 %v4527, %v4526
    %v4599 = vpack.c.b16 %v4529, %v4528
    %v4600 = vpack.c.b16 %v4531, %v4530
    %v4601 = vpack.c.b16 %v4533, %v4532
    %v4602 = vpack.c.b16 %v4535, %v4534
    %v4603 = vpack.c.b16 %v4537, %v4536
    %v4604 = vpack.c.b16 %v4539, %v4538
    %v4605 = vpack.c.b16 %v4541, %v4540
    %4670 = vmatpush.bf16.msra.mxu0 %v4549
    %4671 = vmatpush.bf16.msra.mxu0 %v4548
    %4672 = vmatpush.bf16.msra.mxu0 %v4547
    %4673 = vmatpush.bf16.msra.mxu0 %v4546
    %4674 = vmatpush.bf16.msra.mxu0 %v4545
    %4675 = vmatpush.bf16.msra.mxu0 %v4544
    %4676 = vmatpush.bf16.msra.mxu0 %v4543
    %4677 = vmatpush.bf16.msra.mxu0 %v4542
    %4678 = vmatmul.bf16.gmra.mxu0 %v4150
    %v4679 = vpop.f32.mrf.mxu0
    %v4680 = vadd.f32 0.0, %v4679
    %v4681 = vpop.f32.mrf.mxu0
    %4682 = vdwg.mxu0
    %4683 = vmatpush.bf16.msra.mxu0 %v4557
    %4684 = vmatpush.bf16.msra.mxu0 %v4556
    %4685 = vmatpush.bf16.msra.mxu0 %v4555
    %4686 = vmatpush.bf16.msra.mxu0 %v4554
    %4687 = vmatpush.bf16.msra.mxu0 %v4553
    %4688 = vmatpush.bf16.msra.mxu0 %v4552
    %4689 = vmatpush.bf16.msra.mxu0 %v4551
    %4690 = vmatpush.bf16.msra.mxu0 %v4550
    %4691 = vmatmul.bf16.gmra.mxu0 %v4151
    %v4692 = vpop.f32.mrf.mxu0
    %v4693 = vadd.f32 %v4680, %v4692
    %v4694 = vpop.f32.mrf.mxu0
    %4695 = vdwg.mxu0
    %4696 = vmatpush.bf16.msra.mxu0 %v4565
    %4697 = vmatpush.bf16.msra.mxu0 %v4564
    %4698 = vmatpush.bf16.msra.mxu0 %v4563
    %4699 = vmatpush.bf16.msra.mxu0 %v4562
    %4700 = vmatpush.bf16.msra.mxu0 %v4561
    %4701 = vmatpush.bf16.msra.mxu0 %v4560
    %4702 = vmatpush.bf16.msra.mxu0 %v4559
    %4703 = vmatpush.bf16.msra.mxu0 %v4558
    %4704 = vmatmul.bf16.gmra.mxu0 %v4152
    %v4705 = vpop.f32.mrf.mxu0
    %v4706 = vadd.f32 %v4693, %v4705
    %v4707 = vpop.f32.mrf.mxu0
    %4708 = vdwg.mxu0
    %4709 = vmatpush.bf16.msra.mxu0 %v4573
    %4710 = vmatpush.bf16.msra.mxu0 %v4572
    %4711 = vmatpush.bf16.msra.mxu0 %v4571
    %4712 = vmatpush.bf16.msra.mxu0 %v4570
    %4713 = vmatpush.bf16.msra.mxu0 %v4569
    %4714 = vmatpush.bf16.msra.mxu0 %v4568
    %4715 = vmatpush.bf16.msra.mxu0 %v4567
    %4716 = vmatpush.bf16.msra.mxu0 %v4566
    %4717 = vmatmul.bf16.gmra.mxu0 %v4153
    %v4718 = vpop.f32.mrf.mxu0
    %v4719 = vadd.f32 %v4706, %v4718
    %v4720 = vpop.f32.mrf.mxu0
    %4721 = vdwg.mxu0
    %4722 = vmatpush.bf16.msra.mxu0 %v4581
    %4723 = vmatpush.bf16.msra.mxu0 %v4580
    %4724 = vmatpush.bf16.msra.mxu0 %v4579
    %4725 = vmatpush.bf16.msra.mxu0 %v4578
    %4726 = vmatpush.bf16.msra.mxu0 %v4577
    %4727 = vmatpush.bf16.msra.mxu0 %v4576
    %4728 = vmatpush.bf16.msra.mxu0 %v4575
    %4729 = vmatpush.bf16.msra.mxu0 %v4574
    %4730 = vmatmul.bf16.gmra.mxu0 %v4154
    %v4731 = vpop.f32.mrf.mxu0
    %v4732 = vadd.f32 %v4719, %v4731
    %v4733 = vpop.f32.mrf.mxu0
    %4734 = vdwg.mxu0
    %4735 = vmatpush.bf16.msra.mxu0 %v4589
    %4736 = vmatpush.bf16.msra.mxu0 %v4588
    %4737 = vmatpush.bf16.msra.mxu0 %v4587
    %4738 = vmatpush.bf16.msra.mxu0 %v4586
    %4739 = vmatpush.bf16.msra.mxu0 %v4585
    %4740 = vmatpush.bf16.msra.mxu0 %v4584
    %4741 = vmatpush.bf16.msra.mxu0 %v4583
    %4742 = vmatpush.bf16.msra.mxu0 %v4582
    %4743 = vmatmul.bf16.gmra.mxu0 %v4155
    %v4744 = vpop.f32.mrf.mxu0
    %v4745 = vadd.f32 %v4732, %v4744
    %v4746 = vpop.f32.mrf.mxu0
    %4747 = vdwg.mxu0
    %4748 = vmatpush.bf16.msra.mxu0 %v4597
    %4749 = vmatpush.bf16.msra.mxu0 %v4596
    %4750 = vmatpush.bf16.msra.mxu0 %v4595
    %4751 = vmatpush.bf16.msra.mxu0 %v4594
    %4752 = vmatpush.bf16.msra.mxu0 %v4593
    %4753 = vmatpush.bf16.msra.mxu0 %v4592
    %4754 = vmatpush.bf16.msra.mxu0 %v4591
    %4755 = vmatpush.bf16.msra.mxu0 %v4590
    %4756 = vmatmul.bf16.gmra.mxu0 %v4156
    %v4757 = vpop.f32.mrf.mxu0
    %v4758 = vadd.f32 %v4745, %v4757
    %v4759 = vpop.f32.mrf.mxu0
    %4760 = vdwg.mxu0
    %4761 = vmatpush.bf16.msra.mxu0 %v4605
    %4762 = vmatpush.bf16.msra.mxu0 %v4604
    %4763 = vmatpush.bf16.msra.mxu0 %v4603
    %4764 = vmatpush.bf16.msra.mxu0 %v4602
    %4765 = vmatpush.bf16.msra.mxu0 %v4601
    %4766 = vmatpush.bf16.msra.mxu0 %v4600
    %4767 = vmatpush.bf16.msra.mxu0 %v4599
    %4768 = vmatpush.bf16.msra.mxu0 %v4598
    %4769 = vmatmul.bf16.gmra.mxu0 %v4157
    %v4770 = vpop.f32.mrf.mxu0
    %v4771 = vadd.f32 %v4758, %v4770
    %v4772 = vpop.f32.mrf.mxu0
    %4773 = vdwg.mxu0
    %v4774 = vlaneseq
    %v4775 = vand.u32 %v4774, 127
    %vm4776 = vcmp.lt.s32.totalorder %v4775, 3
    %v4777 = vsel %vm4776, %v4771, -1e+30
    %4778 = vmax.xlane.f32.xlu0 %v4777
    %v4779 = vpop.xlane.xlu0 %4778
    %v4780 = vsub.f32 %v4777, %v4779
    %v4781 = vmul.f32 %v4780, 1.442695
    %v4782 = vpow.pop %v4781
    %4783 = vadd.xlane.f32.xlu0 %v4782
    %v4784 = vpop.xlane.xlu0 %4783
    %v4785 = vlog2.pop %v4784
    %v4786 = vmul.f32 %v4785, 0.6931472
    %v4787 = vsub.f32 %v4780, %v4786
    %4788 = vst [vmem:[%s4] sm:$0xff] %v4787
    // Predicated region
    $region30: #{net_forward.1} parent=1 // pred_check
      _
    $region31: #{net_forward.1} parent=1 // pred_check_branch
      %4790 = sbr.rel (0) target = $region33
    $region32: #{net_forward.1} parent=1 // pred_region
      _
    $region33: #{net_forward.1} parent=1 // pred_fallthru
      _
    // Predicated region
    $region34: #{net_forward.1} parent=1 // pred_check
      _
    $region35: #{net_forward.1} parent=1 // pred_check_branch
      %4792 = sbr.rel (0) target = $region37
    $region36: #{net_forward.1} parent=1 // pred_region
      _
    $region37: #{net_forward.1} parent=1 // pred_fallthru
      _
    %4793 = vsyncpa [#allocation3], 1
    %4794 = vsyncpa [#allocation5], 1

</llo_original>
